<compile_context>
chip_gen: v5e
topology: v5e:2x2
jax: 0.10.0
libtpu: 0.0.40
codegen_flags: <defaults>
</compile_context>

<pallas_src>
import jax
import jax.numpy as jnp
from jax.experimental import pallas as pl
from jax.experimental.pallas import tpu as pltpu


def _round_up(x, m):
    return ((x + m - 1) // m) * m


def _block_diag4(w):
    """(K0, C) -> (4*K0, 4*C) block-diagonal (one block per pool position)."""
    k0, c = w.shape
    out = jnp.zeros((4 * k0, 4 * c), w.dtype)
    for p in range(4):
        out = out.at[p * k0:(p + 1) * k0, p * c:(p + 1) * c].set(w)
    return out


# ---------------------------------------------------------------------------
# Kernel 1: conv (im2col matmul, 4 pool positions packed block-diagonally)
#           + folded BatchNorm + 2x2 max-pool + ReLU, fused
# ---------------------------------------------------------------------------
def conv_bn_relu_pool_kernel(p_ref, w_ref, scale_ref, bias_ref, o_ref):
    # p_ref: (tm, 4*K0) bf16 packed patches; w_ref: (4*K0, 4*C) bf16 block-diag.
    acc = jnp.dot(p_ref[...], w_ref[...], preferred_element_type=jnp.float32)
    # Per-position BN affine (scale/bias tiled 4x) in f32 -- sign-safe.
    a = acc * scale_ref[...] + bias_ref[...]
    c = o_ref.shape[-1]
    # Max over the 4 pool positions (lane blocks of width c) via XLU rolls.
    m = jnp.maximum(a, pltpu.roll(a, shift=2 * c, axis=1))
    m = jnp.maximum(m, pltpu.roll(m, shift=c, axis=1))
    # relu∘max == max∘relu; lanes [0:c) now hold the pooled result.
    o_ref[...] = jnp.maximum(m[:, :c], 0.0).astype(o_ref.dtype)


def conv_bn_relu_pool(patches, w_mat, scale, bias, cout, *, tile_m=1024):
    # patches: (M, 4*K0) bf16 with M = B*Ho*Wo (pooled output pixels).
    M, Kt = patches.shape
    n4c = w_mat.shape[1]
    nsteps = max(2, pl.cdiv(M, tile_m))          # >= 2 grid steps (v7x megacore)
    tm = _round_up(pl.cdiv(M, nsteps), 8)
    Mp = tm * nsteps
    if Mp != M:
        patches = jnp.pad(patches, ((0, Mp - M), (0, 0)))

    out = pl.pallas_call(
        conv_bn_relu_pool_kernel,
        out_shape=jax.ShapeDtypeStruct((Mp, cout), jnp.bfloat16),
        grid_spec=pltpu.PrefetchScalarGridSpec(
            num_scalar_prefetch=0,
            grid=(nsteps,),
            in_specs=[
                pl.BlockSpec((tm, Kt), lambda i: (i, 0)),
                pl.BlockSpec((Kt, n4c), lambda i: (0, 0)),   # resident weights
                pl.BlockSpec((1, n4c), lambda i: (0, 0)),
                pl.BlockSpec((1, n4c), lambda i: (0, 0)),
            ],
            out_specs=pl.BlockSpec((tm, cout), lambda i: (i, 0)),
        ),
        compiler_params=pltpu.CompilerParams(dimension_semantics=("parallel",)),
    )(patches, w_mat, scale, bias)
    return out[:M] if Mp != M else out


# ---------------------------------------------------------------------------
# Kernel 2: fc1 + ReLU + (dropout = identity at inference) + fc2 (padded to
#           128 output lanes), fused
# ---------------------------------------------------------------------------
def mlp_kernel(x_ref, w1_ref, b1_ref, w2_ref, b2_ref, o_ref):
    h = jnp.dot(x_ref[...], w1_ref[...], preferred_element_type=jnp.float32) + b1_ref[...]
    h = jnp.maximum(h, 0.0).astype(w2_ref.dtype)
    # Dropout(p=0.5) is the identity in inference mode.
    o_ref[...] = jnp.dot(h, w2_ref[...], preferred_element_type=jnp.float32) + b2_ref[...]


def mlp(x, w1, b1, w2, b2, *, tile_m=512):
    B, Din = x.shape
    Dh = w1.shape[1]
    Dout = w2.shape[1]
    nsteps = max(2, pl.cdiv(B, tile_m))
    tm = _round_up(pl.cdiv(B, nsteps), 8)
    Bp = tm * nsteps
    if Bp != B:
        x = jnp.pad(x, ((0, Bp - B), (0, 0)))

    out = pl.pallas_call(
        mlp_kernel,
        out_shape=jax.ShapeDtypeStruct((Bp, Dout), jnp.float32),
        grid_spec=pltpu.PrefetchScalarGridSpec(
            num_scalar_prefetch=0,
            grid=(nsteps,),
            in_specs=[
                pl.BlockSpec((tm, Din), lambda i: (i, 0)),
                pl.BlockSpec((Din, Dh), lambda i: (0, 0)),   # fc1 weights resident
                pl.BlockSpec((1, Dh), lambda i: (0, 0)),
                pl.BlockSpec((Dh, Dout), lambda i: (0, 0)),
                pl.BlockSpec((1, Dout), lambda i: (0, 0)),
            ],
            out_specs=pl.BlockSpec((tm, Dout), lambda i: (i, 0)),
        ),
        compiler_params=pltpu.CompilerParams(dimension_semantics=("parallel",)),
    )(x, w1, b1, w2, b2)
    return out[:B] if Bp != B else out


# ---------------------------------------------------------------------------
# Glue: im2col (3x3, pad 1), the 4 pool-window positions packed along K
# ---------------------------------------------------------------------------
def im2col_3x3_pad1_pooled_packed(x_nhwc, dtype=jnp.bfloat16):
    """Returns (B*Ho*Wo, 4*9*Cin): the im2col rows of the 4 conv-output pixels
    inside each 2x2 pool window, concatenated along K (pos-major, then
    (dh, dw, cin)), matching the block-diagonal weight layout."""
    # TODO(synk): move this gather in-kernel (DMA halo row-bands) to avoid the
    # ~9x HBM read amplification of the materialized patch matrices.
    B, H, W, Cin = x_nhwc.shape
    Ho, Wo = H // 2, W // 2
    xp = jnp.pad(x_nhwc, ((0, 0), (1, 1), (1, 1), (0, 0)))
    groups = []
    for ph in range(2):
        for pw in range(2):
            cols = [xp[:, ph + dh::2, pw + dw::2, :][:, :Ho, :Wo, :]
                    for dh in range(3) for dw in range(3)]
            groups.append(jnp.concatenate(cols, axis=-1))
    packed = jnp.concatenate(groups, axis=-1)            # (B, Ho, Wo, 4*9*Cin)
    return packed.reshape(B * Ho * Wo, 4 * 9 * Cin).astype(dtype)


# ---------------------------------------------------------------------------
# Parameters (PyTorch layouts) + one-time prep into kernel-friendly layouts
# ---------------------------------------------------------------------------
def init_params(key):
    ks = jax.random.split(key, 16)

    def u(k, shape, scale):
        return jax.random.uniform(k, shape, jnp.float32, -scale, scale)

    p = {}
    # conv1: Conv2d(1, 32, 3, padding=1) -- PyTorch weight layout (Cout, Cin, 3, 3)
    p["conv1_w"] = u(ks[0], (32, 1, 3, 3), (1.0 / (1 * 9)) ** 0.5)
    p["conv1_b"] = u(ks[1], (32,), (1.0 / (1 * 9)) ** 0.5)
    p["bn1_gamma"] = jax.random.uniform(ks[2], (32,), jnp.float32, 0.5, 1.5)
    p["bn1_beta"] = u(ks[3], (32,), 0.1)
    p["bn1_mean"] = u(ks[4], (32,), 0.1)
    p["bn1_var"] = jax.random.uniform(ks[5], (32,), jnp.float32, 0.5, 1.5)
    # conv2: Conv2d(32, 64, 3, padding=1)
    p["conv2_w"] = u(ks[6], (64, 32, 3, 3), (1.0 / (32 * 9)) ** 0.5)
    p["conv2_b"] = u(ks[7], (64,), (1.0 / (32 * 9)) ** 0.5)
    p["bn2_gamma"] = jax.random.uniform(ks[8], (64,), jnp.float32, 0.5, 1.5)
    p["bn2_beta"] = u(ks[9], (64,), 0.1)
    p["bn2_mean"] = u(ks[10], (64,), 0.1)
    p["bn2_var"] = jax.random.uniform(ks[11], (64,), jnp.float32, 0.5, 1.5)
    # fc1: Linear(64*7*7, 128), fc2: Linear(128, 10) -- PyTorch layout (out, in)
    p["fc1_w"] = u(ks[12], (128, 64 * 7 * 7), (1.0 / (64 * 7 * 7)) ** 0.5)
    p["fc1_b"] = u(ks[13], (128,), (1.0 / (64 * 7 * 7)) ** 0.5)
    p["fc2_w"] = u(ks[14], (10, 128), (1.0 / 128) ** 0.5)
    p["fc2_b"] = u(ks[15], (10,), (1.0 / 128) ** 0.5)
    return p


def prep_params(p, eps=1e-5):
    """One-time (outside jit) conversion to kernel-friendly layouts."""
    q = {}
    bf16 = jnp.bfloat16

    # conv weights -> (dh*dw*cin, cout), block-diag over 4 pool positions, bf16.
    w1 = jnp.transpose(p["conv1_w"], (2, 3, 1, 0)).reshape(9 * 1, 32)
    q["w1m"] = _block_diag4(w1).astype(bf16)                         # (36, 128)
    s1 = p["bn1_gamma"] / jnp.sqrt(p["bn1_var"] + eps)
    b1 = p["bn1_beta"] + s1 * (p["conv1_b"] - p["bn1_mean"])
    q["s1"] = jnp.tile(s1.reshape(1, 32), (1, 4)).astype(jnp.float32)   # (1, 128)
    q["b1"] = jnp.tile(b1.reshape(1, 32), (1, 4)).astype(jnp.float32)

    w2 = jnp.transpose(p["conv2_w"], (2, 3, 1, 0)).reshape(9 * 32, 64)
    q["w2m"] = _block_diag4(w2).astype(bf16)                         # (1152, 256)
    s2 = p["bn2_gamma"] / jnp.sqrt(p["bn2_var"] + eps)
    b2 = p["bn2_beta"] + s2 * (p["conv2_b"] - p["bn2_mean"])
    q["s2"] = jnp.tile(s2.reshape(1, 64), (1, 4)).astype(jnp.float32)   # (1, 256)
    q["b2"] = jnp.tile(b2.reshape(1, 64), (1, 4)).astype(jnp.float32)

    # fc1: permute input columns from PyTorch NCHW-flatten (c,h,w) to the
    # NHWC-flatten (h,w,c) produced by the conv/pool kernel.
    w_fc1 = p["fc1_w"].reshape(128, 64, 7, 7)
    w_fc1 = jnp.transpose(w_fc1, (0, 2, 3, 1)).reshape(128, 7 * 7 * 64)
    q["fc1_w"] = jnp.transpose(w_fc1).astype(bf16)                   # (3136, 128)
    q["fc1_b"] = p["fc1_b"].reshape(1, 128).astype(jnp.float32)

    # fc2: pad output dim 10 -> 128 with zero columns (lane-dense store).
    w_fc2 = jnp.transpose(p["fc2_w"])                                # (128, 10)
    q["fc2_w"] = jnp.pad(w_fc2, ((0, 0), (0, 118))).astype(bf16)     # (128, 128)
    q["fc2_b"] = jnp.pad(p["fc2_b"].reshape(1, 10), ((0, 0), (0, 118))).astype(jnp.float32)
    return q


# ---------------------------------------------------------------------------
# End-to-end forward (matches CNN.forward in inference mode)
# ---------------------------------------------------------------------------
def cnn_forward(x_nchw, q):
    B = x_nchw.shape[0]
    x = jnp.transpose(x_nchw, (0, 2, 3, 1)).astype(jnp.bfloat16)     # NCHW -> NHWC

    # --- conv1 + bn1 + relu + pool1 (single fused kernel, 1 packed matmul) ---
    p1 = im2col_3x3_pad1_pooled_packed(x)                            # (B*196, 36)
    y1 = conv_bn_relu_pool(p1, q["w1m"], q["s1"], q["b1"], 32)       # (B*196, 32) bf16
    y1 = y1.reshape(B, 14, 14, 32)

    # --- conv2 + bn2 + relu + pool2 (single fused kernel, 1 packed matmul) ---
    p2 = im2col_3x3_pad1_pooled_packed(y1)                           # (B*49, 1152)
    y2 = conv_bn_relu_pool(p2, q["w2m"], q["s2"], q["b2"], 64)       # (B*49, 64) bf16

    # NHWC flatten; fc1 weights were pre-permuted to this order (no transpose).
    flat = y2.reshape(B, 7 * 7 * 64)

    # --- fc1 + relu + dropout(identity) + fc2 (128 padded lanes) ---
    logits128 = mlp(flat, q["fc1_w"], q["fc1_b"], q["fc2_w"], q["fc2_b"])
    return logits128[:, :10]


if __name__ == "__main__":
    key = jax.random.PRNGKey(0)
    kx, kp = jax.random.split(key)
    params = init_params(kp)
    prepped = prep_params(params)                    # one-time, outside jit
    prepped = jax.tree_util.tree_map(jax.block_until_ready, prepped)

    # Input consistent with the module: 28x28 single-channel images (fc1 in = 64*7*7)
    x = jax.random.normal(kx, (2, 1, 28, 28), jnp.float32)

    logits = jax.jit(cnn_forward)(x, prepped)
    logits = jax.block_until_ready(logits)
    assert logits.shape == (2, 10) and logits.dtype == jnp.float32
    print("KERNEL_OK")
</pallas_src>

<mosaic_0001>
module attributes {stable_mosaic.version = 11 : i64} {
  func.func @conv_bn_relu_pool_kernel(%arg0: i32, %arg1: memref<200x36xbf16, #tpu.memory_space<vmem>>, %arg2: memref<36x128xbf16, #tpu.memory_space<vmem>>, %arg3: memref<1x128xf32, #tpu.memory_space<vmem>>, %arg4: memref<1x128xf32, #tpu.memory_space<vmem>>, %arg5: memref<200x32xbf16, #tpu.memory_space<vmem>>) attributes {dimension_semantics = [#tpu.dimension_semantics<parallel>], iteration_bounds = array<i64: 2>, scalar_prefetch = 0 : i64, scratch_operands = 0 : i64, tpu.core_type = #tpu.core_type<tc>, window_params = [{transform_indices = @transform_0, window_bounds = array<i64: 200, 36>}, {pipeline_mode = #tpu.pipeline_mode<synchronous>, transform_indices = @transform_1, window_bounds = array<i64: 36, 128>}, {pipeline_mode = #tpu.pipeline_mode<synchronous>, transform_indices = @transform_2, window_bounds = array<i64: 1, 128>}, {pipeline_mode = #tpu.pipeline_mode<synchronous>, transform_indices = @transform_3, window_bounds = array<i64: 1, 128>}, {transform_indices = @transform_4, window_bounds = array<i64: 200, 32>}]} {
    %c0 = arith.constant 0 : index
    %c0_0 = arith.constant 0 : index
    %0 = vector.load %arg1[%c0, %c0_0] : memref<200x36xbf16, #tpu.memory_space<vmem>>, vector<200x36xbf16>
    %c0_1 = arith.constant 0 : index
    %c0_2 = arith.constant 0 : index
    %1 = vector.load %arg2[%c0_1, %c0_2] : memref<36x128xbf16, #tpu.memory_space<vmem>>, vector<36x128xbf16>
    %cst = arith.constant dense<0.000000e+00> : vector<200x128xf32>
    %2 = tpu.matmul %0, %1, %cst {dimension_numbers = #tpu.dot_dimension_numbers<[1], [0], [0], [1], [0, 0, 1, 1], [], []>} : vector<200x36xbf16>, vector<36x128xbf16>, vector<200x128xf32> -> vector<200x128xf32>
    %c0_3 = arith.constant 0 : index
    %c0_4 = arith.constant 0 : index
    %3 = vector.load %arg3[%c0_3, %c0_4] : memref<1x128xf32, #tpu.memory_space<vmem>>, vector<1x128xf32>
    %4 = vector.broadcast %3 : vector<1x128xf32> to vector<200x128xf32>
    %5 = arith.mulf %2, %4 : vector<200x128xf32>
    %c0_5 = arith.constant 0 : index
    %c0_6 = arith.constant 0 : index
    %6 = vector.load %arg4[%c0_5, %c0_6] : memref<1x128xf32, #tpu.memory_space<vmem>>, vector<1x128xf32>
    %7 = vector.broadcast %6 : vector<1x128xf32> to vector<200x128xf32>
    %8 = arith.addf %5, %7 : vector<200x128xf32>
    %c64_i32 = arith.constant 64 : i32
    %9 = tpu.dynamic_rotate %8 by %c64_i32 dim 1 : vector<200x128xf32>, i32 -> vector<200x128xf32>
    %10 = arith.maximumf %8, %9 : vector<200x128xf32>
    %c32_i32 = arith.constant 32 : i32
    %11 = tpu.dynamic_rotate %10 by %c32_i32 dim 1 : vector<200x128xf32>, i32 -> vector<200x128xf32>
    %12 = arith.maximumf %10, %11 : vector<200x128xf32>
    %13 = vector.extract_strided_slice %12 {offsets = [0, 0], sizes = [200, 32], strides = [1, 1]} : vector<200x128xf32> to vector<200x32xf32>
    %cst_7 = arith.constant 0.000000e+00 : f32
    %14 = vector.broadcast %cst_7 : f32 to vector<200x32xf32>
    %15 = arith.maximumf %13, %14 : vector<200x32xf32>
    %16 = arith.truncf %15 : vector<200x32xf32> to vector<200x32xbf16>
    %c0_8 = arith.constant 0 : index
    %c0_9 = arith.constant 0 : index
    %17 = vector.load %arg5[%c0_8, %c0_9] : memref<200x32xbf16, #tpu.memory_space<vmem>>, vector<200x32xbf16>
    tpu.vector_store %arg5[%c0_8, %c0_9], %16 {strides = array<i32>} : memref<200x32xbf16, #tpu.memory_space<vmem>>, vector<200x32xbf16>,
    return
  }
  func.func @transform_0(%arg0: i32) -> (i32, i32) {
    %c0_i32 = arith.constant 0 : i32
    %c0_i32_0 = arith.constant 0 : i32
    return %arg0, %c0_i32 : i32, i32
  }
  func.func @transform_1(%arg0: i32) -> (i32, i32) {
    %c0_i32 = arith.constant 0 : i32
    %c0_i32_0 = arith.constant 0 : i32
    %c0_i32_1 = arith.constant 0 : i32
    return %c0_i32, %c0_i32_0 : i32, i32
  }
  func.func @transform_2(%arg0: i32) -> (i32, i32) {
    %c0_i32 = arith.constant 0 : i32
    %c0_i32_0 = arith.constant 0 : i32
    %c0_i32_1 = arith.constant 0 : i32
    return %c0_i32, %c0_i32_0 : i32, i32
  }
  func.func @transform_3(%arg0: i32) -> (i32, i32) {
    %c0_i32 = arith.constant 0 : i32
    %c0_i32_0 = arith.constant 0 : i32
    %c0_i32_1 = arith.constant 0 : i32
    return %c0_i32, %c0_i32_0 : i32, i32
  }
  func.func @transform_4(%arg0: i32) -> (i32, i32) {
    %c0_i32 = arith.constant 0 : i32
    %c0_i32_0 = arith.constant 0 : i32
    return %arg0, %c0_i32 : i32, i32
  }
}

module attributes {stable_mosaic.version = 11 : i64} {
  func.func @conv_bn_relu_pool_kernel(%arg0: i32, %arg1: memref<56x1152xbf16, #tpu.memory_space<vmem>>, %arg2: memref<1152x256xbf16, #tpu.memory_space<vmem>>, %arg3: memref<1x256xf32, #tpu.memory_space<vmem>>, %arg4: memref<1x256xf32, #tpu.memory_space<vmem>>, %arg5: memref<56x64xbf16, #tpu.memory_space<vmem>>) attributes {dimension_semantics = [#tpu.dimension_semantics<parallel>], iteration_bounds = array<i64: 2>, scalar_prefetch = 0 : i64, scratch_operands = 0 : i64, tpu.core_type = #tpu.core_type<tc>, window_params = [{transform_indices = @transform_0, window_bounds = array<i64: 56, 1152>}, {pipeline_mode = #tpu.pipeline_mode<synchronous>, transform_indices = @transform_1, window_bounds = array<i64: 1152, 256>}, {pipeline_mode = #tpu.pipeline_mode<synchronous>, transform_indices = @transform_2, window_bounds = array<i64: 1, 256>}, {pipeline_mode = #tpu.pipeline_mode<synchronous>, transform_indices = @transform_3, window_bounds = array<i64: 1, 256>}, {transform_indices = @transform_4, window_bounds = array<i64: 56, 64>}]} {
    %c0 = arith.constant 0 : index
    %c0_0 = arith.constant 0 : index
    %0 = vector.load %arg1[%c0, %c0_0] : memref<56x1152xbf16, #tpu.memory_space<vmem>>, vector<56x1152xbf16>
    %c0_1 = arith.constant 0 : index
    %c0_2 = arith.constant 0 : index
    %1 = vector.load %arg2[%c0_1, %c0_2] : memref<1152x256xbf16, #tpu.memory_space<vmem>>, vector<1152x256xbf16>
    %cst = arith.constant dense<0.000000e+00> : vector<56x256xf32>
    %2 = tpu.matmul %0, %1, %cst {dimension_numbers = #tpu.dot_dimension_numbers<[1], [0], [0], [1], [0, 0, 1, 1], [], []>} : vector<56x1152xbf16>, vector<1152x256xbf16>, vector<56x256xf32> -> vector<56x256xf32>
    %c0_3 = arith.constant 0 : index
    %c0_4 = arith.constant 0 : index
    %3 = vector.load %arg3[%c0_3, %c0_4] : memref<1x256xf32, #tpu.memory_space<vmem>>, vector<1x256xf32>
    %4 = vector.broadcast %3 : vector<1x256xf32> to vector<56x256xf32>
    %5 = arith.mulf %2, %4 : vector<56x256xf32>
    %c0_5 = arith.constant 0 : index
    %c0_6 = arith.constant 0 : index
    %6 = vector.load %arg4[%c0_5, %c0_6] : memref<1x256xf32, #tpu.memory_space<vmem>>, vector<1x256xf32>
    %7 = vector.broadcast %6 : vector<1x256xf32> to vector<56x256xf32>
    %8 = arith.addf %5, %7 : vector<56x256xf32>
    %c128_i32 = arith.constant 128 : i32
    %9 = tpu.dynamic_rotate %8 by %c128_i32 dim 1 : vector<56x256xf32>, i32 -> vector<56x256xf32>
    %10 = arith.maximumf %8, %9 : vector<56x256xf32>
    %c64_i32 = arith.constant 64 : i32
    %11 = tpu.dynamic_rotate %10 by %c64_i32 dim 1 : vector<56x256xf32>, i32 -> vector<56x256xf32>
    %12 = arith.maximumf %10, %11 : vector<56x256xf32>
    %13 = vector.extract_strided_slice %12 {offsets = [0, 0], sizes = [56, 64], strides = [1, 1]} : vector<56x256xf32> to vector<56x64xf32>
    %cst_7 = arith.constant 0.000000e+00 : f32
    %14 = vector.broadcast %cst_7 : f32 to vector<56x64xf32>
    %15 = arith.maximumf %13, %14 : vector<56x64xf32>
    %16 = arith.truncf %15 : vector<56x64xf32> to vector<56x64xbf16>
    %c0_8 = arith.constant 0 : index
    %c0_9 = arith.constant 0 : index
    %17 = vector.load %arg5[%c0_8, %c0_9] : memref<56x64xbf16, #tpu.memory_space<vmem>>, vector<56x64xbf16>
    tpu.vector_store %arg5[%c0_8, %c0_9], %16 {strides = array<i32>} : memref<56x64xbf16, #tpu.memory_space<vmem>>, vector<56x64xbf16>,
    return
  }
  func.func @transform_0(%arg0: i32) -> (i32, i32) {
    %c0_i32 = arith.constant 0 : i32
    %c0_i32_0 = arith.constant 0 : i32
    return %arg0, %c0_i32 : i32, i32
  }
  func.func @transform_1(%arg0: i32) -> (i32, i32) {
    %c0_i32 = arith.constant 0 : i32
    %c0_i32_0 = arith.constant 0 : i32
    %c0_i32_1 = arith.constant 0 : i32
    return %c0_i32, %c0_i32_0 : i32, i32
  }
  func.func @transform_2(%arg0: i32) -> (i32, i32) {
    %c0_i32 = arith.constant 0 : i32
    %c0_i32_0 = arith.constant 0 : i32
    %c0_i32_1 = arith.constant 0 : i32
    return %c0_i32, %c0_i32_0 : i32, i32
  }
  func.func @transform_3(%arg0: i32) -> (i32, i32) {
    %c0_i32 = arith.constant 0 : i32
    %c0_i32_0 = arith.constant 0 : i32
    %c0_i32_1 = arith.constant 0 : i32
    return %c0_i32, %c0_i32_0 : i32, i32
  }
  func.func @transform_4(%arg0: i32) -> (i32, i32) {
    %c0_i32 = arith.constant 0 : i32
    %c0_i32_0 = arith.constant 0 : i32
    return %arg0, %c0_i32 : i32, i32
  }
}

module attributes {stable_mosaic.version = 11 : i64} {
  func.func @mlp_kernel(%arg0: i32, %arg1: memref<8x3136xbf16, #tpu.memory_space<vmem>>, %arg2: memref<3136x128xbf16, #tpu.memory_space<vmem>>, %arg3: memref<1x128xf32, #tpu.memory_space<vmem>>, %arg4: memref<128x128xbf16, #tpu.memory_space<vmem>>, %arg5: memref<1x128xf32, #tpu.memory_space<vmem>>, %arg6: memref<8x128xf32, #tpu.memory_space<vmem>>) attributes {dimension_semantics = [#tpu.dimension_semantics<parallel>], iteration_bounds = array<i64: 2>, scalar_prefetch = 0 : i64, scratch_operands = 0 : i64, tpu.core_type = #tpu.core_type<tc>, window_params = [{transform_indices = @transform_0, window_bounds = array<i64: 8, 3136>}, {pipeline_mode = #tpu.pipeline_mode<synchronous>, transform_indices = @transform_1, window_bounds = array<i64: 3136, 128>}, {pipeline_mode = #tpu.pipeline_mode<synchronous>, transform_indices = @transform_2, window_bounds = array<i64: 1, 128>}, {pipeline_mode = #tpu.pipeline_mode<synchronous>, transform_indices = @transform_3, window_bounds = array<i64: 128, 128>}, {pipeline_mode = #tpu.pipeline_mode<synchronous>, transform_indices = @transform_4, window_bounds = array<i64: 1, 128>}, {transform_indices = @transform_5, window_bounds = array<i64: 8, 128>}]} {
    %c0 = arith.constant 0 : index
    %c0_0 = arith.constant 0 : index
    %0 = vector.load %arg1[%c0, %c0_0] : memref<8x3136xbf16, #tpu.memory_space<vmem>>, vector<8x3136xbf16>
    %c0_1 = arith.constant 0 : index
    %c0_2 = arith.constant 0 : index
    %1 = vector.load %arg2[%c0_1, %c0_2] : memref<3136x128xbf16, #tpu.memory_space<vmem>>, vector<3136x128xbf16>
    %cst = arith.constant dense<0.000000e+00> : vector<8x128xf32>
    %2 = tpu.matmul %0, %1, %cst {dimension_numbers = #tpu.dot_dimension_numbers<[1], [0], [0], [1], [0, 0, 1, 1], [], []>} : vector<8x3136xbf16>, vector<3136x128xbf16>, vector<8x128xf32> -> vector<8x128xf32>
    %c0_3 = arith.constant 0 : index
    %c0_4 = arith.constant 0 : index
    %3 = vector.load %arg3[%c0_3, %c0_4] : memref<1x128xf32, #tpu.memory_space<vmem>>, vector<1x128xf32>
    %4 = vector.broadcast %3 : vector<1x128xf32> to vector<8x128xf32>
    %5 = arith.addf %2, %4 : vector<8x128xf32>
    %cst_5 = arith.constant 0.000000e+00 : f32
    %6 = vector.broadcast %cst_5 : f32 to vector<8x128xf32>
    %7 = arith.maximumf %5, %6 : vector<8x128xf32>
    %8 = arith.truncf %7 : vector<8x128xf32> to vector<8x128xbf16>
    %c0_6 = arith.constant 0 : index
    %c0_7 = arith.constant 0 : index
    %9 = vector.load %arg4[%c0_6, %c0_7] : memref<128x128xbf16, #tpu.memory_space<vmem>>, vector<128x128xbf16>
    %cst_8 = arith.constant dense<0.000000e+00> : vector<8x128xf32>
    %10 = tpu.matmul %8, %9, %cst_8 {dimension_numbers = #tpu.dot_dimension_numbers<[1], [0], [0], [1], [0, 0, 1, 1], [], []>} : vector<8x128xbf16>, vector<128x128xbf16>, vector<8x128xf32> -> vector<8x128xf32>
    %c0_9 = arith.constant 0 : index
    %c0_10 = arith.constant 0 : index
    %11 = vector.load %arg5[%c0_9, %c0_10] : memref<1x128xf32, #tpu.memory_space<vmem>>, vector<1x128xf32>
    %12 = vector.broadcast %11 : vector<1x128xf32> to vector<8x128xf32>
    %13 = arith.addf %10, %12 : vector<8x128xf32>
    %c0_11 = arith.constant 0 : index
    %c0_12 = arith.constant 0 : index
    %14 = vector.load %arg6[%c0_11, %c0_12] : memref<8x128xf32, #tpu.memory_space<vmem>>, vector<8x128xf32>
    tpu.vector_store %arg6[%c0_11, %c0_12], %13 {strides = array<i32>} : memref<8x128xf32, #tpu.memory_space<vmem>>, vector<8x128xf32>,
    return
  }
  func.func @transform_0(%arg0: i32) -> (i32, i32) {
    %c0_i32 = arith.constant 0 : i32
    %c0_i32_0 = arith.constant 0 : i32
    return %arg0, %c0_i32 : i32, i32
  }
  func.func @transform_1(%arg0: i32) -> (i32, i32) {
    %c0_i32 = arith.constant 0 : i32
    %c0_i32_0 = arith.constant 0 : i32
    %c0_i32_1 = arith.constant 0 : i32
    return %c0_i32, %c0_i32_0 : i32, i32
  }
  func.func @transform_2(%arg0: i32) -> (i32, i32) {
    %c0_i32 = arith.constant 0 : i32
    %c0_i32_0 = arith.constant 0 : i32
    %c0_i32_1 = arith.constant 0 : i32
    return %c0_i32, %c0_i32_0 : i32, i32
  }
  func.func @transform_3(%arg0: i32) -> (i32, i32) {
    %c0_i32 = arith.constant 0 : i32
    %c0_i32_0 = arith.constant 0 : i32
    %c0_i32_1 = arith.constant 0 : i32
    return %c0_i32, %c0_i32_0 : i32, i32
  }
  func.func @transform_4(%arg0: i32) -> (i32, i32) {
    %c0_i32 = arith.constant 0 : i32
    %c0_i32_0 = arith.constant 0 : i32
    %c0_i32_1 = arith.constant 0 : i32
    return %c0_i32, %c0_i32_0 : i32, i32
  }
  func.func @transform_5(%arg0: i32) -> (i32, i32) {
    %c0_i32 = arith.constant 0 : i32
    %c0_i32_0 = arith.constant 0 : i32
    return %arg0, %c0_i32 : i32, i32
  }
}

</mosaic_0001>

<llo_original>
// kernel: cnn_forward.3
$region0: #{cnn_forward.3}
  #allocation0 [shape = 'u32[]', space=smem, size = 0x4, offset = 0x4, fixed_abs, tag = 'smem constant byte address 0x4 - core index']
  #allocation1 [shape = 'u32[72,128]{1,0:T(1,128)}', space=vmem, size = 0x9000, scoped, tag = 'internal scratch']
  %s0 = inlined_call_operand.vmem [shape: bf16[400,36], index: 0, kind: input, shape index: {}]
  %s1 = inlined_call_operand.vmem [shape: bf16[36,128], index: 1, kind: input, shape index: {}]
  %s2 = inlined_call_operand.vmem [shape: f32[1,128], index: 2, kind: input, shape index: {}]
  %s3 = inlined_call_operand.vmem [shape: f32[1,128], index: 3, kind: input, shape index: {}]
  %s4 = inlined_call_operand.vmem [shape: bf16[400,32], index: 4, kind: output, shape index: {}]
  %s5 = sld [smem:[#allocation0]]
  $region49: #{cnn_forward.3} parent=0
    _
  %s7 = ssub.s32 1, %s5
  %s8 = scalar_select 0, %s7, %s5
  loop: start=0, step=1, limit=4
  $region2: #{cnn_forward.3} parent=0 // loop_pre_header
    _
  $region3: #{cnn_forward.3} parent=0 // loop_header
    %s10 = sphi 0, %s14
    %p11 = scmp.ge.s32.totalorder %s10, 4
    %s20 = sphi 0, %s22
    %s23 = sphi 0, %s20
    %s24 = sphi 0, %s23
    %s40 = sphi 0, %s24
    %s44 = sphi 0, %s44
    %s46 = sphi 0, %s44
    %s47 = sphi 0, %s46
    %s61 = sphi 0, %s47
    %s65 = sphi 0, %s65
    %s67 = sphi 0, %s65
    %s68 = sphi 0, %s67
    %s82 = sphi 0, %s68
    %s86 = sphi 0, %s86
    %s88 = sphi 0, %s86
    %s89 = sphi 0, %s88
    %s103 = sphi 0, %s89
    %s109 = sphi 0, %s111
    %s112 = sphi 0, %s109
    %s113 = sphi 0, %s112
    %s129 = sphi 0, %s113
  $region4: #{cnn_forward.3} parent=0 // loop_header_branch
    %13 = sbr.rel (%p11) target = $region8
  $region5: #{cnn_forward.3} parent=0 // loop_body
    %s15 = ssub.s32 %s10, 1
    %s16 = ssub.s32 %s10, 2
    %s17 = sadd.s32 %s10, 1
    %s18 = ssub.s32 %s10, %s17
    %p19 = scmp.eq.s32.totalorder %s18, 0
    %s21 = sadd.s32 %s20, 1
    %s22 = scalar_select %p19, %s20, %s21
    %p25 = pneg %p19
    %p26 = scmp.eq.s32.totalorder %s10, 1
    %p27 = por %p25, %p26
    %p28 = scmp.ne.s32.totalorder %s20, %s23
    %p29 = scmp.eq.s32.totalorder %s10, 0
    %p30 = por %p28, %p29
    %p31 = scmp.ne.s32.totalorder %s20, %s23
    %p32 = scmp.eq.s32.totalorder %s15, 1
    %p33 = por %p31, %p32
    %p34 = scmp.ne.s32.totalorder %s23, %s24
    %p35 = scmp.eq.s32.totalorder %s15, 0
    %p36 = por %p34, %p35
    %p37 = scmp.ne.s32.totalorder %s23, %s24
    %p38 = scmp.eq.s32.totalorder %s16, 1
    %p39 = por %p37, %p38
    %p41 = scmp.ne.s32.totalorder %s24, %s40
    %p42 = scmp.eq.s32.totalorder %s16, 0
    %p43 = por %p41, %p42
    %s45 = sadd.s32 %s44, 1
    %p48 = scmp.eq.s32.totalorder %s10, 1
    %p49 = scmp.ne.s32.totalorder %s44, %s46
    %p50 = scmp.eq.s32.totalorder %s10, 0
    %p51 = por %p49, %p50
    %p52 = scmp.ne.s32.totalorder %s44, %s46
    %p53 = scmp.eq.s32.totalorder %s15, 1
    %p54 = por %p52, %p53
    %p55 = scmp.ne.s32.totalorder %s46, %s47
    %p56 = scmp.eq.s32.totalorder %s15, 0
    %p57 = por %p55, %p56
    %p58 = scmp.ne.s32.totalorder %s46, %s47
    %p59 = scmp.eq.s32.totalorder %s16, 1
    %p60 = por %p58, %p59
    %p62 = scmp.ne.s32.totalorder %s47, %s61
    %p63 = scmp.eq.s32.totalorder %s16, 0
    %p64 = por %p62, %p63
    %s66 = sadd.s32 %s65, 1
    %p69 = scmp.eq.s32.totalorder %s10, 1
    %p70 = scmp.ne.s32.totalorder %s65, %s67
    %p71 = scmp.eq.s32.totalorder %s10, 0
    %p72 = por %p70, %p71
    %p73 = scmp.ne.s32.totalorder %s65, %s67
    %p74 = scmp.eq.s32.totalorder %s15, 1
    %p75 = por %p73, %p74
    %p76 = scmp.ne.s32.totalorder %s67, %s68
    %p77 = scmp.eq.s32.totalorder %s15, 0
    %p78 = por %p76, %p77
    %p79 = scmp.ne.s32.totalorder %s67, %s68
    %p80 = scmp.eq.s32.totalorder %s16, 1
    %p81 = por %p79, %p80
    %p83 = scmp.ne.s32.totalorder %s68, %s82
    %p84 = scmp.eq.s32.totalorder %s16, 0
    %p85 = por %p83, %p84
    %s87 = sadd.s32 %s86, 1
    %p90 = scmp.eq.s32.totalorder %s10, 1
    %p91 = scmp.ne.s32.totalorder %s86, %s88
    %p92 = scmp.eq.s32.totalorder %s10, 0
    %p93 = por %p91, %p92
    %p94 = scmp.ne.s32.totalorder %s86, %s88
    %p95 = scmp.eq.s32.totalorder %s15, 1
    %p96 = por %p94, %p95
    %p97 = scmp.ne.s32.totalorder %s88, %s89
    %p98 = scmp.eq.s32.totalorder %s15, 0
    %p99 = por %p97, %p98
    %p100 = scmp.ne.s32.totalorder %s88, %s89
    %p101 = scmp.eq.s32.totalorder %s16, 1
    %p102 = por %p100, %p101
    %p104 = scmp.ne.s32.totalorder %s89, %s103
    %p105 = scmp.eq.s32.totalorder %s16, 0
    %p106 = por %p104, %p105
    %s107 = ssub.s32 %s10, %s17
    %p108 = scmp.eq.s32.totalorder %s107, 0
    %s110 = sadd.s32 %s109, 1
    %s111 = scalar_select %p108, %s109, %s110
    %p114 = pneg %p108
    %p115 = scmp.eq.s32.totalorder %s10, 1
    %p116 = por %p114, %p115
    %p117 = scmp.ne.s32.totalorder %s109, %s112
    %p118 = scmp.eq.s32.totalorder %s10, 0
    %p119 = por %p117, %p118
    %p120 = scmp.ne.s32.totalorder %s109, %s112
    %p121 = scmp.eq.s32.totalorder %s15, 1
    %p122 = por %p120, %p121
    %p123 = scmp.ne.s32.totalorder %s112, %s113
    %p124 = scmp.eq.s32.totalorder %s15, 0
    %p125 = por %p123, %p124
    %p126 = scmp.ne.s32.totalorder %s112, %s113
    %p127 = scmp.eq.s32.totalorder %s16, 1
    %p128 = por %p126, %p127
    %p130 = scmp.ne.s32.totalorder %s113, %s129
    %p131 = scmp.eq.s32.totalorder %s16, 0
    %p132 = por %p130, %p131
    %p133 = scmp.le.s32.totalorder 1, %s10
    %p134 = scmp.lt.s32.totalorder %s10, 3
    %p135 = pnand %p133, %p134
    %p136 = pneg %p135
    // Predicated region
    $region9: #{cnn_forward.3} parent=5 // pred_check
      _
    $region10: #{cnn_forward.3} parent=5 // pred_check_branch
      %138 = sbr.rel (%p135) target = $region12
    $region11: #{cnn_forward.3} parent=5 // pred_region
      %s139 = ssub.s32 %s10, 1
      // Predicated region
      $region13: #{cnn_forward.3} parent=11 // pred_check
        %p140 = pneg %p57
      $region14: #{cnn_forward.3} parent=11 // pred_check_branch
        %142 = sbr.rel (%p140) target = $region16
      $region15: #{cnn_forward.3} parent=11 // pred_region
        _
      $region16: #{cnn_forward.3} parent=11 // pred_fallthru
        _
      // Predicated region
      $region17: #{cnn_forward.3} parent=11 // pred_check
        %p143 = pneg %p78
      $region18: #{cnn_forward.3} parent=11 // pred_check_branch
        %145 = sbr.rel (%p143) target = $region20
      $region19: #{cnn_forward.3} parent=11 // pred_region
        _
      $region20: #{cnn_forward.3} parent=11 // pred_fallthru
        _
      // Predicated region
      $region21: #{cnn_forward.3} parent=11 // pred_check
        %p146 = pneg %p99
      $region22: #{cnn_forward.3} parent=11 // pred_check_branch
        %148 = sbr.rel (%p146) target = $region24
      $region23: #{cnn_forward.3} parent=11 // pred_region
        _
      $region24: #{cnn_forward.3} parent=11 // pred_fallthru
        _
    $region12: #{cnn_forward.3} parent=5 // pred_fallthru
      _
    %p149 = scmp.lt.s32.totalorder %s10, 2
    // Predicated region
    $region25: #{cnn_forward.3} parent=5 // pred_check
      %p150 = pneg %p149
    $region26: #{cnn_forward.3} parent=5 // pred_check_branch
      %152 = sbr.rel (%p150) target = $region28
    $region27: #{cnn_forward.3} parent=5 // pred_region
      // Predicated region
      $region29: #{cnn_forward.3} parent=27 // pred_check
        %p153 = pneg %p30
      $region30: #{cnn_forward.3} parent=27 // pred_check_branch
        %155 = sbr.rel (%p153) target = $region32
      $region31: #{cnn_forward.3} parent=27 // pred_region
        %s156 = smul.u32 25, %s10
        %p157 = scmp.lt.s32.totalorder %s156, 49
        %s158 = scalar_select %p157, %s156, 49
        %s159 = smul.addr %s158, 4
        %s160 = scalar_lea.vmem %s0, %s159
        %s161 = smul.u32 25, %s10
      $region32: #{cnn_forward.3} parent=27 // pred_fallthru
        _
    $region28: #{cnn_forward.3} parent=5 // pred_fallthru
      _
    %p162 = scmp.le.s32.totalorder 1, %s10
    %p163 = scmp.lt.s32.totalorder %s10, 3
    %p164 = pnand %p162, %p163
    %p165 = pneg %p164
    // Predicated region
    $region33: #{cnn_forward.3} parent=5 // pred_check
      _
    $region34: #{cnn_forward.3} parent=5 // pred_check_branch
      %167 = sbr.rel (%p164) target = $region36
    $region35: #{cnn_forward.3} parent=5 // pred_region
      %s168 = ssub.s32 %s10, 1
      %s169 = smul.u32 25, %s15
      %p170 = scmp.lt.s32.totalorder %s169, 49
      %s171 = scalar_select %p170, %s169, 49
      %s172 = smul.addr %s171, 4
      %s173 = scalar_lea.vmem %s0, %s172
      %p174 = pneg %p36
      %p175 = pneg %p33
      %p176 = pneg %p57
      %p177 = pneg %p54
      %p178 = pneg %p78
      %p179 = pneg %p75
      %p180 = pneg %p99
      %p181 = pneg %p96
      %p182 = pneg %p125
      %p183 = pneg %p122
      %s184 = smul.u32 25, %s15
      %p185 = scmp.lt.s32.totalorder %s184, 49
      %s186 = scalar_select %p185, %s184, 49
      %s187 = smul.addr %s186, 4
      %s188 = scalar_lea.vmem %s4, %s187
      %s189 = smul.u32 25, %s15
      %p190 = scmp.lt.s32.totalorder %s189, 49
      %s191 = scalar_select %p190, %s189, 49
      %s192 = smul.addr %s191, 4
      %s193 = scalar_lea.vmem %s0, %s192
      %s194 = smul.u32 25, %s15
      %s195 = smul.u32 25, %s15
      %p196 = scmp.lt.s32.totalorder %s195, 49
      %s197 = scalar_select %p196, %s195, 49
      %s198 = smul.addr %s197, 4
      %s199 = scalar_lea.vmem %s4, %s198
      %s200 = smul.u32 25, %s15
      %v202 = vld [vmem:[%s193] sm:$0xf]
      %v203 = vld [vmem:[%s193 + $0x4] sm:$0xf]
      %v204 = vld [vmem:[%s193 + $0x8] sm:$0xf]
      %v205 = vld [vmem:[%s193 + $0xc] sm:$0xf]
      %v206 = vld [vmem:[%s193 + $0x10] sm:$0xf]
      %v207 = vld [vmem:[%s193 + $0x14] sm:$0xf]
      %v208 = vld [vmem:[%s193 + $0x18] sm:$0xf]
      %v209 = vld [vmem:[%s193 + $0x1c] sm:$0xf]
      %v210 = vld [vmem:[%s193 + $0x20] sm:$0xf]
      %v211 = vld [vmem:[%s193 + $0x24] sm:$0xf]
      %v212 = vld [vmem:[%s193 + $0x28] sm:$0xf]
      %v213 = vld [vmem:[%s193 + $0x2c] sm:$0xf]
      %v214 = vld [vmem:[%s193 + $0x30] sm:$0xf]
      %v215 = vld [vmem:[%s193 + $0x34] sm:$0xf]
      %v216 = vld [vmem:[%s193 + $0x38] sm:$0xf]
      %v217 = vld [vmem:[%s193 + $0x3c] sm:$0xf]
      %v218 = vld [vmem:[%s193 + $0x40] sm:$0xf]
      %v219 = vld [vmem:[%s193 + $0x44] sm:$0xf]
      %v220 = vld [vmem:[%s193 + $0x48] sm:$0xf]
      %v221 = vld [vmem:[%s193 + $0x4c] sm:$0xf]
      %v222 = vld [vmem:[%s193 + $0x50] sm:$0xf]
      %v223 = vld [vmem:[%s193 + $0x54] sm:$0xf]
      %v224 = vld [vmem:[%s193 + $0x58] sm:$0xf]
      %v225 = vld [vmem:[%s193 + $0x5c] sm:$0xf]
      %v226 = vld [vmem:[%s193 + $0x60] sm:$0xf]
      %v227 = vld [vmem:[%s1] sm:$0xf]
      %v228 = vld [vmem:[%s1 + $0x4] sm:$0xf]
      %v229 = vld [vmem:[%s1 + $0x8] sm:$0xf]
      %v230 = vld [vmem:[%s1 + $0xc] sm:$0xf]
      %v231 = vld [vmem:[%s1 + $0x10] sm:$0x3]
      %v257 = vunpack.c.l.b16 %v202
      %v258 = vunpack.c.l.b16 %v203
      %v259 = vunpack.c.l.b16 %v204
      %v260 = vunpack.c.l.b16 %v205
      %v261 = vunpack.c.l.b16 %v206
      %v262 = vunpack.c.l.b16 %v207
      %v263 = vunpack.c.l.b16 %v208
      %v264 = vunpack.c.l.b16 %v209
      %v265 = vunpack.c.l.b16 %v210
      %v266 = vunpack.c.l.b16 %v211
      %v267 = vunpack.c.l.b16 %v212
      %v268 = vunpack.c.l.b16 %v213
      %v269 = vunpack.c.l.b16 %v214
      %v270 = vunpack.c.l.b16 %v215
      %v271 = vunpack.c.l.b16 %v216
      %v272 = vunpack.c.l.b16 %v217
      %v273 = vunpack.c.l.b16 %v218
      %v274 = vunpack.c.l.b16 %v219
      %v275 = vunpack.c.l.b16 %v220
      %v276 = vunpack.c.l.b16 %v221
      %v277 = vunpack.c.l.b16 %v222
      %v278 = vunpack.c.l.b16 %v223
      %v279 = vunpack.c.l.b16 %v224
      %v280 = vunpack.c.l.b16 %v225
      %v281 = vunpack.c.l.b16 %v226
      %v282 = vpack.c.b16 %v258, %v257
      %v283 = vpack.c.b16 %v260, %v259
      %v284 = vpack.c.b16 %v262, %v261
      %v285 = vpack.c.b16 %v264, %v263
      %v286 = vpack.c.b16 %v266, %v265
      %v287 = vpack.c.b16 %v268, %v267
      %v288 = vpack.c.b16 %v270, %v269
      %v289 = vpack.c.b16 %v272, %v271
      %v290 = vpack.c.b16 %v274, %v273
      %v291 = vpack.c.b16 %v276, %v275
      %v292 = vpack.c.b16 %v278, %v277
      %v293 = vpack.c.b16 %v280, %v279
      %v294 = vpack.c.b16 %v281, %v281
      %v300 = vunpack.c.l.b16 %v227
      %v301 = vunpack.c.l.b16 %v228
      %v302 = vunpack.c.l.b16 %v229
      %v303 = vunpack.c.l.b16 %v230
      %v304 = vunpack.c.l.b16 %v231
      %v305 = vpack.c.b16 %v301, %v300
      %v306 = vpack.c.b16 %v303, %v302
      %v307 = vpack.c.b16 %v304, %v304
      %vm310 = vcmask 293888
      %v312 = vsel %vm310, %v282, 0
      %v315 = vsel %vm310, %v283, 0
      %v318 = vsel %vm310, %v284, 0
      %v321 = vsel %vm310, %v285, 0
      %v324 = vsel %vm310, %v286, 0
      %v327 = vsel %vm310, %v287, 0
      %v330 = vsel %vm310, %v288, 0
      %v333 = vsel %vm310, %v289, 0
      %v336 = vsel %vm310, %v290, 0
      %v339 = vsel %vm310, %v291, 0
      %v342 = vsel %vm310, %v292, 0
      %v345 = vsel %vm310, %v293, 0
      %v348 = vsel %vm310, %v294, 0
      %vm350 = vcmask 1041408
      %v352 = vsel %vm350, %v307, 0
      %354 = vmatpush.bf16.msra.mxu0 0
      %355 = vmatpush.bf16.msra.mxu0 0
      %356 = vmatpush.bf16.msra.mxu0 0
      %357 = vmatpush.bf16.msra.mxu0 0
      %358 = vmatpush.bf16.msra.mxu0 0
      %359 = vmatpush.bf16.msra.mxu0 %v352
      %360 = vmatpush.bf16.msra.mxu0 %v306
      %361 = vmatpush.bf16.msra.mxu0 %v305
      %362 = vmatmul.bf16.gmra.mxu0 %v312
      %v363 = vpop.f32.mrf.mxu0
      %v364 = vadd.f32 0.0, %v363
      %v365 = vpop.f32.mrf.mxu0
      %v366 = vadd.f32 0.0, %v365
      %367 = vmatmul.bf16.gmra.mxu0 %v315
      %v368 = vpop.f32.mrf.mxu0
      %v369 = vadd.f32 0.0, %v368
      %v370 = vpop.f32.mrf.mxu0
      %v371 = vadd.f32 0.0, %v370
      %372 = vmatmul.bf16.gmra.mxu0 %v318
      %v373 = vpop.f32.mrf.mxu0
      %v374 = vadd.f32 0.0, %v373
      %v375 = vpop.f32.mrf.mxu0
      %v376 = vadd.f32 0.0, %v375
      %377 = vmatmul.bf16.gmra.mxu0 %v321
      %v378 = vpop.f32.mrf.mxu0
      %v379 = vadd.f32 0.0, %v378
      %v380 = vpop.f32.mrf.mxu0
      %v381 = vadd.f32 0.0, %v380
      %382 = vmatmul.bf16.gmra.mxu0 %v324
      %v383 = vpop.f32.mrf.mxu0
      %v384 = vadd.f32 0.0, %v383
      %v385 = vpop.f32.mrf.mxu0
      %v386 = vadd.f32 0.0, %v385
      %387 = vmatmul.bf16.gmra.mxu0 %v327
      %v388 = vpop.f32.mrf.mxu0
      %v389 = vadd.f32 0.0, %v388
      %v390 = vpop.f32.mrf.mxu0
      %v391 = vadd.f32 0.0, %v390
      %392 = vmatmul.bf16.gmra.mxu0 %v330
      %v393 = vpop.f32.mrf.mxu0
      %v394 = vadd.f32 0.0, %v393
      %v395 = vpop.f32.mrf.mxu0
      %v396 = vadd.f32 0.0, %v395
      %397 = vmatmul.bf16.gmra.mxu0 %v333
      %v398 = vpop.f32.mrf.mxu0
      %v399 = vadd.f32 0.0, %v398
      %v400 = vpop.f32.mrf.mxu0
      %v401 = vadd.f32 0.0, %v400
      %402 = vmatmul.bf16.gmra.mxu0 %v336
      %v403 = vpop.f32.mrf.mxu0
      %v404 = vadd.f32 0.0, %v403
      %v405 = vpop.f32.mrf.mxu0
      %v406 = vadd.f32 0.0, %v405
      %407 = vmatmul.bf16.gmra.mxu0 %v339
      %v408 = vpop.f32.mrf.mxu0
      %v409 = vadd.f32 0.0, %v408
      %v410 = vpop.f32.mrf.mxu0
      %v411 = vadd.f32 0.0, %v410
      %412 = vmatmul.bf16.gmra.mxu0 %v342
      %v413 = vpop.f32.mrf.mxu0
      %v414 = vadd.f32 0.0, %v413
      %v415 = vpop.f32.mrf.mxu0
      %v416 = vadd.f32 0.0, %v415
      %417 = vmatmul.bf16.gmra.mxu0 %v345
      %v418 = vpop.f32.mrf.mxu0
      %v419 = vadd.f32 0.0, %v418
      %v420 = vpop.f32.mrf.mxu0
      %v421 = vadd.f32 0.0, %v420
      %422 = vmatmul.bf16.gmra.mxu0 %v348
      %v423 = vpop.f32.mrf.mxu0
      %v424 = vadd.f32 0.0, %v423
      %v425 = vpop.f32.mrf.mxu0
      %426 = vdwg.mxu0
      %v427 = vld [vmem:[%s2] sm:$0x1]
      %v429 = vperm.slane %v427, 0
      %v431 = vmul.f32 %v364, %v429
      %v432 = vmul.f32 %v366, %v429
      %v433 = vmul.f32 %v369, %v429
      %v434 = vmul.f32 %v371, %v429
      %v435 = vmul.f32 %v374, %v429
      %v436 = vmul.f32 %v376, %v429
      %v437 = vmul.f32 %v379, %v429
      %v438 = vmul.f32 %v381, %v429
      %v439 = vmul.f32 %v384, %v429
      %v440 = vmul.f32 %v386, %v429
      %v441 = vmul.f32 %v389, %v429
      %v442 = vmul.f32 %v391, %v429
      %v443 = vmul.f32 %v394, %v429
      %v444 = vmul.f32 %v396, %v429
      %v445 = vmul.f32 %v399, %v429
      %v446 = vmul.f32 %v401, %v429
      %v447 = vmul.f32 %v404, %v429
      %v448 = vmul.f32 %v406, %v429
      %v449 = vmul.f32 %v409, %v429
      %v450 = vmul.f32 %v411, %v429
      %v451 = vmul.f32 %v414, %v429
      %v452 = vmul.f32 %v416, %v429
      %v453 = vmul.f32 %v419, %v429
      %v454 = vmul.f32 %v421, %v429
      %v455 = vmul.f32 %v424, %v429
      %v456 = vld [vmem:[%s3] sm:$0x1]
      %v458 = vperm.slane %v456, 0
      %v460 = vadd.f32 %v431, %v458
      %v461 = vadd.f32 %v432, %v458
      %v462 = vadd.f32 %v433, %v458
      %v463 = vadd.f32 %v434, %v458
      %v464 = vadd.f32 %v435, %v458
      %v465 = vadd.f32 %v436, %v458
      %v466 = vadd.f32 %v437, %v458
      %v467 = vadd.f32 %v438, %v458
      %v468 = vadd.f32 %v439, %v458
      %v469 = vadd.f32 %v440, %v458
      %v470 = vadd.f32 %v441, %v458
      %v471 = vadd.f32 %v442, %v458
      %v472 = vadd.f32 %v443, %v458
      %v473 = vadd.f32 %v444, %v458
      %v474 = vadd.f32 %v445, %v458
      %v475 = vadd.f32 %v446, %v458
      %v476 = vadd.f32 %v447, %v458
      %v477 = vadd.f32 %v448, %v458
      %v478 = vadd.f32 %v449, %v458
      %v479 = vadd.f32 %v450, %v458
      %v480 = vadd.f32 %v451, %v458
      %v481 = vadd.f32 %v452, %v458
      %v482 = vadd.f32 %v453, %v458
      %v483 = vadd.f32 %v454, %v458
      %v484 = vadd.f32 %v455, %v458
      %485 = vrot.lane.b32.xlu0 %v460, 64
      %v486 = vpop.permute.xlu0 %485
      %487 = vrot.lane.b32.xlu0 %v461, 64
      %v488 = vpop.permute.xlu0 %487
      %489 = vrot.lane.b32.xlu0 %v462, 64
      %v490 = vpop.permute.xlu0 %489
      %491 = vrot.lane.b32.xlu0 %v463, 64
      %v492 = vpop.permute.xlu0 %491
      %493 = vrot.lane.b32.xlu0 %v464, 64
      %v494 = vpop.permute.xlu0 %493
      %495 = vrot.lane.b32.xlu0 %v465, 64
      %v496 = vpop.permute.xlu0 %495
      %497 = vrot.lane.b32.xlu0 %v466, 64
      %v498 = vpop.permute.xlu0 %497
      %499 = vrot.lane.b32.xlu0 %v467, 64
      %v500 = vpop.permute.xlu0 %499
      %501 = vrot.lane.b32.xlu0 %v468, 64
      %v502 = vpop.permute.xlu0 %501
      %503 = vrot.lane.b32.xlu0 %v469, 64
      %v504 = vpop.permute.xlu0 %503
      %505 = vrot.lane.b32.xlu0 %v470, 64
      %v506 = vpop.permute.xlu0 %505
      %507 = vrot.lane.b32.xlu0 %v471, 64
      %v508 = vpop.permute.xlu0 %507
      %509 = vrot.lane.b32.xlu0 %v472, 64
      %v510 = vpop.permute.xlu0 %509
      %511 = vrot.lane.b32.xlu0 %v473, 64
      %v512 = vpop.permute.xlu0 %511
      %513 = vrot.lane.b32.xlu0 %v474, 64
      %v514 = vpop.permute.xlu0 %513
      %515 = vrot.lane.b32.xlu0 %v475, 64
      %v516 = vpop.permute.xlu0 %515
      %517 = vrot.lane.b32.xlu0 %v476, 64
      %v518 = vpop.permute.xlu0 %517
      %519 = vrot.lane.b32.xlu0 %v477, 64
      %v520 = vpop.permute.xlu0 %519
      %521 = vrot.lane.b32.xlu0 %v478, 64
      %v522 = vpop.permute.xlu0 %521
      %523 = vrot.lane.b32.xlu0 %v479, 64
      %v524 = vpop.permute.xlu0 %523
      %525 = vrot.lane.b32.xlu0 %v480, 64
      %v526 = vpop.permute.xlu0 %525
      %527 = vrot.lane.b32.xlu0 %v481, 64
      %v528 = vpop.permute.xlu0 %527
      %529 = vrot.lane.b32.xlu0 %v482, 64
      %v530 = vpop.permute.xlu0 %529
      %531 = vrot.lane.b32.xlu0 %v483, 64
      %v532 = vpop.permute.xlu0 %531
      %533 = vrot.lane.b32.xlu0 %v484, 64
      %v534 = vpop.permute.xlu0 %533
      %v535 = vmax.f32 %v460, %v486
      %v536 = vmax.f32 %v461, %v488
      %v537 = vmax.f32 %v462, %v490
      %v538 = vmax.f32 %v463, %v492
      %v539 = vmax.f32 %v464, %v494
      %v540 = vmax.f32 %v465, %v496
      %v541 = vmax.f32 %v466, %v498
      %v542 = vmax.f32 %v467, %v500
      %v543 = vmax.f32 %v468, %v502
      %v544 = vmax.f32 %v469, %v504
      %v545 = vmax.f32 %v470, %v506
      %v546 = vmax.f32 %v471, %v508
      %v547 = vmax.f32 %v472, %v510
      %v548 = vmax.f32 %v473, %v512
      %v549 = vmax.f32 %v474, %v514
      %v550 = vmax.f32 %v475, %v516
      %v551 = vmax.f32 %v476, %v518
      %v552 = vmax.f32 %v477, %v520
      %v553 = vmax.f32 %v478, %v522
      %v554 = vmax.f32 %v479, %v524
      %v555 = vmax.f32 %v480, %v526
      %v556 = vmax.f32 %v481, %v528
      %v557 = vmax.f32 %v482, %v530
      %v558 = vmax.f32 %v483, %v532
      %v559 = vmax.f32 %v484, %v534
      %560 = vrot.lane.b32.xlu0 %v535, 32
      %v561 = vpop.permute.xlu0 %560
      %562 = vrot.lane.b32.xlu0 %v536, 32
      %v563 = vpop.permute.xlu0 %562
      %564 = vrot.lane.b32.xlu0 %v537, 32
      %v565 = vpop.permute.xlu0 %564
      %566 = vrot.lane.b32.xlu0 %v538, 32
      %v567 = vpop.permute.xlu0 %566
      %568 = vrot.lane.b32.xlu0 %v539, 32
      %v569 = vpop.permute.xlu0 %568
      %570 = vrot.lane.b32.xlu0 %v540, 32
      %v571 = vpop.permute.xlu0 %570
      %572 = vrot.lane.b32.xlu0 %v541, 32
      %v573 = vpop.permute.xlu0 %572
      %574 = vrot.lane.b32.xlu0 %v542, 32
      %v575 = vpop.permute.xlu0 %574
      %576 = vrot.lane.b32.xlu0 %v543, 32
      %v577 = vpop.permute.xlu0 %576
      %578 = vrot.lane.b32.xlu0 %v544, 32
      %v579 = vpop.permute.xlu0 %578
      %580 = vrot.lane.b32.xlu0 %v545, 32
      %v581 = vpop.permute.xlu0 %580
      %582 = vrot.lane.b32.xlu0 %v546, 32
      %v583 = vpop.permute.xlu0 %582
      %584 = vrot.lane.b32.xlu0 %v547, 32
      %v585 = vpop.permute.xlu0 %584
      %586 = vrot.lane.b32.xlu0 %v548, 32
      %v587 = vpop.permute.xlu0 %586
      %588 = vrot.lane.b32.xlu0 %v549, 32
      %v589 = vpop.permute.xlu0 %588
      %590 = vrot.lane.b32.xlu0 %v550, 32
      %v591 = vpop.permute.xlu0 %590
      %592 = vrot.lane.b32.xlu0 %v551, 32
      %v593 = vpop.permute.xlu0 %592
      %594 = vrot.lane.b32.xlu0 %v552, 32
      %v595 = vpop.permute.xlu0 %594
      %596 = vrot.lane.b32.xlu0 %v553, 32
      %v597 = vpop.permute.xlu0 %596
      %598 = vrot.lane.b32.xlu0 %v554, 32
      %v599 = vpop.permute.xlu0 %598
      %600 = vrot.lane.b32.xlu0 %v555, 32
      %v601 = vpop.permute.xlu0 %600
      %602 = vrot.lane.b32.xlu0 %v556, 32
      %v603 = vpop.permute.xlu0 %602
      %604 = vrot.lane.b32.xlu0 %v557, 32
      %v605 = vpop.permute.xlu0 %604
      %606 = vrot.lane.b32.xlu0 %v558, 32
      %v607 = vpop.permute.xlu0 %606
      %608 = vrot.lane.b32.xlu0 %v559, 32
      %v609 = vpop.permute.xlu0 %608
      %v610 = vmax.f32 %v535, %v561
      %v611 = vmax.f32 %v536, %v563
      %v612 = vmax.f32 %v537, %v565
      %v613 = vmax.f32 %v538, %v567
      %v614 = vmax.f32 %v539, %v569
      %v615 = vmax.f32 %v540, %v571
      %v616 = vmax.f32 %v541, %v573
      %v617 = vmax.f32 %v542, %v575
      %v618 = vmax.f32 %v543, %v577
      %v619 = vmax.f32 %v544, %v579
      %v620 = vmax.f32 %v545, %v581
      %v621 = vmax.f32 %v546, %v583
      %v622 = vmax.f32 %v547, %v585
      %v623 = vmax.f32 %v548, %v587
      %v624 = vmax.f32 %v549, %v589
      %v625 = vmax.f32 %v550, %v591
      %v626 = vmax.f32 %v551, %v593
      %v627 = vmax.f32 %v552, %v595
      %v628 = vmax.f32 %v553, %v597
      %v629 = vmax.f32 %v554, %v599
      %v630 = vmax.f32 %v555, %v601
      %v631 = vmax.f32 %v556, %v603
      %v632 = vmax.f32 %v557, %v605
      %v633 = vmax.f32 %v558, %v607
      %v634 = vmax.f32 %v559, %v609
      %v635 = vmax.f32 %v610, 0.0
      %v636 = vmax.f32 %v611, 0.0
      %v637 = vmax.f32 %v612, 0.0
      %v638 = vmax.f32 %v613, 0.0
      %v639 = vmax.f32 %v614, 0.0
      %v640 = vmax.f32 %v615, 0.0
      %v641 = vmax.f32 %v616, 0.0
      %v642 = vmax.f32 %v617, 0.0
      %v643 = vmax.f32 %v618, 0.0
      %v644 = vmax.f32 %v619, 0.0
      %v645 = vmax.f32 %v620, 0.0
      %v646 = vmax.f32 %v621, 0.0
      %v647 = vmax.f32 %v622, 0.0
      %v648 = vmax.f32 %v623, 0.0
      %v649 = vmax.f32 %v624, 0.0
      %v650 = vmax.f32 %v625, 0.0
      %v651 = vmax.f32 %v626, 0.0
      %v652 = vmax.f32 %v627, 0.0
      %v653 = vmax.f32 %v628, 0.0
      %v654 = vmax.f32 %v629, 0.0
      %v655 = vmax.f32 %v630, 0.0
      %v656 = vmax.f32 %v631, 0.0
      %v657 = vmax.f32 %v632, 0.0
      %v658 = vmax.f32 %v633, 0.0
      %v659 = vmax.f32 %v634, 0.0
      %v660 = vpack.c.bf16 %v635, %v635
      %v661 = vpack.c.bf16 %v636, %v636
      %v662 = vpack.c.bf16 %v637, %v637
      %v663 = vpack.c.bf16 %v638, %v638
      %v664 = vpack.c.bf16 %v639, %v639
      %v665 = vpack.c.bf16 %v640, %v640
      %v666 = vpack.c.bf16 %v641, %v641
      %v667 = vpack.c.bf16 %v642, %v642
      %v668 = vpack.c.bf16 %v643, %v643
      %v669 = vpack.c.bf16 %v644, %v644
      %v670 = vpack.c.bf16 %v645, %v645
      %v671 = vpack.c.bf16 %v646, %v646
      %v672 = vpack.c.bf16 %v647, %v647
      %v673 = vpack.c.bf16 %v648, %v648
      %v674 = vpack.c.bf16 %v649, %v649
      %v675 = vpack.c.bf16 %v650, %v650
      %v676 = vpack.c.bf16 %v651, %v651
      %v677 = vpack.c.bf16 %v652, %v652
      %v678 = vpack.c.bf16 %v653, %v653
      %v679 = vpack.c.bf16 %v654, %v654
      %v680 = vpack.c.bf16 %v655, %v655
      %v681 = vpack.c.bf16 %v656, %v656
      %v682 = vpack.c.bf16 %v657, %v657
      %v683 = vpack.c.bf16 %v658, %v658
      %v684 = vpack.c.bf16 %v659, %v659
      %vm685 = vcmask 257024
      %686 = vst.msk [vmem:[%s199] sm:$0xf] %vm685, %v660
      %687 = vst.msk [vmem:[%s199 + $0x4] sm:$0xf] %vm685, %v661
      %688 = vst.msk [vmem:[%s199 + $0x8] sm:$0xf] %vm685, %v662
      %689 = vst.msk [vmem:[%s199 + $0xc] sm:$0xf] %vm685, %v663
      %690 = vst.msk [vmem:[%s199 + $0x10] sm:$0xf] %vm685, %v664
      %691 = vst.msk [vmem:[%s199 + $0x14] sm:$0xf] %vm685, %v665
      %692 = vst.msk [vmem:[%s199 + $0x18] sm:$0xf] %vm685, %v666
      %693 = vst.msk [vmem:[%s199 + $0x1c] sm:$0xf] %vm685, %v667
      %694 = vst.msk [vmem:[%s199 + $0x20] sm:$0xf] %vm685, %v668
      %695 = vst.msk [vmem:[%s199 + $0x24] sm:$0xf] %vm685, %v669
      %696 = vst.msk [vmem:[%s199 + $0x28] sm:$0xf] %vm685, %v670
      %697 = vst.msk [vmem:[%s199 + $0x2c] sm:$0xf] %vm685, %v671
      %698 = vst.msk [vmem:[%s199 + $0x30] sm:$0xf] %vm685, %v672
      %699 = vst.msk [vmem:[%s199 + $0x34] sm:$0xf] %vm685, %v673
      %700 = vst.msk [vmem:[%s199 + $0x38] sm:$0xf] %vm685, %v674
      %701 = vst.msk [vmem:[%s199 + $0x3c] sm:$0xf] %vm685, %v675
      %702 = vst.msk [vmem:[%s199 + $0x40] sm:$0xf] %vm685, %v676
      %703 = vst.msk [vmem:[%s199 + $0x44] sm:$0xf] %vm685, %v677
      %704 = vst.msk [vmem:[%s199 + $0x48] sm:$0xf] %vm685, %v678
      %705 = vst.msk [vmem:[%s199 + $0x4c] sm:$0xf] %vm685, %v679
      %706 = vst.msk [vmem:[%s199 + $0x50] sm:$0xf] %vm685, %v680
      %707 = vst.msk [vmem:[%s199 + $0x54] sm:$0xf] %vm685, %v681
      %708 = vst.msk [vmem:[%s199 + $0x58] sm:$0xf] %vm685, %v682
      %709 = vst.msk [vmem:[%s199 + $0x5c] sm:$0xf] %vm685, %v683
      %710 = vst.msk [vmem:[%s199 + $0x60] sm:$0xf] %vm685, %v684
      %s711 = smul.u32 25, %s15
      %p712 = scmp.lt.s32.totalorder %s711, 49
      %s713 = scalar_select %p712, %s711, 49
      %s714 = smul.addr %s713, 4
      %s715 = scalar_lea.vmem %s4, %s714
      // Predicated region
      $region37: #{cnn_forward.3} parent=35 // pred_check
        %p716 = pneg %p122
      $region38: #{cnn_forward.3} parent=35 // pred_check_branch
        %718 = sbr.rel (%p716) target = $region40
      $region39: #{cnn_forward.3} parent=35 // pred_region
        %s719 = smul.u32 25, %s15
      $region40: #{cnn_forward.3} parent=35 // pred_fallthru
        _
    $region36: #{cnn_forward.3} parent=5 // pred_fallthru
      _
    %p720 = scmp.le.s32.totalorder 2, %s10
    // Predicated region
    $region41: #{cnn_forward.3} parent=5 // pred_check
      %p721 = pneg %p720
    $region42: #{cnn_forward.3} parent=5 // pred_check_branch
      %723 = sbr.rel (%p721) target = $region44
    $region43: #{cnn_forward.3} parent=5 // pred_region
      %s724 = ssub.s32 %s10, 2
      // Predicated region
      $region45: #{cnn_forward.3} parent=43 // pred_check
        %p725 = pneg %p128
      $region46: #{cnn_forward.3} parent=43 // pred_check_branch
        %727 = sbr.rel (%p725) target = $region48
      $region47: #{cnn_forward.3} parent=43 // pred_region
        %s728 = smul.u32 25, %s16
        %p729 = scmp.lt.s32.totalorder %s728, 49
        %s730 = scalar_select %p729, %s728, 49
        %s731 = smul.addr %s730, 4
        %s732 = scalar_lea.vmem %s4, %s731
      $region48: #{cnn_forward.3} parent=43 // pred_fallthru
        _
    $region44: #{cnn_forward.3} parent=5 // pred_fallthru
      _
  $region6: #{cnn_forward.3} parent=0 // loop_footer
    %s14 = sadd.s32 1, %s10
  $region7: #{cnn_forward.3} parent=0 // loop_footer_branch
    %9 = sbr.rel target = $region3
  $region8: #{cnn_forward.3} parent=0 // loop_exit
    _

// kernel: cnn_forward.4
$region0: #{cnn_forward.4}
  #allocation0 [shape = 'u32[]', space=smem, size = 0x4, offset = 0x4, fixed_abs, tag = 'smem constant byte address 0x4 - core index']
  #allocation1 [shape = 'u32[72,128]{1,0:T(1,128)}', space=vmem, size = 0x9000, scoped, tag = 'internal scratch']
  %s0 = inlined_call_operand.vmem [shape: bf16[112,1152], index: 0, kind: input, shape index: {}]
  %s1 = inlined_call_operand.vmem [shape: bf16[1152,256], index: 1, kind: input, shape index: {}]
  %s2 = inlined_call_operand.vmem [shape: f32[1,256], index: 2, kind: input, shape index: {}]
  %s3 = inlined_call_operand.vmem [shape: f32[1,256], index: 3, kind: input, shape index: {}]
  %s4 = inlined_call_operand.vmem [shape: bf16[112,64], index: 4, kind: output, shape index: {}]
  %s5 = sld [smem:[#allocation0]]
  $region49: #{cnn_forward.4} parent=0
    _
  %s7 = ssub.s32 1, %s5
  %s8 = scalar_select 0, %s7, %s5
  loop: start=0, step=1, limit=4
  $region2: #{cnn_forward.4} parent=0 // loop_pre_header
    _
  $region3: #{cnn_forward.4} parent=0 // loop_header
    %s10 = sphi 0, %s14
    %p11 = scmp.ge.s32.totalorder %s10, 4
    %s20 = sphi 0, %s22
    %s23 = sphi 0, %s20
    %s24 = sphi 0, %s23
    %s40 = sphi 0, %s24
    %s44 = sphi 0, %s44
    %s46 = sphi 0, %s44
    %s47 = sphi 0, %s46
    %s61 = sphi 0, %s47
    %s65 = sphi 0, %s65
    %s67 = sphi 0, %s65
    %s68 = sphi 0, %s67
    %s82 = sphi 0, %s68
    %s86 = sphi 0, %s86
    %s88 = sphi 0, %s86
    %s89 = sphi 0, %s88
    %s103 = sphi 0, %s89
    %s109 = sphi 0, %s111
    %s112 = sphi 0, %s109
    %s113 = sphi 0, %s112
    %s129 = sphi 0, %s113
  $region4: #{cnn_forward.4} parent=0 // loop_header_branch
    %13 = sbr.rel (%p11) target = $region8
  $region5: #{cnn_forward.4} parent=0 // loop_body
    %s15 = ssub.s32 %s10, 1
    %s16 = ssub.s32 %s10, 2
    %s17 = sadd.s32 %s10, 1
    %s18 = ssub.s32 %s10, %s17
    %p19 = scmp.eq.s32.totalorder %s18, 0
    %s21 = sadd.s32 %s20, 1
    %s22 = scalar_select %p19, %s20, %s21
    %p25 = pneg %p19
    %p26 = scmp.eq.s32.totalorder %s10, 1
    %p27 = por %p25, %p26
    %p28 = scmp.ne.s32.totalorder %s20, %s23
    %p29 = scmp.eq.s32.totalorder %s10, 0
    %p30 = por %p28, %p29
    %p31 = scmp.ne.s32.totalorder %s20, %s23
    %p32 = scmp.eq.s32.totalorder %s15, 1
    %p33 = por %p31, %p32
    %p34 = scmp.ne.s32.totalorder %s23, %s24
    %p35 = scmp.eq.s32.totalorder %s15, 0
    %p36 = por %p34, %p35
    %p37 = scmp.ne.s32.totalorder %s23, %s24
    %p38 = scmp.eq.s32.totalorder %s16, 1
    %p39 = por %p37, %p38
    %p41 = scmp.ne.s32.totalorder %s24, %s40
    %p42 = scmp.eq.s32.totalorder %s16, 0
    %p43 = por %p41, %p42
    %s45 = sadd.s32 %s44, 1
    %p48 = scmp.eq.s32.totalorder %s10, 1
    %p49 = scmp.ne.s32.totalorder %s44, %s46
    %p50 = scmp.eq.s32.totalorder %s10, 0
    %p51 = por %p49, %p50
    %p52 = scmp.ne.s32.totalorder %s44, %s46
    %p53 = scmp.eq.s32.totalorder %s15, 1
    %p54 = por %p52, %p53
    %p55 = scmp.ne.s32.totalorder %s46, %s47
    %p56 = scmp.eq.s32.totalorder %s15, 0
    %p57 = por %p55, %p56
    %p58 = scmp.ne.s32.totalorder %s46, %s47
    %p59 = scmp.eq.s32.totalorder %s16, 1
    %p60 = por %p58, %p59
    %p62 = scmp.ne.s32.totalorder %s47, %s61
    %p63 = scmp.eq.s32.totalorder %s16, 0
    %p64 = por %p62, %p63
    %s66 = sadd.s32 %s65, 1
    %p69 = scmp.eq.s32.totalorder %s10, 1
    %p70 = scmp.ne.s32.totalorder %s65, %s67
    %p71 = scmp.eq.s32.totalorder %s10, 0
    %p72 = por %p70, %p71
    %p73 = scmp.ne.s32.totalorder %s65, %s67
    %p74 = scmp.eq.s32.totalorder %s15, 1
    %p75 = por %p73, %p74
    %p76 = scmp.ne.s32.totalorder %s67, %s68
    %p77 = scmp.eq.s32.totalorder %s15, 0
    %p78 = por %p76, %p77
    %p79 = scmp.ne.s32.totalorder %s67, %s68
    %p80 = scmp.eq.s32.totalorder %s16, 1
    %p81 = por %p79, %p80
    %p83 = scmp.ne.s32.totalorder %s68, %s82
    %p84 = scmp.eq.s32.totalorder %s16, 0
    %p85 = por %p83, %p84
    %s87 = sadd.s32 %s86, 1
    %p90 = scmp.eq.s32.totalorder %s10, 1
    %p91 = scmp.ne.s32.totalorder %s86, %s88
    %p92 = scmp.eq.s32.totalorder %s10, 0
    %p93 = por %p91, %p92
    %p94 = scmp.ne.s32.totalorder %s86, %s88
    %p95 = scmp.eq.s32.totalorder %s15, 1
    %p96 = por %p94, %p95
    %p97 = scmp.ne.s32.totalorder %s88, %s89
    %p98 = scmp.eq.s32.totalorder %s15, 0
    %p99 = por %p97, %p98
    %p100 = scmp.ne.s32.totalorder %s88, %s89
    %p101 = scmp.eq.s32.totalorder %s16, 1
    %p102 = por %p100, %p101
    %p104 = scmp.ne.s32.totalorder %s89, %s103
    %p105 = scmp.eq.s32.totalorder %s16, 0
    %p106 = por %p104, %p105
    %s107 = ssub.s32 %s10, %s17
    %p108 = scmp.eq.s32.totalorder %s107, 0
    %s110 = sadd.s32 %s109, 1
    %s111 = scalar_select %p108, %s109, %s110
    %p114 = pneg %p108
    %p115 = scmp.eq.s32.totalorder %s10, 1
    %p116 = por %p114, %p115
    %p117 = scmp.ne.s32.totalorder %s109, %s112
    %p118 = scmp.eq.s32.totalorder %s10, 0
    %p119 = por %p117, %p118
    %p120 = scmp.ne.s32.totalorder %s109, %s112
    %p121 = scmp.eq.s32.totalorder %s15, 1
    %p122 = por %p120, %p121
    %p123 = scmp.ne.s32.totalorder %s112, %s113
    %p124 = scmp.eq.s32.totalorder %s15, 0
    %p125 = por %p123, %p124
    %p126 = scmp.ne.s32.totalorder %s112, %s113
    %p127 = scmp.eq.s32.totalorder %s16, 1
    %p128 = por %p126, %p127
    %p130 = scmp.ne.s32.totalorder %s113, %s129
    %p131 = scmp.eq.s32.totalorder %s16, 0
    %p132 = por %p130, %p131
    %p133 = scmp.le.s32.totalorder 1, %s10
    %p134 = scmp.lt.s32.totalorder %s10, 3
    %p135 = pnand %p133, %p134
    %p136 = pneg %p135
    // Predicated region
    $region9: #{cnn_forward.4} parent=5 // pred_check
      _
    $region10: #{cnn_forward.4} parent=5 // pred_check_branch
      %138 = sbr.rel (%p135) target = $region12
    $region11: #{cnn_forward.4} parent=5 // pred_region
      %s139 = ssub.s32 %s10, 1
      // Predicated region
      $region13: #{cnn_forward.4} parent=11 // pred_check
        %p140 = pneg %p57
      $region14: #{cnn_forward.4} parent=11 // pred_check_branch
        %142 = sbr.rel (%p140) target = $region16
      $region15: #{cnn_forward.4} parent=11 // pred_region
        _
      $region16: #{cnn_forward.4} parent=11 // pred_fallthru
        _
      // Predicated region
      $region17: #{cnn_forward.4} parent=11 // pred_check
        %p143 = pneg %p78
      $region18: #{cnn_forward.4} parent=11 // pred_check_branch
        %145 = sbr.rel (%p143) target = $region20
      $region19: #{cnn_forward.4} parent=11 // pred_region
        _
      $region20: #{cnn_forward.4} parent=11 // pred_fallthru
        _
      // Predicated region
      $region21: #{cnn_forward.4} parent=11 // pred_check
        %p146 = pneg %p99
      $region22: #{cnn_forward.4} parent=11 // pred_check_branch
        %148 = sbr.rel (%p146) target = $region24
      $region23: #{cnn_forward.4} parent=11 // pred_region
        _
      $region24: #{cnn_forward.4} parent=11 // pred_fallthru
        _
    $region12: #{cnn_forward.4} parent=5 // pred_fallthru
      _
    %p149 = scmp.lt.s32.totalorder %s10, 2
    // Predicated region
    $region25: #{cnn_forward.4} parent=5 // pred_check
      %p150 = pneg %p149
    $region26: #{cnn_forward.4} parent=5 // pred_check_branch
      %152 = sbr.rel (%p150) target = $region28
    $region27: #{cnn_forward.4} parent=5 // pred_region
      // Predicated region
      $region29: #{cnn_forward.4} parent=27 // pred_check
        %p153 = pneg %p30
      $region30: #{cnn_forward.4} parent=27 // pred_check_branch
        %155 = sbr.rel (%p153) target = $region32
      $region31: #{cnn_forward.4} parent=27 // pred_region
        %s156 = smul.u32 7, %s10
        %p157 = scmp.lt.s32.totalorder %s156, 13
        %s158 = scalar_select %p157, %s156, 13
        %s159 = smul.addr %s158, 9
        %s160 = smul.addr %s159, 4
        %s161 = scalar_lea.vmem %s0, %s160
        %s162 = smul.u32 7, %s10
      $region32: #{cnn_forward.4} parent=27 // pred_fallthru
        _
    $region28: #{cnn_forward.4} parent=5 // pred_fallthru
      _
    %p163 = scmp.le.s32.totalorder 1, %s10
    %p164 = scmp.lt.s32.totalorder %s10, 3
    %p165 = pnand %p163, %p164
    %p166 = pneg %p165
    // Predicated region
    $region33: #{cnn_forward.4} parent=5 // pred_check
      _
    $region34: #{cnn_forward.4} parent=5 // pred_check_branch
      %168 = sbr.rel (%p165) target = $region36
    $region35: #{cnn_forward.4} parent=5 // pred_region
      %s169 = ssub.s32 %s10, 1
      %s170 = smul.u32 7, %s15
      %p171 = scmp.lt.s32.totalorder %s170, 13
      %s172 = scalar_select %p171, %s170, 13
      %s173 = smul.addr %s172, 9
      %s174 = smul.addr %s173, 4
      %s175 = scalar_lea.vmem %s0, %s174
      %p176 = pneg %p36
      %p177 = pneg %p33
      %p178 = pneg %p57
      %p179 = pneg %p54
      %p180 = pneg %p78
      %p181 = pneg %p75
      %p182 = pneg %p99
      %p183 = pneg %p96
      %p184 = pneg %p125
      %p185 = pneg %p122
      %s186 = smul.u32 7, %s15
      %p187 = scmp.lt.s32.totalorder %s186, 13
      %s188 = scalar_select %p187, %s186, 13
      %s189 = smul.addr %s188, 4
      %s190 = scalar_lea.vmem %s4, %s189
      %s191 = smul.u32 7, %s15
      %p192 = scmp.lt.s32.totalorder %s191, 13
      %s193 = scalar_select %p192, %s191, 13
      %s194 = smul.addr %s193, 9
      %s195 = smul.addr %s194, 4
      %s196 = scalar_lea.vmem %s0, %s195
      %s197 = smul.u32 7, %s15
      %s198 = smul.u32 7, %s15
      %p199 = scmp.lt.s32.totalorder %s198, 13
      %s200 = scalar_select %p199, %s198, 13
      %s201 = smul.addr %s200, 4
      %s202 = scalar_lea.vmem %s4, %s201
      %s203 = smul.u32 7, %s15
      %v204 = vld [vmem:[%s196] sm:$0xff]
      %v205 = vld [vmem:[%s196 + $0x8] sm:$0xff]
      %v206 = vld [vmem:[%s196 + $0x10] sm:$0xff]
      %v207 = vld [vmem:[%s196 + $0x18] sm:$0xff]
      %v208 = vld [vmem:[%s196 + $0x20] sm:$0xf]
      %v209 = vld [vmem:[%s196 + $0x24] sm:$0xff]
      %v210 = vld [vmem:[%s196 + $0x2c] sm:$0xff]
      %v211 = vld [vmem:[%s196 + $0x34] sm:$0xff]
      %v212 = vld [vmem:[%s196 + $0x3c] sm:$0xff]
      %v213 = vld [vmem:[%s196 + $0x44] sm:$0xf]
      %v214 = vld [vmem:[%s196 + $0x48] sm:$0xff]
      %v215 = vld [vmem:[%s196 + $0x50] sm:$0xff]
      %v216 = vld [vmem:[%s196 + $0x58] sm:$0xff]
      %v217 = vld [vmem:[%s196 + $0x60] sm:$0xff]
      %v218 = vld [vmem:[%s196 + $0x68] sm:$0xf]
      %v219 = vld [vmem:[%s196 + $0x6c] sm:$0xff]
      %v220 = vld [vmem:[%s196 + $0x74] sm:$0xff]
      %v221 = vld [vmem:[%s196 + $0x7c] sm:$0xff]
      %v222 = vld [vmem:[%s196 + $0x84] sm:$0xff]
      %v223 = vld [vmem:[%s196 + $0x8c] sm:$0xf]
      %v224 = vld [vmem:[%s196 + $0x90] sm:$0xff]
      %v225 = vld [vmem:[%s196 + $0x98] sm:$0xff]
      %v226 = vld [vmem:[%s196 + $0xa0] sm:$0xff]
      %v227 = vld [vmem:[%s196 + $0xa8] sm:$0xff]
      %v228 = vld [vmem:[%s196 + $0xb0] sm:$0xf]
      %v229 = vld [vmem:[%s196 + $0xb4] sm:$0xff]
      %v230 = vld [vmem:[%s196 + $0xbc] sm:$0xff]
      %v231 = vld [vmem:[%s196 + $0xc4] sm:$0xff]
      %v232 = vld [vmem:[%s196 + $0xcc] sm:$0xff]
      %v233 = vld [vmem:[%s196 + $0xd4] sm:$0xf]
      %v234 = vld [vmem:[%s196 + $0xd8] sm:$0xff]
      %v235 = vld [vmem:[%s196 + $0xe0] sm:$0xff]
      %v236 = vld [vmem:[%s196 + $0xe8] sm:$0xff]
      %v237 = vld [vmem:[%s196 + $0xf0] sm:$0xff]
      %v238 = vld [vmem:[%s196 + $0xf8] sm:$0xf]
      %v239 = vld [vmem:[%s1] sm:$0xff]
      %v240 = vld [vmem:[%s1 + $0x8] sm:$0xff]
      %v241 = vld [vmem:[%s1 + $0x10] sm:$0xff]
      %v242 = vld [vmem:[%s1 + $0x18] sm:$0xff]
      %v243 = vld [vmem:[%s1 + $0x20] sm:$0xff]
      %v244 = vld [vmem:[%s1 + $0x28] sm:$0xff]
      %v245 = vld [vmem:[%s1 + $0x30] sm:$0xff]
      %v246 = vld [vmem:[%s1 + $0x38] sm:$0xff]
      %v247 = vld [vmem:[%s1 + $0x40] sm:$0xff]
      %v248 = vld [vmem:[%s1 + $0x48] sm:$0xff]
      %v249 = vld [vmem:[%s1 + $0x50] sm:$0xff]
      %v250 = vld [vmem:[%s1 + $0x58] sm:$0xff]
      %v251 = vld [vmem:[%s1 + $0x60] sm:$0xff]
      %v252 = vld [vmem:[%s1 + $0x68] sm:$0xff]
      %v253 = vld [vmem:[%s1 + $0x70] sm:$0xff]
      %v254 = vld [vmem:[%s1 + $0x78] sm:$0xff]
      %v255 = vld [vmem:[%s1 + $0x80] sm:$0xff]
      %v256 = vld [vmem:[%s1 + $0x88] sm:$0xff]
      %v257 = vld [vmem:[%s1 + $0x90] sm:$0xff]
      %v258 = vld [vmem:[%s1 + $0x98] sm:$0xff]
      %v259 = vld [vmem:[%s1 + $0xa0] sm:$0xff]
      %v260 = vld [vmem:[%s1 + $0xa8] sm:$0xff]
      %v261 = vld [vmem:[%s1 + $0xb0] sm:$0xff]
      %v262 = vld [vmem:[%s1 + $0xb8] sm:$0xff]
      %v263 = vld [vmem:[%s1 + $0xc0] sm:$0xff]
      %v264 = vld [vmem:[%s1 + $0xc8] sm:$0xff]
      %v265 = vld [vmem:[%s1 + $0xd0] sm:$0xff]
      %v266 = vld [vmem:[%s1 + $0xd8] sm:$0xff]
      %v267 = vld [vmem:[%s1 + $0xe0] sm:$0xff]
      %v268 = vld [vmem:[%s1 + $0xe8] sm:$0xff]
      %v269 = vld [vmem:[%s1 + $0xf0] sm:$0xff]
      %v270 = vld [vmem:[%s1 + $0xf8] sm:$0xff]
      %v271 = vld [vmem:[%s1 + $0x100] sm:$0xff]
      %v272 = vld [vmem:[%s1 + $0x108] sm:$0xff]
      %v273 = vld [vmem:[%s1 + $0x110] sm:$0xff]
      %v274 = vld [vmem:[%s1 + $0x118] sm:$0xff]
      %v275 = vld [vmem:[%s1 + $0x120] sm:$0xff]
      %v276 = vld [vmem:[%s1 + $0x128] sm:$0xff]
      %v277 = vld [vmem:[%s1 + $0x130] sm:$0xff]
      %v278 = vld [vmem:[%s1 + $0x138] sm:$0xff]
      %v279 = vld [vmem:[%s1 + $0x140] sm:$0xff]
      %v280 = vld [vmem:[%s1 + $0x148] sm:$0xff]
      %v281 = vld [vmem:[%s1 + $0x150] sm:$0xff]
      %v282 = vld [vmem:[%s1 + $0x158] sm:$0xff]
      %v283 = vld [vmem:[%s1 + $0x160] sm:$0xff]
      %v284 = vld [vmem:[%s1 + $0x168] sm:$0xff]
      %v285 = vld [vmem:[%s1 + $0x170] sm:$0xff]
      %v286 = vld [vmem:[%s1 + $0x178] sm:$0xff]
      %v287 = vld [vmem:[%s1 + $0x180] sm:$0xff]
      %v288 = vld [vmem:[%s1 + $0x188] sm:$0xff]
      %v289 = vld [vmem:[%s1 + $0x190] sm:$0xff]
      %v290 = vld [vmem:[%s1 + $0x198] sm:$0xff]
      %v291 = vld [vmem:[%s1 + $0x1a0] sm:$0xff]
      %v292 = vld [vmem:[%s1 + $0x1a8] sm:$0xff]
      %v293 = vld [vmem:[%s1 + $0x1b0] sm:$0xff]
      %v294 = vld [vmem:[%s1 + $0x1b8] sm:$0xff]
      %v295 = vld [vmem:[%s1 + $0x1c0] sm:$0xff]
      %v296 = vld [vmem:[%s1 + $0x1c8] sm:$0xff]
      %v297 = vld [vmem:[%s1 + $0x1d0] sm:$0xff]
      %v298 = vld [vmem:[%s1 + $0x1d8] sm:$0xff]
      %v299 = vld [vmem:[%s1 + $0x1e0] sm:$0xff]
      %v300 = vld [vmem:[%s1 + $0x1e8] sm:$0xff]
      %v301 = vld [vmem:[%s1 + $0x1f0] sm:$0xff]
      %v302 = vld [vmem:[%s1 + $0x1f8] sm:$0xff]
      %v303 = vld [vmem:[%s1 + $0x200] sm:$0xff]
      %v304 = vld [vmem:[%s1 + $0x208] sm:$0xff]
      %v305 = vld [vmem:[%s1 + $0x210] sm:$0xff]
      %v306 = vld [vmem:[%s1 + $0x218] sm:$0xff]
      %v307 = vld [vmem:[%s1 + $0x220] sm:$0xff]
      %v308 = vld [vmem:[%s1 + $0x228] sm:$0xff]
      %v309 = vld [vmem:[%s1 + $0x230] sm:$0xff]
      %v310 = vld [vmem:[%s1 + $0x238] sm:$0xff]
      %v311 = vld [vmem:[%s1 + $0x240] sm:$0xff]
      %v312 = vld [vmem:[%s1 + $0x248] sm:$0xff]
      %v313 = vld [vmem:[%s1 + $0x250] sm:$0xff]
      %v314 = vld [vmem:[%s1 + $0x258] sm:$0xff]
      %v315 = vld [vmem:[%s1 + $0x260] sm:$0xff]
      %v316 = vld [vmem:[%s1 + $0x268] sm:$0xff]
      %v317 = vld [vmem:[%s1 + $0x270] sm:$0xff]
      %v318 = vld [vmem:[%s1 + $0x278] sm:$0xff]
      %v319 = vld [vmem:[%s1 + $0x280] sm:$0xff]
      %v320 = vld [vmem:[%s1 + $0x288] sm:$0xff]
      %v321 = vld [vmem:[%s1 + $0x290] sm:$0xff]
      %v322 = vld [vmem:[%s1 + $0x298] sm:$0xff]
      %v323 = vld [vmem:[%s1 + $0x2a0] sm:$0xff]
      %v324 = vld [vmem:[%s1 + $0x2a8] sm:$0xff]
      %v325 = vld [vmem:[%s1 + $0x2b0] sm:$0xff]
      %v326 = vld [vmem:[%s1 + $0x2b8] sm:$0xff]
      %v327 = vld [vmem:[%s1 + $0x2c0] sm:$0xff]
      %v328 = vld [vmem:[%s1 + $0x2c8] sm:$0xff]
      %v329 = vld [vmem:[%s1 + $0x2d0] sm:$0xff]
      %v330 = vld [vmem:[%s1 + $0x2d8] sm:$0xff]
      %v331 = vld [vmem:[%s1 + $0x2e0] sm:$0xff]
      %v332 = vld [vmem:[%s1 + $0x2e8] sm:$0xff]
      %v333 = vld [vmem:[%s1 + $0x2f0] sm:$0xff]
      %v334 = vld [vmem:[%s1 + $0x2f8] sm:$0xff]
      %v335 = vld [vmem:[%s1 + $0x300] sm:$0xff]
      %v336 = vld [vmem:[%s1 + $0x308] sm:$0xff]
      %v337 = vld [vmem:[%s1 + $0x310] sm:$0xff]
      %v338 = vld [vmem:[%s1 + $0x318] sm:$0xff]
      %v339 = vld [vmem:[%s1 + $0x320] sm:$0xff]
      %v340 = vld [vmem:[%s1 + $0x328] sm:$0xff]
      %v341 = vld [vmem:[%s1 + $0x330] sm:$0xff]
      %v342 = vld [vmem:[%s1 + $0x338] sm:$0xff]
      %v343 = vld [vmem:[%s1 + $0x340] sm:$0xff]
      %v344 = vld [vmem:[%s1 + $0x348] sm:$0xff]
      %v345 = vld [vmem:[%s1 + $0x350] sm:$0xff]
      %v346 = vld [vmem:[%s1 + $0x358] sm:$0xff]
      %v347 = vld [vmem:[%s1 + $0x360] sm:$0xff]
      %v348 = vld [vmem:[%s1 + $0x368] sm:$0xff]
      %v349 = vld [vmem:[%s1 + $0x370] sm:$0xff]
      %v350 = vld [vmem:[%s1 + $0x378] sm:$0xff]
      %v351 = vld [vmem:[%s1 + $0x380] sm:$0xff]
      %v352 = vld [vmem:[%s1 + $0x388] sm:$0xff]
      %v353 = vld [vmem:[%s1 + $0x390] sm:$0xff]
      %v354 = vld [vmem:[%s1 + $0x398] sm:$0xff]
      %v355 = vld [vmem:[%s1 + $0x3a0] sm:$0xff]
      %v356 = vld [vmem:[%s1 + $0x3a8] sm:$0xff]
      %v357 = vld [vmem:[%s1 + $0x3b0] sm:$0xff]
      %v358 = vld [vmem:[%s1 + $0x3b8] sm:$0xff]
      %v359 = vld [vmem:[%s1 + $0x3c0] sm:$0xff]
      %v360 = vld [vmem:[%s1 + $0x3c8] sm:$0xff]
      %v361 = vld [vmem:[%s1 + $0x3d0] sm:$0xff]
      %v362 = vld [vmem:[%s1 + $0x3d8] sm:$0xff]
      %v363 = vld [vmem:[%s1 + $0x3e0] sm:$0xff]
      %v364 = vld [vmem:[%s1 + $0x3e8] sm:$0xff]
      %v365 = vld [vmem:[%s1 + $0x3f0] sm:$0xff]
      %v366 = vld [vmem:[%s1 + $0x3f8] sm:$0xff]
      %v367 = vld [vmem:[%s1 + $0x400] sm:$0xff]
      %v368 = vld [vmem:[%s1 + $0x408] sm:$0xff]
      %v369 = vld [vmem:[%s1 + $0x410] sm:$0xff]
      %v370 = vld [vmem:[%s1 + $0x418] sm:$0xff]
      %v371 = vld [vmem:[%s1 + $0x420] sm:$0xff]
      %v372 = vld [vmem:[%s1 + $0x428] sm:$0xff]
      %v373 = vld [vmem:[%s1 + $0x430] sm:$0xff]
      %v374 = vld [vmem:[%s1 + $0x438] sm:$0xff]
      %v375 = vld [vmem:[%s1 + $0x440] sm:$0xff]
      %v376 = vld [vmem:[%s1 + $0x448] sm:$0xff]
      %v377 = vld [vmem:[%s1 + $0x450] sm:$0xff]
      %v378 = vld [vmem:[%s1 + $0x458] sm:$0xff]
      %v379 = vld [vmem:[%s1 + $0x460] sm:$0xff]
      %v380 = vld [vmem:[%s1 + $0x468] sm:$0xff]
      %v381 = vld [vmem:[%s1 + $0x470] sm:$0xff]
      %v382 = vld [vmem:[%s1 + $0x478] sm:$0xff]
      %v418 = vunpack.c.l.b16 %v204
      %v419 = vunpack.c.h.b16 %v204
      %v420 = vunpack.c.l.b16 %v205
      %v421 = vunpack.c.h.b16 %v205
      %v422 = vunpack.c.l.b16 %v206
      %v423 = vunpack.c.h.b16 %v206
      %v424 = vunpack.c.l.b16 %v207
      %v425 = vunpack.c.h.b16 %v207
      %v426 = vunpack.c.l.b16 %v208
      %v427 = vunpack.c.l.b16 %v209
      %v428 = vunpack.c.h.b16 %v209
      %v429 = vunpack.c.l.b16 %v210
      %v430 = vunpack.c.h.b16 %v210
      %v431 = vunpack.c.l.b16 %v211
      %v432 = vunpack.c.h.b16 %v211
      %v433 = vunpack.c.l.b16 %v212
      %v434 = vunpack.c.h.b16 %v212
      %v435 = vunpack.c.l.b16 %v213
      %v436 = vunpack.c.l.b16 %v214
      %v437 = vunpack.c.h.b16 %v214
      %v438 = vunpack.c.l.b16 %v215
      %v439 = vunpack.c.h.b16 %v215
      %v440 = vunpack.c.l.b16 %v216
      %v441 = vunpack.c.h.b16 %v216
      %v442 = vunpack.c.l.b16 %v217
      %v443 = vunpack.c.h.b16 %v217
      %v444 = vunpack.c.l.b16 %v218
      %v445 = vunpack.c.l.b16 %v219
      %v446 = vunpack.c.h.b16 %v219
      %v447 = vunpack.c.l.b16 %v220
      %v448 = vunpack.c.h.b16 %v220
      %v449 = vunpack.c.l.b16 %v221
      %v450 = vunpack.c.h.b16 %v221
      %v451 = vunpack.c.l.b16 %v222
      %v452 = vunpack.c.h.b16 %v222
      %v453 = vunpack.c.l.b16 %v223
      %v454 = vunpack.c.l.b16 %v224
      %v455 = vunpack.c.h.b16 %v224
      %v456 = vunpack.c.l.b16 %v225
      %v457 = vunpack.c.h.b16 %v225
      %v458 = vunpack.c.l.b16 %v226
      %v459 = vunpack.c.h.b16 %v226
      %v460 = vunpack.c.l.b16 %v227
      %v461 = vunpack.c.h.b16 %v227
      %v462 = vunpack.c.l.b16 %v228
      %v463 = vunpack.c.l.b16 %v229
      %v464 = vunpack.c.h.b16 %v229
      %v465 = vunpack.c.l.b16 %v230
      %v466 = vunpack.c.h.b16 %v230
      %v467 = vunpack.c.l.b16 %v231
      %v468 = vunpack.c.h.b16 %v231
      %v469 = vunpack.c.l.b16 %v232
      %v470 = vunpack.c.h.b16 %v232
      %v471 = vunpack.c.l.b16 %v233
      %v472 = vunpack.c.l.b16 %v234
      %v473 = vunpack.c.h.b16 %v234
      %v474 = vunpack.c.l.b16 %v235
      %v475 = vunpack.c.h.b16 %v235
      %v476 = vunpack.c.l.b16 %v236
      %v477 = vunpack.c.h.b16 %v236
      %v478 = vunpack.c.l.b16 %v237
      %v479 = vunpack.c.h.b16 %v237
      %v480 = vunpack.c.l.b16 %v238
      %v481 = vpack.c.b16 %v427, %v418
      %v482 = vpack.c.b16 %v428, %v419
      %v483 = vpack.c.b16 %v429, %v420
      %v484 = vpack.c.b16 %v430, %v421
      %v485 = vpack.c.b16 %v431, %v422
      %v486 = vpack.c.b16 %v432, %v423
      %v487 = vpack.c.b16 %v433, %v424
      %v488 = vpack.c.b16 %v434, %v425
      %v489 = vpack.c.b16 %v435, %v426
      %v490 = vpack.c.b16 %v445, %v436
      %v491 = vpack.c.b16 %v446, %v437
      %v492 = vpack.c.b16 %v447, %v438
      %v493 = vpack.c.b16 %v448, %v439
      %v494 = vpack.c.b16 %v449, %v440
      %v495 = vpack.c.b16 %v450, %v441
      %v496 = vpack.c.b16 %v451, %v442
      %v497 = vpack.c.b16 %v452, %v443
      %v498 = vpack.c.b16 %v453, %v444
      %v499 = vpack.c.b16 %v463, %v454
      %v500 = vpack.c.b16 %v464, %v455
      %v501 = vpack.c.b16 %v465, %v456
      %v502 = vpack.c.b16 %v466, %v457
      %v503 = vpack.c.b16 %v467, %v458
      %v504 = vpack.c.b16 %v468, %v459
      %v505 = vpack.c.b16 %v469, %v460
      %v506 = vpack.c.b16 %v470, %v461
      %v507 = vpack.c.b16 %v471, %v462
      %v508 = vpack.c.b16 %v472, %v472
      %v509 = vpack.c.b16 %v473, %v473
      %v510 = vpack.c.b16 %v474, %v474
      %v511 = vpack.c.b16 %v475, %v475
      %v512 = vpack.c.b16 %v476, %v476
      %v513 = vpack.c.b16 %v477, %v477
      %v514 = vpack.c.b16 %v478, %v478
      %v515 = vpack.c.b16 %v479, %v479
      %v516 = vpack.c.b16 %v480, %v480
      %v697 = vunpack.c.l.b16 %v239
      %v698 = vunpack.c.h.b16 %v239
      %v699 = vunpack.c.l.b16 %v240
      %v700 = vunpack.c.h.b16 %v240
      %v701 = vunpack.c.l.b16 %v241
      %v702 = vunpack.c.h.b16 %v241
      %v703 = vunpack.c.l.b16 %v242
      %v704 = vunpack.c.h.b16 %v242
      %v705 = vunpack.c.l.b16 %v243
      %v706 = vunpack.c.h.b16 %v243
      %v707 = vunpack.c.l.b16 %v244
      %v708 = vunpack.c.h.b16 %v244
      %v709 = vunpack.c.l.b16 %v245
      %v710 = vunpack.c.h.b16 %v245
      %v711 = vunpack.c.l.b16 %v246
      %v712 = vunpack.c.h.b16 %v246
      %v713 = vunpack.c.l.b16 %v247
      %v714 = vunpack.c.h.b16 %v247
      %v715 = vunpack.c.l.b16 %v248
      %v716 = vunpack.c.h.b16 %v248
      %v717 = vunpack.c.l.b16 %v249
      %v718 = vunpack.c.h.b16 %v249
      %v719 = vunpack.c.l.b16 %v250
      %v720 = vunpack.c.h.b16 %v250
      %v721 = vunpack.c.l.b16 %v251
      %v722 = vunpack.c.h.b16 %v251
      %v723 = vunpack.c.l.b16 %v252
      %v724 = vunpack.c.h.b16 %v252
      %v725 = vunpack.c.l.b16 %v253
      %v726 = vunpack.c.h.b16 %v253
      %v727 = vunpack.c.l.b16 %v254
      %v728 = vunpack.c.h.b16 %v254
      %v729 = vunpack.c.l.b16 %v255
      %v730 = vunpack.c.h.b16 %v255
      %v731 = vunpack.c.l.b16 %v256
      %v732 = vunpack.c.h.b16 %v256
      %v733 = vunpack.c.l.b16 %v257
      %v734 = vunpack.c.h.b16 %v257
      %v735 = vunpack.c.l.b16 %v258
      %v736 = vunpack.c.h.b16 %v258
      %v737 = vunpack.c.l.b16 %v259
      %v738 = vunpack.c.h.b16 %v259
      %v739 = vunpack.c.l.b16 %v260
      %v740 = vunpack.c.h.b16 %v260
      %v741 = vunpack.c.l.b16 %v261
      %v742 = vunpack.c.h.b16 %v261
      %v743 = vunpack.c.l.b16 %v262
      %v744 = vunpack.c.h.b16 %v262
      %v745 = vunpack.c.l.b16 %v263
      %v746 = vunpack.c.h.b16 %v263
      %v747 = vunpack.c.l.b16 %v264
      %v748 = vunpack.c.h.b16 %v264
      %v749 = vunpack.c.l.b16 %v265
      %v750 = vunpack.c.h.b16 %v265
      %v751 = vunpack.c.l.b16 %v266
      %v752 = vunpack.c.h.b16 %v266
      %v753 = vunpack.c.l.b16 %v267
      %v754 = vunpack.c.h.b16 %v267
      %v755 = vunpack.c.l.b16 %v268
      %v756 = vunpack.c.h.b16 %v268
      %v757 = vunpack.c.l.b16 %v269
      %v758 = vunpack.c.h.b16 %v269
      %v759 = vunpack.c.l.b16 %v270
      %v760 = vunpack.c.h.b16 %v270
      %v761 = vunpack.c.l.b16 %v271
      %v762 = vunpack.c.h.b16 %v271
      %v763 = vunpack.c.l.b16 %v272
      %v764 = vunpack.c.h.b16 %v272
      %v765 = vunpack.c.l.b16 %v273
      %v766 = vunpack.c.h.b16 %v273
      %v767 = vunpack.c.l.b16 %v274
      %v768 = vunpack.c.h.b16 %v274
      %v769 = vunpack.c.l.b16 %v275
      %v770 = vunpack.c.h.b16 %v275
      %v771 = vunpack.c.l.b16 %v276
      %v772 = vunpack.c.h.b16 %v276
      %v773 = vunpack.c.l.b16 %v277
      %v774 = vunpack.c.h.b16 %v277
      %v775 = vunpack.c.l.b16 %v278
      %v776 = vunpack.c.h.b16 %v278
      %v777 = vunpack.c.l.b16 %v279
      %v778 = vunpack.c.h.b16 %v279
      %v779 = vunpack.c.l.b16 %v280
      %v780 = vunpack.c.h.b16 %v280
      %v781 = vunpack.c.l.b16 %v281
      %v782 = vunpack.c.h.b16 %v281
      %v783 = vunpack.c.l.b16 %v282
      %v784 = vunpack.c.h.b16 %v282
      %v785 = vunpack.c.l.b16 %v283
      %v786 = vunpack.c.h.b16 %v283
      %v787 = vunpack.c.l.b16 %v284
      %v788 = vunpack.c.h.b16 %v284
      %v789 = vunpack.c.l.b16 %v285
      %v790 = vunpack.c.h.b16 %v285
      %v791 = vunpack.c.l.b16 %v286
      %v792 = vunpack.c.h.b16 %v286
      %v793 = vunpack.c.l.b16 %v287
      %v794 = vunpack.c.h.b16 %v287
      %v795 = vunpack.c.l.b16 %v288
      %v796 = vunpack.c.h.b16 %v288
      %v797 = vunpack.c.l.b16 %v289
      %v798 = vunpack.c.h.b16 %v289
      %v799 = vunpack.c.l.b16 %v290
      %v800 = vunpack.c.h.b16 %v290
      %v801 = vunpack.c.l.b16 %v291
      %v802 = vunpack.c.h.b16 %v291
      %v803 = vunpack.c.l.b16 %v292
      %v804 = vunpack.c.h.b16 %v292
      %v805 = vunpack.c.l.b16 %v293
      %v806 = vunpack.c.h.b16 %v293
      %v807 = vunpack.c.l.b16 %v294
      %v808 = vunpack.c.h.b16 %v294
      %v809 = vunpack.c.l.b16 %v295
      %v810 = vunpack.c.h.b16 %v295
      %v811 = vunpack.c.l.b16 %v296
      %v812 = vunpack.c.h.b16 %v296
      %v813 = vunpack.c.l.b16 %v297
      %v814 = vunpack.c.h.b16 %v297
      %v815 = vunpack.c.l.b16 %v298
      %v816 = vunpack.c.h.b16 %v298
      %v817 = vunpack.c.l.b16 %v299
      %v818 = vunpack.c.h.b16 %v299
      %v819 = vunpack.c.l.b16 %v300
      %v820 = vunpack.c.h.b16 %v300
      %v821 = vunpack.c.l.b16 %v301
      %v822 = vunpack.c.h.b16 %v301
      %v823 = vunpack.c.l.b16 %v302
      %v824 = vunpack.c.h.b16 %v302
      %v825 = vunpack.c.l.b16 %v303
      %v826 = vunpack.c.h.b16 %v303
      %v827 = vunpack.c.l.b16 %v304
      %v828 = vunpack.c.h.b16 %v304
      %v829 = vunpack.c.l.b16 %v305
      %v830 = vunpack.c.h.b16 %v305
      %v831 = vunpack.c.l.b16 %v306
      %v832 = vunpack.c.h.b16 %v306
      %v833 = vunpack.c.l.b16 %v307
      %v834 = vunpack.c.h.b16 %v307
      %v835 = vunpack.c.l.b16 %v308
      %v836 = vunpack.c.h.b16 %v308
      %v837 = vunpack.c.l.b16 %v309
      %v838 = vunpack.c.h.b16 %v309
      %v839 = vunpack.c.l.b16 %v310
      %v840 = vunpack.c.h.b16 %v310
      %v841 = vunpack.c.l.b16 %v311
      %v842 = vunpack.c.h.b16 %v311
      %v843 = vunpack.c.l.b16 %v312
      %v844 = vunpack.c.h.b16 %v312
      %v845 = vunpack.c.l.b16 %v313
      %v846 = vunpack.c.h.b16 %v313
      %v847 = vunpack.c.l.b16 %v314
      %v848 = vunpack.c.h.b16 %v314
      %v849 = vunpack.c.l.b16 %v315
      %v850 = vunpack.c.h.b16 %v315
      %v851 = vunpack.c.l.b16 %v316
      %v852 = vunpack.c.h.b16 %v316
      %v853 = vunpack.c.l.b16 %v317
      %v854 = vunpack.c.h.b16 %v317
      %v855 = vunpack.c.l.b16 %v318
      %v856 = vunpack.c.h.b16 %v318
      %v857 = vunpack.c.l.b16 %v319
      %v858 = vunpack.c.h.b16 %v319
      %v859 = vunpack.c.l.b16 %v320
      %v860 = vunpack.c.h.b16 %v320
      %v861 = vunpack.c.l.b16 %v321
      %v862 = vunpack.c.h.b16 %v321
      %v863 = vunpack.c.l.b16 %v322
      %v864 = vunpack.c.h.b16 %v322
      %v865 = vunpack.c.l.b16 %v323
      %v866 = vunpack.c.h.b16 %v323
      %v867 = vunpack.c.l.b16 %v324
      %v868 = vunpack.c.h.b16 %v324
      %v869 = vunpack.c.l.b16 %v325
      %v870 = vunpack.c.h.b16 %v325
      %v871 = vunpack.c.l.b16 %v326
      %v872 = vunpack.c.h.b16 %v326
      %v873 = vunpack.c.l.b16 %v327
      %v874 = vunpack.c.h.b16 %v327
      %v875 = vunpack.c.l.b16 %v328
      %v876 = vunpack.c.h.b16 %v328
      %v877 = vunpack.c.l.b16 %v329
      %v878 = vunpack.c.h.b16 %v329
      %v879 = vunpack.c.l.b16 %v330
      %v880 = vunpack.c.h.b16 %v330
      %v881 = vunpack.c.l.b16 %v331
      %v882 = vunpack.c.h.b16 %v331
      %v883 = vunpack.c.l.b16 %v332
      %v884 = vunpack.c.h.b16 %v332
      %v885 = vunpack.c.l.b16 %v333
      %v886 = vunpack.c.h.b16 %v333
      %v887 = vunpack.c.l.b16 %v334
      %v888 = vunpack.c.h.b16 %v334
      %v889 = vunpack.c.l.b16 %v335
      %v890 = vunpack.c.h.b16 %v335
      %v891 = vunpack.c.l.b16 %v336
      %v892 = vunpack.c.h.b16 %v336
      %v893 = vunpack.c.l.b16 %v337
      %v894 = vunpack.c.h.b16 %v337
      %v895 = vunpack.c.l.b16 %v338
      %v896 = vunpack.c.h.b16 %v338
      %v897 = vunpack.c.l.b16 %v339
      %v898 = vunpack.c.h.b16 %v339
      %v899 = vunpack.c.l.b16 %v340
      %v900 = vunpack.c.h.b16 %v340
      %v901 = vunpack.c.l.b16 %v341
      %v902 = vunpack.c.h.b16 %v341
      %v903 = vunpack.c.l.b16 %v342
      %v904 = vunpack.c.h.b16 %v342
      %v905 = vunpack.c.l.b16 %v343
      %v906 = vunpack.c.h.b16 %v343
      %v907 = vunpack.c.l.b16 %v344
      %v908 = vunpack.c.h.b16 %v344
      %v909 = vunpack.c.l.b16 %v345
      %v910 = vunpack.c.h.b16 %v345
      %v911 = vunpack.c.l.b16 %v346
      %v912 = vunpack.c.h.b16 %v346
      %v913 = vunpack.c.l.b16 %v347
      %v914 = vunpack.c.h.b16 %v347
      %v915 = vunpack.c.l.b16 %v348
      %v916 = vunpack.c.h.b16 %v348
      %v917 = vunpack.c.l.b16 %v349
      %v918 = vunpack.c.h.b16 %v349
      %v919 = vunpack.c.l.b16 %v350
      %v920 = vunpack.c.h.b16 %v350
      %v921 = vunpack.c.l.b16 %v351
      %v922 = vunpack.c.h.b16 %v351
      %v923 = vunpack.c.l.b16 %v352
      %v924 = vunpack.c.h.b16 %v352
      %v925 = vunpack.c.l.b16 %v353
      %v926 = vunpack.c.h.b16 %v353
      %v927 = vunpack.c.l.b16 %v354
      %v928 = vunpack.c.h.b16 %v354
      %v929 = vunpack.c.l.b16 %v355
      %v930 = vunpack.c.h.b16 %v355
      %v931 = vunpack.c.l.b16 %v356
      %v932 = vunpack.c.h.b16 %v356
      %v933 = vunpack.c.l.b16 %v357
      %v934 = vunpack.c.h.b16 %v357
      %v935 = vunpack.c.l.b16 %v358
      %v936 = vunpack.c.h.b16 %v358
      %v937 = vunpack.c.l.b16 %v359
      %v938 = vunpack.c.h.b16 %v359
      %v939 = vunpack.c.l.b16 %v360
      %v940 = vunpack.c.h.b16 %v360
      %v941 = vunpack.c.l.b16 %v361
      %v942 = vunpack.c.h.b16 %v361
      %v943 = vunpack.c.l.b16 %v362
      %v944 = vunpack.c.h.b16 %v362
      %v945 = vunpack.c.l.b16 %v363
      %v946 = vunpack.c.h.b16 %v363
      %v947 = vunpack.c.l.b16 %v364
      %v948 = vunpack.c.h.b16 %v364
      %v949 = vunpack.c.l.b16 %v365
      %v950 = vunpack.c.h.b16 %v365
      %v951 = vunpack.c.l.b16 %v366
      %v952 = vunpack.c.h.b16 %v366
      %v953 = vunpack.c.l.b16 %v367
      %v954 = vunpack.c.h.b16 %v367
      %v955 = vunpack.c.l.b16 %v368
      %v956 = vunpack.c.h.b16 %v368
      %v957 = vunpack.c.l.b16 %v369
      %v958 = vunpack.c.h.b16 %v369
      %v959 = vunpack.c.l.b16 %v370
      %v960 = vunpack.c.h.b16 %v370
      %v961 = vunpack.c.l.b16 %v371
      %v962 = vunpack.c.h.b16 %v371
      %v963 = vunpack.c.l.b16 %v372
      %v964 = vunpack.c.h.b16 %v372
      %v965 = vunpack.c.l.b16 %v373
      %v966 = vunpack.c.h.b16 %v373
      %v967 = vunpack.c.l.b16 %v374
      %v968 = vunpack.c.h.b16 %v374
      %v969 = vunpack.c.l.b16 %v375
      %v970 = vunpack.c.h.b16 %v375
      %v971 = vunpack.c.l.b16 %v376
      %v972 = vunpack.c.h.b16 %v376
      %v973 = vunpack.c.l.b16 %v377
      %v974 = vunpack.c.h.b16 %v377
      %v975 = vunpack.c.l.b16 %v378
      %v976 = vunpack.c.h.b16 %v378
      %v977 = vunpack.c.l.b16 %v379
      %v978 = vunpack.c.h.b16 %v379
      %v979 = vunpack.c.l.b16 %v380
      %v980 = vunpack.c.h.b16 %v380
      %v981 = vunpack.c.l.b16 %v381
      %v982 = vunpack.c.h.b16 %v381
      %v983 = vunpack.c.l.b16 %v382
      %v984 = vunpack.c.h.b16 %v382
      %v985 = vpack.c.b16 %v699, %v697
      %v986 = vpack.c.b16 %v700, %v698
      %v987 = vpack.c.b16 %v703, %v701
      %v988 = vpack.c.b16 %v704, %v702
      %v989 = vpack.c.b16 %v707, %v705
      %v990 = vpack.c.b16 %v708, %v706
      %v991 = vpack.c.b16 %v711, %v709
      %v992 = vpack.c.b16 %v712, %v710
      %v993 = vpack.c.b16 %v715, %v713
      %v994 = vpack.c.b16 %v716, %v714
      %v995 = vpack.c.b16 %v719, %v717
      %v996 = vpack.c.b16 %v720, %v718
      %v997 = vpack.c.b16 %v723, %v721
      %v998 = vpack.c.b16 %v724, %v722
      %v999 = vpack.c.b16 %v727, %v725
      %v1000 = vpack.c.b16 %v728, %v726
      %v1001 = vpack.c.b16 %v731, %v729
      %v1002 = vpack.c.b16 %v732, %v730
      %v1003 = vpack.c.b16 %v735, %v733
      %v1004 = vpack.c.b16 %v736, %v734
      %v1005 = vpack.c.b16 %v739, %v737
      %v1006 = vpack.c.b16 %v740, %v738
      %v1007 = vpack.c.b16 %v743, %v741
      %v1008 = vpack.c.b16 %v744, %v742
      %v1009 = vpack.c.b16 %v747, %v745
      %v1010 = vpack.c.b16 %v748, %v746
      %v1011 = vpack.c.b16 %v751, %v749
      %v1012 = vpack.c.b16 %v752, %v750
      %v1013 = vpack.c.b16 %v755, %v753
      %v1014 = vpack.c.b16 %v756, %v754
      %v1015 = vpack.c.b16 %v759, %v757
      %v1016 = vpack.c.b16 %v760, %v758
      %v1017 = vpack.c.b16 %v763, %v761
      %v1018 = vpack.c.b16 %v764, %v762
      %v1019 = vpack.c.b16 %v767, %v765
      %v1020 = vpack.c.b16 %v768, %v766
      %v1021 = vpack.c.b16 %v771, %v769
      %v1022 = vpack.c.b16 %v772, %v770
      %v1023 = vpack.c.b16 %v775, %v773
      %v1024 = vpack.c.b16 %v776, %v774
      %v1025 = vpack.c.b16 %v779, %v777
      %v1026 = vpack.c.b16 %v780, %v778
      %v1027 = vpack.c.b16 %v783, %v781
      %v1028 = vpack.c.b16 %v784, %v782
      %v1029 = vpack.c.b16 %v787, %v785
      %v1030 = vpack.c.b16 %v788, %v786
      %v1031 = vpack.c.b16 %v791, %v789
      %v1032 = vpack.c.b16 %v792, %v790
      %v1033 = vpack.c.b16 %v795, %v793
      %v1034 = vpack.c.b16 %v796, %v794
      %v1035 = vpack.c.b16 %v799, %v797
      %v1036 = vpack.c.b16 %v800, %v798
      %v1037 = vpack.c.b16 %v803, %v801
      %v1038 = vpack.c.b16 %v804, %v802
      %v1039 = vpack.c.b16 %v807, %v805
      %v1040 = vpack.c.b16 %v808, %v806
      %v1041 = vpack.c.b16 %v811, %v809
      %v1042 = vpack.c.b16 %v812, %v810
      %v1043 = vpack.c.b16 %v815, %v813
      %v1044 = vpack.c.b16 %v816, %v814
      %v1045 = vpack.c.b16 %v819, %v817
      %v1046 = vpack.c.b16 %v820, %v818
      %v1047 = vpack.c.b16 %v823, %v821
      %v1048 = vpack.c.b16 %v824, %v822
      %v1049 = vpack.c.b16 %v827, %v825
      %v1050 = vpack.c.b16 %v828, %v826
      %v1051 = vpack.c.b16 %v831, %v829
      %v1052 = vpack.c.b16 %v832, %v830
      %v1053 = vpack.c.b16 %v835, %v833
      %v1054 = vpack.c.b16 %v836, %v834
      %v1055 = vpack.c.b16 %v839, %v837
      %v1056 = vpack.c.b16 %v840, %v838
      %v1057 = vpack.c.b16 %v843, %v841
      %v1058 = vpack.c.b16 %v844, %v842
      %v1059 = vpack.c.b16 %v847, %v845
      %v1060 = vpack.c.b16 %v848, %v846
      %v1061 = vpack.c.b16 %v851, %v849
      %v1062 = vpack.c.b16 %v852, %v850
      %v1063 = vpack.c.b16 %v855, %v853
      %v1064 = vpack.c.b16 %v856, %v854
      %v1065 = vpack.c.b16 %v859, %v857
      %v1066 = vpack.c.b16 %v860, %v858
      %v1067 = vpack.c.b16 %v863, %v861
      %v1068 = vpack.c.b16 %v864, %v862
      %v1069 = vpack.c.b16 %v867, %v865
      %v1070 = vpack.c.b16 %v868, %v866
      %v1071 = vpack.c.b16 %v871, %v869
      %v1072 = vpack.c.b16 %v872, %v870
      %v1073 = vpack.c.b16 %v875, %v873
      %v1074 = vpack.c.b16 %v876, %v874
      %v1075 = vpack.c.b16 %v879, %v877
      %v1076 = vpack.c.b16 %v880, %v878
      %v1077 = vpack.c.b16 %v883, %v881
      %v1078 = vpack.c.b16 %v884, %v882
      %v1079 = vpack.c.b16 %v887, %v885
      %v1080 = vpack.c.b16 %v888, %v886
      %v1081 = vpack.c.b16 %v891, %v889
      %v1082 = vpack.c.b16 %v892, %v890
      %v1083 = vpack.c.b16 %v895, %v893
      %v1084 = vpack.c.b16 %v896, %v894
      %v1085 = vpack.c.b16 %v899, %v897
      %v1086 = vpack.c.b16 %v900, %v898
      %v1087 = vpack.c.b16 %v903, %v901
      %v1088 = vpack.c.b16 %v904, %v902
      %v1089 = vpack.c.b16 %v907, %v905
      %v1090 = vpack.c.b16 %v908, %v906
      %v1091 = vpack.c.b16 %v911, %v909
      %v1092 = vpack.c.b16 %v912, %v910
      %v1093 = vpack.c.b16 %v915, %v913
      %v1094 = vpack.c.b16 %v916, %v914
      %v1095 = vpack.c.b16 %v919, %v917
      %v1096 = vpack.c.b16 %v920, %v918
      %v1097 = vpack.c.b16 %v923, %v921
      %v1098 = vpack.c.b16 %v924, %v922
      %v1099 = vpack.c.b16 %v927, %v925
      %v1100 = vpack.c.b16 %v928, %v926
      %v1101 = vpack.c.b16 %v931, %v929
      %v1102 = vpack.c.b16 %v932, %v930
      %v1103 = vpack.c.b16 %v935, %v933
      %v1104 = vpack.c.b16 %v936, %v934
      %v1105 = vpack.c.b16 %v939, %v937
      %v1106 = vpack.c.b16 %v940, %v938
      %v1107 = vpack.c.b16 %v943, %v941
      %v1108 = vpack.c.b16 %v944, %v942
      %v1109 = vpack.c.b16 %v947, %v945
      %v1110 = vpack.c.b16 %v948, %v946
      %v1111 = vpack.c.b16 %v951, %v949
      %v1112 = vpack.c.b16 %v952, %v950
      %v1113 = vpack.c.b16 %v955, %v953
      %v1114 = vpack.c.b16 %v956, %v954
      %v1115 = vpack.c.b16 %v959, %v957
      %v1116 = vpack.c.b16 %v960, %v958
      %v1117 = vpack.c.b16 %v963, %v961
      %v1118 = vpack.c.b16 %v964, %v962
      %v1119 = vpack.c.b16 %v967, %v965
      %v1120 = vpack.c.b16 %v968, %v966
      %v1121 = vpack.c.b16 %v971, %v969
      %v1122 = vpack.c.b16 %v972, %v970
      %v1123 = vpack.c.b16 %v975, %v973
      %v1124 = vpack.c.b16 %v976, %v974
      %v1125 = vpack.c.b16 %v979, %v977
      %v1126 = vpack.c.b16 %v980, %v978
      %v1127 = vpack.c.b16 %v983, %v981
      %v1128 = vpack.c.b16 %v984, %v982
      %1273 = vmatpush.bf16.msra.mxu0 %v999
      %1274 = vmatpush.bf16.msra.mxu0 %v997
      %1275 = vmatpush.bf16.msra.mxu0 %v995
      %1276 = vmatpush.bf16.msra.mxu0 %v993
      %1277 = vmatpush.bf16.msra.mxu0 %v991
      %1278 = vmatpush.bf16.msra.mxu0 %v989
      %1279 = vmatpush.bf16.msra.mxu0 %v987
      %1280 = vmatpush.bf16.msra.mxu0 %v985
      %1281 = vmatmul.bf16.gmra.mxu0 %v481
      %v1282 = vpop.f32.mrf.mxu0
      %v1283 = vadd.f32 0.0, %v1282
      %v1284 = vpop.f32.mrf.mxu0
      %v1285 = vadd.f32 0.0, %v1284
      %1286 = vmatmul.bf16.gmra.mxu0 %v490
      %v1287 = vpop.f32.mrf.mxu0
      %v1288 = vadd.f32 0.0, %v1287
      %v1289 = vpop.f32.mrf.mxu0
      %v1290 = vadd.f32 0.0, %v1289
      %1291 = vmatmul.bf16.gmra.mxu0 %v499
      %v1292 = vpop.f32.mrf.mxu0
      %v1293 = vadd.f32 0.0, %v1292
      %v1294 = vpop.f32.mrf.mxu0
      %v1295 = vadd.f32 0.0, %v1294
      %1296 = vmatmul.bf16.gmra.mxu0 %v508
      %v1297 = vpop.f32.mrf.mxu0
      %v1298 = vadd.f32 0.0, %v1297
      %v1299 = vpop.f32.mrf.mxu0
      %1300 = vdwg.mxu0
      %1301 = vmatpush.bf16.msra.mxu0 %v1015
      %1302 = vmatpush.bf16.msra.mxu0 %v1013
      %1303 = vmatpush.bf16.msra.mxu0 %v1011
      %1304 = vmatpush.bf16.msra.mxu0 %v1009
      %1305 = vmatpush.bf16.msra.mxu0 %v1007
      %1306 = vmatpush.bf16.msra.mxu0 %v1005
      %1307 = vmatpush.bf16.msra.mxu0 %v1003
      %1308 = vmatpush.bf16.msra.mxu0 %v1001
      %1309 = vmatmul.bf16.gmra.mxu0 %v482
      %v1310 = vpop.f32.mrf.mxu0
      %v1311 = vadd.f32 %v1283, %v1310
      %v1312 = vpop.f32.mrf.mxu0
      %v1313 = vadd.f32 %v1285, %v1312
      %1314 = vmatmul.bf16.gmra.mxu0 %v491
      %v1315 = vpop.f32.mrf.mxu0
      %v1316 = vadd.f32 %v1288, %v1315
      %v1317 = vpop.f32.mrf.mxu0
      %v1318 = vadd.f32 %v1290, %v1317
      %1319 = vmatmul.bf16.gmra.mxu0 %v500
      %v1320 = vpop.f32.mrf.mxu0
      %v1321 = vadd.f32 %v1293, %v1320
      %v1322 = vpop.f32.mrf.mxu0
      %v1323 = vadd.f32 %v1295, %v1322
      %1324 = vmatmul.bf16.gmra.mxu0 %v509
      %v1325 = vpop.f32.mrf.mxu0
      %v1326 = vadd.f32 %v1298, %v1325
      %v1327 = vpop.f32.mrf.mxu0
      %1328 = vdwg.mxu0
      %1329 = vmatpush.bf16.msra.mxu0 %v1031
      %1330 = vmatpush.bf16.msra.mxu0 %v1029
      %1331 = vmatpush.bf16.msra.mxu0 %v1027
      %1332 = vmatpush.bf16.msra.mxu0 %v1025
      %1333 = vmatpush.bf16.msra.mxu0 %v1023
      %1334 = vmatpush.bf16.msra.mxu0 %v1021
      %1335 = vmatpush.bf16.msra.mxu0 %v1019
      %1336 = vmatpush.bf16.msra.mxu0 %v1017
      %1337 = vmatmul.bf16.gmra.mxu0 %v483
      %v1338 = vpop.f32.mrf.mxu0
      %v1339 = vadd.f32 %v1311, %v1338
      %v1340 = vpop.f32.mrf.mxu0
      %v1341 = vadd.f32 %v1313, %v1340
      %1342 = vmatmul.bf16.gmra.mxu0 %v492
      %v1343 = vpop.f32.mrf.mxu0
      %v1344 = vadd.f32 %v1316, %v1343
      %v1345 = vpop.f32.mrf.mxu0
      %v1346 = vadd.f32 %v1318, %v1345
      %1347 = vmatmul.bf16.gmra.mxu0 %v501
      %v1348 = vpop.f32.mrf.mxu0
      %v1349 = vadd.f32 %v1321, %v1348
      %v1350 = vpop.f32.mrf.mxu0
      %v1351 = vadd.f32 %v1323, %v1350
      %1352 = vmatmul.bf16.gmra.mxu0 %v510
      %v1353 = vpop.f32.mrf.mxu0
      %v1354 = vadd.f32 %v1326, %v1353
      %v1355 = vpop.f32.mrf.mxu0
      %1356 = vdwg.mxu0
      %1357 = vmatpush.bf16.msra.mxu0 %v1047
      %1358 = vmatpush.bf16.msra.mxu0 %v1045
      %1359 = vmatpush.bf16.msra.mxu0 %v1043
      %1360 = vmatpush.bf16.msra.mxu0 %v1041
      %1361 = vmatpush.bf16.msra.mxu0 %v1039
      %1362 = vmatpush.bf16.msra.mxu0 %v1037
      %1363 = vmatpush.bf16.msra.mxu0 %v1035
      %1364 = vmatpush.bf16.msra.mxu0 %v1033
      %1365 = vmatmul.bf16.gmra.mxu0 %v484
      %v1366 = vpop.f32.mrf.mxu0
      %v1367 = vadd.f32 %v1339, %v1366
      %v1368 = vpop.f32.mrf.mxu0
      %v1369 = vadd.f32 %v1341, %v1368
      %1370 = vmatmul.bf16.gmra.mxu0 %v493
      %v1371 = vpop.f32.mrf.mxu0
      %v1372 = vadd.f32 %v1344, %v1371
      %v1373 = vpop.f32.mrf.mxu0
      %v1374 = vadd.f32 %v1346, %v1373
      %1375 = vmatmul.bf16.gmra.mxu0 %v502
      %v1376 = vpop.f32.mrf.mxu0
      %v1377 = vadd.f32 %v1349, %v1376
      %v1378 = vpop.f32.mrf.mxu0
      %v1379 = vadd.f32 %v1351, %v1378
      %1380 = vmatmul.bf16.gmra.mxu0 %v511
      %v1381 = vpop.f32.mrf.mxu0
      %v1382 = vadd.f32 %v1354, %v1381
      %v1383 = vpop.f32.mrf.mxu0
      %1384 = vdwg.mxu0
      %1385 = vmatpush.bf16.msra.mxu0 %v1063
      %1386 = vmatpush.bf16.msra.mxu0 %v1061
      %1387 = vmatpush.bf16.msra.mxu0 %v1059
      %1388 = vmatpush.bf16.msra.mxu0 %v1057
      %1389 = vmatpush.bf16.msra.mxu0 %v1055
      %1390 = vmatpush.bf16.msra.mxu0 %v1053
      %1391 = vmatpush.bf16.msra.mxu0 %v1051
      %1392 = vmatpush.bf16.msra.mxu0 %v1049
      %1393 = vmatmul.bf16.gmra.mxu0 %v485
      %v1394 = vpop.f32.mrf.mxu0
      %v1395 = vadd.f32 %v1367, %v1394
      %v1396 = vpop.f32.mrf.mxu0
      %v1397 = vadd.f32 %v1369, %v1396
      %1398 = vmatmul.bf16.gmra.mxu0 %v494
      %v1399 = vpop.f32.mrf.mxu0
      %v1400 = vadd.f32 %v1372, %v1399
      %v1401 = vpop.f32.mrf.mxu0
      %v1402 = vadd.f32 %v1374, %v1401
      %1403 = vmatmul.bf16.gmra.mxu0 %v503
      %v1404 = vpop.f32.mrf.mxu0
      %v1405 = vadd.f32 %v1377, %v1404
      %v1406 = vpop.f32.mrf.mxu0
      %v1407 = vadd.f32 %v1379, %v1406
      %1408 = vmatmul.bf16.gmra.mxu0 %v512
      %v1409 = vpop.f32.mrf.mxu0
      %v1410 = vadd.f32 %v1382, %v1409
      %v1411 = vpop.f32.mrf.mxu0
      %1412 = vdwg.mxu0
      %1413 = vmatpush.bf16.msra.mxu0 %v1079
      %1414 = vmatpush.bf16.msra.mxu0 %v1077
      %1415 = vmatpush.bf16.msra.mxu0 %v1075
      %1416 = vmatpush.bf16.msra.mxu0 %v1073
      %1417 = vmatpush.bf16.msra.mxu0 %v1071
      %1418 = vmatpush.bf16.msra.mxu0 %v1069
      %1419 = vmatpush.bf16.msra.mxu0 %v1067
      %1420 = vmatpush.bf16.msra.mxu0 %v1065
      %1421 = vmatmul.bf16.gmra.mxu0 %v486
      %v1422 = vpop.f32.mrf.mxu0
      %v1423 = vadd.f32 %v1395, %v1422
      %v1424 = vpop.f32.mrf.mxu0
      %v1425 = vadd.f32 %v1397, %v1424
      %1426 = vmatmul.bf16.gmra.mxu0 %v495
      %v1427 = vpop.f32.mrf.mxu0
      %v1428 = vadd.f32 %v1400, %v1427
      %v1429 = vpop.f32.mrf.mxu0
      %v1430 = vadd.f32 %v1402, %v1429
      %1431 = vmatmul.bf16.gmra.mxu0 %v504
      %v1432 = vpop.f32.mrf.mxu0
      %v1433 = vadd.f32 %v1405, %v1432
      %v1434 = vpop.f32.mrf.mxu0
      %v1435 = vadd.f32 %v1407, %v1434
      %1436 = vmatmul.bf16.gmra.mxu0 %v513
      %v1437 = vpop.f32.mrf.mxu0
      %v1438 = vadd.f32 %v1410, %v1437
      %v1439 = vpop.f32.mrf.mxu0
      %1440 = vdwg.mxu0
      %1441 = vmatpush.bf16.msra.mxu0 %v1095
      %1442 = vmatpush.bf16.msra.mxu0 %v1093
      %1443 = vmatpush.bf16.msra.mxu0 %v1091
      %1444 = vmatpush.bf16.msra.mxu0 %v1089
      %1445 = vmatpush.bf16.msra.mxu0 %v1087
      %1446 = vmatpush.bf16.msra.mxu0 %v1085
      %1447 = vmatpush.bf16.msra.mxu0 %v1083
      %1448 = vmatpush.bf16.msra.mxu0 %v1081
      %1449 = vmatmul.bf16.gmra.mxu0 %v487
      %v1450 = vpop.f32.mrf.mxu0
      %v1451 = vadd.f32 %v1423, %v1450
      %v1452 = vpop.f32.mrf.mxu0
      %v1453 = vadd.f32 %v1425, %v1452
      %1454 = vmatmul.bf16.gmra.mxu0 %v496
      %v1455 = vpop.f32.mrf.mxu0
      %v1456 = vadd.f32 %v1428, %v1455
      %v1457 = vpop.f32.mrf.mxu0
      %v1458 = vadd.f32 %v1430, %v1457
      %1459 = vmatmul.bf16.gmra.mxu0 %v505
      %v1460 = vpop.f32.mrf.mxu0
      %v1461 = vadd.f32 %v1433, %v1460
      %v1462 = vpop.f32.mrf.mxu0
      %v1463 = vadd.f32 %v1435, %v1462
      %1464 = vmatmul.bf16.gmra.mxu0 %v514
      %v1465 = vpop.f32.mrf.mxu0
      %v1466 = vadd.f32 %v1438, %v1465
      %v1467 = vpop.f32.mrf.mxu0
      %1468 = vdwg.mxu0
      %1469 = vmatpush.bf16.msra.mxu0 %v1111
      %1470 = vmatpush.bf16.msra.mxu0 %v1109
      %1471 = vmatpush.bf16.msra.mxu0 %v1107
      %1472 = vmatpush.bf16.msra.mxu0 %v1105
      %1473 = vmatpush.bf16.msra.mxu0 %v1103
      %1474 = vmatpush.bf16.msra.mxu0 %v1101
      %1475 = vmatpush.bf16.msra.mxu0 %v1099
      %1476 = vmatpush.bf16.msra.mxu0 %v1097
      %1477 = vmatmul.bf16.gmra.mxu0 %v488
      %v1478 = vpop.f32.mrf.mxu0
      %v1479 = vadd.f32 %v1451, %v1478
      %v1480 = vpop.f32.mrf.mxu0
      %v1481 = vadd.f32 %v1453, %v1480
      %1482 = vmatmul.bf16.gmra.mxu0 %v497
      %v1483 = vpop.f32.mrf.mxu0
      %v1484 = vadd.f32 %v1456, %v1483
      %v1485 = vpop.f32.mrf.mxu0
      %v1486 = vadd.f32 %v1458, %v1485
      %1487 = vmatmul.bf16.gmra.mxu0 %v506
      %v1488 = vpop.f32.mrf.mxu0
      %v1489 = vadd.f32 %v1461, %v1488
      %v1490 = vpop.f32.mrf.mxu0
      %v1491 = vadd.f32 %v1463, %v1490
      %1492 = vmatmul.bf16.gmra.mxu0 %v515
      %v1493 = vpop.f32.mrf.mxu0
      %v1494 = vadd.f32 %v1466, %v1493
      %v1495 = vpop.f32.mrf.mxu0
      %1496 = vdwg.mxu0
      %1497 = vmatpush.bf16.msra.mxu0 %v1127
      %1498 = vmatpush.bf16.msra.mxu0 %v1125
      %1499 = vmatpush.bf16.msra.mxu0 %v1123
      %1500 = vmatpush.bf16.msra.mxu0 %v1121
      %1501 = vmatpush.bf16.msra.mxu0 %v1119
      %1502 = vmatpush.bf16.msra.mxu0 %v1117
      %1503 = vmatpush.bf16.msra.mxu0 %v1115
      %1504 = vmatpush.bf16.msra.mxu0 %v1113
      %1505 = vmatmul.bf16.gmra.mxu0 %v489
      %v1506 = vpop.f32.mrf.mxu0
      %v1507 = vadd.f32 %v1479, %v1506
      %v1508 = vpop.f32.mrf.mxu0
      %v1509 = vadd.f32 %v1481, %v1508
      %1510 = vmatmul.bf16.gmra.mxu0 %v498
      %v1511 = vpop.f32.mrf.mxu0
      %v1512 = vadd.f32 %v1484, %v1511
      %v1513 = vpop.f32.mrf.mxu0
      %v1514 = vadd.f32 %v1486, %v1513
      %1515 = vmatmul.bf16.gmra.mxu0 %v507
      %v1516 = vpop.f32.mrf.mxu0
      %v1517 = vadd.f32 %v1489, %v1516
      %v1518 = vpop.f32.mrf.mxu0
      %v1519 = vadd.f32 %v1491, %v1518
      %1520 = vmatmul.bf16.gmra.mxu0 %v516
      %v1521 = vpop.f32.mrf.mxu0
      %v1522 = vadd.f32 %v1494, %v1521
      %v1523 = vpop.f32.mrf.mxu0
      %1524 = vdwg.mxu0
      %1525 = vmatpush.bf16.msra.mxu0 %v1000
      %1526 = vmatpush.bf16.msra.mxu0 %v998
      %1527 = vmatpush.bf16.msra.mxu0 %v996
      %1528 = vmatpush.bf16.msra.mxu0 %v994
      %1529 = vmatpush.bf16.msra.mxu0 %v992
      %1530 = vmatpush.bf16.msra.mxu0 %v990
      %1531 = vmatpush.bf16.msra.mxu0 %v988
      %1532 = vmatpush.bf16.msra.mxu0 %v986
      %1533 = vmatmul.bf16.gmra.mxu0 %v481
      %v1534 = vpop.f32.mrf.mxu0
      %v1535 = vadd.f32 0.0, %v1534
      %v1536 = vpop.f32.mrf.mxu0
      %v1537 = vadd.f32 0.0, %v1536
      %1538 = vmatmul.bf16.gmra.mxu0 %v490
      %v1539 = vpop.f32.mrf.mxu0
      %v1540 = vadd.f32 0.0, %v1539
      %v1541 = vpop.f32.mrf.mxu0
      %v1542 = vadd.f32 0.0, %v1541
      %1543 = vmatmul.bf16.gmra.mxu0 %v499
      %v1544 = vpop.f32.mrf.mxu0
      %v1545 = vadd.f32 0.0, %v1544
      %v1546 = vpop.f32.mrf.mxu0
      %v1547 = vadd.f32 0.0, %v1546
      %1548 = vmatmul.bf16.gmra.mxu0 %v508
      %v1549 = vpop.f32.mrf.mxu0
      %v1550 = vadd.f32 0.0, %v1549
      %v1551 = vpop.f32.mrf.mxu0
      %1552 = vdwg.mxu0
      %1553 = vmatpush.bf16.msra.mxu0 %v1016
      %1554 = vmatpush.bf16.msra.mxu0 %v1014
      %1555 = vmatpush.bf16.msra.mxu0 %v1012
      %1556 = vmatpush.bf16.msra.mxu0 %v1010
      %1557 = vmatpush.bf16.msra.mxu0 %v1008
      %1558 = vmatpush.bf16.msra.mxu0 %v1006
      %1559 = vmatpush.bf16.msra.mxu0 %v1004
      %1560 = vmatpush.bf16.msra.mxu0 %v1002
      %1561 = vmatmul.bf16.gmra.mxu0 %v482
      %v1562 = vpop.f32.mrf.mxu0
      %v1563 = vadd.f32 %v1535, %v1562
      %v1564 = vpop.f32.mrf.mxu0
      %v1565 = vadd.f32 %v1537, %v1564
      %1566 = vmatmul.bf16.gmra.mxu0 %v491
      %v1567 = vpop.f32.mrf.mxu0
      %v1568 = vadd.f32 %v1540, %v1567
      %v1569 = vpop.f32.mrf.mxu0
      %v1570 = vadd.f32 %v1542, %v1569
      %1571 = vmatmul.bf16.gmra.mxu0 %v500
      %v1572 = vpop.f32.mrf.mxu0
      %v1573 = vadd.f32 %v1545, %v1572
      %v1574 = vpop.f32.mrf.mxu0
      %v1575 = vadd.f32 %v1547, %v1574
      %1576 = vmatmul.bf16.gmra.mxu0 %v509
      %v1577 = vpop.f32.mrf.mxu0
      %v1578 = vadd.f32 %v1550, %v1577
      %v1579 = vpop.f32.mrf.mxu0
      %1580 = vdwg.mxu0
      %1581 = vmatpush.bf16.msra.mxu0 %v1032
      %1582 = vmatpush.bf16.msra.mxu0 %v1030
      %1583 = vmatpush.bf16.msra.mxu0 %v1028
      %1584 = vmatpush.bf16.msra.mxu0 %v1026
      %1585 = vmatpush.bf16.msra.mxu0 %v1024
      %1586 = vmatpush.bf16.msra.mxu0 %v1022
      %1587 = vmatpush.bf16.msra.mxu0 %v1020
      %1588 = vmatpush.bf16.msra.mxu0 %v1018
      %1589 = vmatmul.bf16.gmra.mxu0 %v483
      %v1590 = vpop.f32.mrf.mxu0
      %v1591 = vadd.f32 %v1563, %v1590
      %v1592 = vpop.f32.mrf.mxu0
      %v1593 = vadd.f32 %v1565, %v1592
      %1594 = vmatmul.bf16.gmra.mxu0 %v492
      %v1595 = vpop.f32.mrf.mxu0
      %v1596 = vadd.f32 %v1568, %v1595
      %v1597 = vpop.f32.mrf.mxu0
      %v1598 = vadd.f32 %v1570, %v1597
      %1599 = vmatmul.bf16.gmra.mxu0 %v501
      %v1600 = vpop.f32.mrf.mxu0
      %v1601 = vadd.f32 %v1573, %v1600
      %v1602 = vpop.f32.mrf.mxu0
      %v1603 = vadd.f32 %v1575, %v1602
      %1604 = vmatmul.bf16.gmra.mxu0 %v510
      %v1605 = vpop.f32.mrf.mxu0
      %v1606 = vadd.f32 %v1578, %v1605
      %v1607 = vpop.f32.mrf.mxu0
      %1608 = vdwg.mxu0
      %1609 = vmatpush.bf16.msra.mxu0 %v1048
      %1610 = vmatpush.bf16.msra.mxu0 %v1046
      %1611 = vmatpush.bf16.msra.mxu0 %v1044
      %1612 = vmatpush.bf16.msra.mxu0 %v1042
      %1613 = vmatpush.bf16.msra.mxu0 %v1040
      %1614 = vmatpush.bf16.msra.mxu0 %v1038
      %1615 = vmatpush.bf16.msra.mxu0 %v1036
      %1616 = vmatpush.bf16.msra.mxu0 %v1034
      %1617 = vmatmul.bf16.gmra.mxu0 %v484
      %v1618 = vpop.f32.mrf.mxu0
      %v1619 = vadd.f32 %v1591, %v1618
      %v1620 = vpop.f32.mrf.mxu0
      %v1621 = vadd.f32 %v1593, %v1620
      %1622 = vmatmul.bf16.gmra.mxu0 %v493
      %v1623 = vpop.f32.mrf.mxu0
      %v1624 = vadd.f32 %v1596, %v1623
      %v1625 = vpop.f32.mrf.mxu0
      %v1626 = vadd.f32 %v1598, %v1625
      %1627 = vmatmul.bf16.gmra.mxu0 %v502
      %v1628 = vpop.f32.mrf.mxu0
      %v1629 = vadd.f32 %v1601, %v1628
      %v1630 = vpop.f32.mrf.mxu0
      %v1631 = vadd.f32 %v1603, %v1630
      %1632 = vmatmul.bf16.gmra.mxu0 %v511
      %v1633 = vpop.f32.mrf.mxu0
      %v1634 = vadd.f32 %v1606, %v1633
      %v1635 = vpop.f32.mrf.mxu0
      %1636 = vdwg.mxu0
      %1637 = vmatpush.bf16.msra.mxu0 %v1064
      %1638 = vmatpush.bf16.msra.mxu0 %v1062
      %1639 = vmatpush.bf16.msra.mxu0 %v1060
      %1640 = vmatpush.bf16.msra.mxu0 %v1058
      %1641 = vmatpush.bf16.msra.mxu0 %v1056
      %1642 = vmatpush.bf16.msra.mxu0 %v1054
      %1643 = vmatpush.bf16.msra.mxu0 %v1052
      %1644 = vmatpush.bf16.msra.mxu0 %v1050
      %1645 = vmatmul.bf16.gmra.mxu0 %v485
      %v1646 = vpop.f32.mrf.mxu0
      %v1647 = vadd.f32 %v1619, %v1646
      %v1648 = vpop.f32.mrf.mxu0
      %v1649 = vadd.f32 %v1621, %v1648
      %1650 = vmatmul.bf16.gmra.mxu0 %v494
      %v1651 = vpop.f32.mrf.mxu0
      %v1652 = vadd.f32 %v1624, %v1651
      %v1653 = vpop.f32.mrf.mxu0
      %v1654 = vadd.f32 %v1626, %v1653
      %1655 = vmatmul.bf16.gmra.mxu0 %v503
      %v1656 = vpop.f32.mrf.mxu0
      %v1657 = vadd.f32 %v1629, %v1656
      %v1658 = vpop.f32.mrf.mxu0
      %v1659 = vadd.f32 %v1631, %v1658
      %1660 = vmatmul.bf16.gmra.mxu0 %v512
      %v1661 = vpop.f32.mrf.mxu0
      %v1662 = vadd.f32 %v1634, %v1661
      %v1663 = vpop.f32.mrf.mxu0
      %1664 = vdwg.mxu0
      %1665 = vmatpush.bf16.msra.mxu0 %v1080
      %1666 = vmatpush.bf16.msra.mxu0 %v1078
      %1667 = vmatpush.bf16.msra.mxu0 %v1076
      %1668 = vmatpush.bf16.msra.mxu0 %v1074
      %1669 = vmatpush.bf16.msra.mxu0 %v1072
      %1670 = vmatpush.bf16.msra.mxu0 %v1070
      %1671 = vmatpush.bf16.msra.mxu0 %v1068
      %1672 = vmatpush.bf16.msra.mxu0 %v1066
      %1673 = vmatmul.bf16.gmra.mxu0 %v486
      %v1674 = vpop.f32.mrf.mxu0
      %v1675 = vadd.f32 %v1647, %v1674
      %v1676 = vpop.f32.mrf.mxu0
      %v1677 = vadd.f32 %v1649, %v1676
      %1678 = vmatmul.bf16.gmra.mxu0 %v495
      %v1679 = vpop.f32.mrf.mxu0
      %v1680 = vadd.f32 %v1652, %v1679
      %v1681 = vpop.f32.mrf.mxu0
      %v1682 = vadd.f32 %v1654, %v1681
      %1683 = vmatmul.bf16.gmra.mxu0 %v504
      %v1684 = vpop.f32.mrf.mxu0
      %v1685 = vadd.f32 %v1657, %v1684
      %v1686 = vpop.f32.mrf.mxu0
      %v1687 = vadd.f32 %v1659, %v1686
      %1688 = vmatmul.bf16.gmra.mxu0 %v513
      %v1689 = vpop.f32.mrf.mxu0
      %v1690 = vadd.f32 %v1662, %v1689
      %v1691 = vpop.f32.mrf.mxu0
      %1692 = vdwg.mxu0
      %1693 = vmatpush.bf16.msra.mxu0 %v1096
      %1694 = vmatpush.bf16.msra.mxu0 %v1094
      %1695 = vmatpush.bf16.msra.mxu0 %v1092
      %1696 = vmatpush.bf16.msra.mxu0 %v1090
      %1697 = vmatpush.bf16.msra.mxu0 %v1088
      %1698 = vmatpush.bf16.msra.mxu0 %v1086
      %1699 = vmatpush.bf16.msra.mxu0 %v1084
      %1700 = vmatpush.bf16.msra.mxu0 %v1082
      %1701 = vmatmul.bf16.gmra.mxu0 %v487
      %v1702 = vpop.f32.mrf.mxu0
      %v1703 = vadd.f32 %v1675, %v1702
      %v1704 = vpop.f32.mrf.mxu0
      %v1705 = vadd.f32 %v1677, %v1704
      %1706 = vmatmul.bf16.gmra.mxu0 %v496
      %v1707 = vpop.f32.mrf.mxu0
      %v1708 = vadd.f32 %v1680, %v1707
      %v1709 = vpop.f32.mrf.mxu0
      %v1710 = vadd.f32 %v1682, %v1709
      %1711 = vmatmul.bf16.gmra.mxu0 %v505
      %v1712 = vpop.f32.mrf.mxu0
      %v1713 = vadd.f32 %v1685, %v1712
      %v1714 = vpop.f32.mrf.mxu0
      %v1715 = vadd.f32 %v1687, %v1714
      %1716 = vmatmul.bf16.gmra.mxu0 %v514
      %v1717 = vpop.f32.mrf.mxu0
      %v1718 = vadd.f32 %v1690, %v1717
      %v1719 = vpop.f32.mrf.mxu0
      %1720 = vdwg.mxu0
      %1721 = vmatpush.bf16.msra.mxu0 %v1112
      %1722 = vmatpush.bf16.msra.mxu0 %v1110
      %1723 = vmatpush.bf16.msra.mxu0 %v1108
      %1724 = vmatpush.bf16.msra.mxu0 %v1106
      %1725 = vmatpush.bf16.msra.mxu0 %v1104
      %1726 = vmatpush.bf16.msra.mxu0 %v1102
      %1727 = vmatpush.bf16.msra.mxu0 %v1100
      %1728 = vmatpush.bf16.msra.mxu0 %v1098
      %1729 = vmatmul.bf16.gmra.mxu0 %v488
      %v1730 = vpop.f32.mrf.mxu0
      %v1731 = vadd.f32 %v1703, %v1730
      %v1732 = vpop.f32.mrf.mxu0
      %v1733 = vadd.f32 %v1705, %v1732
      %1734 = vmatmul.bf16.gmra.mxu0 %v497
      %v1735 = vpop.f32.mrf.mxu0
      %v1736 = vadd.f32 %v1708, %v1735
      %v1737 = vpop.f32.mrf.mxu0
      %v1738 = vadd.f32 %v1710, %v1737
      %1739 = vmatmul.bf16.gmra.mxu0 %v506
      %v1740 = vpop.f32.mrf.mxu0
      %v1741 = vadd.f32 %v1713, %v1740
      %v1742 = vpop.f32.mrf.mxu0
      %v1743 = vadd.f32 %v1715, %v1742
      %1744 = vmatmul.bf16.gmra.mxu0 %v515
      %v1745 = vpop.f32.mrf.mxu0
      %v1746 = vadd.f32 %v1718, %v1745
      %v1747 = vpop.f32.mrf.mxu0
      %1748 = vdwg.mxu0
      %1749 = vmatpush.bf16.msra.mxu0 %v1128
      %1750 = vmatpush.bf16.msra.mxu0 %v1126
      %1751 = vmatpush.bf16.msra.mxu0 %v1124
      %1752 = vmatpush.bf16.msra.mxu0 %v1122
      %1753 = vmatpush.bf16.msra.mxu0 %v1120
      %1754 = vmatpush.bf16.msra.mxu0 %v1118
      %1755 = vmatpush.bf16.msra.mxu0 %v1116
      %1756 = vmatpush.bf16.msra.mxu0 %v1114
      %1757 = vmatmul.bf16.gmra.mxu0 %v489
      %v1758 = vpop.f32.mrf.mxu0
      %v1759 = vadd.f32 %v1731, %v1758
      %v1760 = vpop.f32.mrf.mxu0
      %v1761 = vadd.f32 %v1733, %v1760
      %1762 = vmatmul.bf16.gmra.mxu0 %v498
      %v1763 = vpop.f32.mrf.mxu0
      %v1764 = vadd.f32 %v1736, %v1763
      %v1765 = vpop.f32.mrf.mxu0
      %v1766 = vadd.f32 %v1738, %v1765
      %1767 = vmatmul.bf16.gmra.mxu0 %v507
      %v1768 = vpop.f32.mrf.mxu0
      %v1769 = vadd.f32 %v1741, %v1768
      %v1770 = vpop.f32.mrf.mxu0
      %v1771 = vadd.f32 %v1743, %v1770
      %1772 = vmatmul.bf16.gmra.mxu0 %v516
      %v1773 = vpop.f32.mrf.mxu0
      %v1774 = vadd.f32 %v1746, %v1773
      %v1775 = vpop.f32.mrf.mxu0
      %1776 = vdwg.mxu0
      %v1777 = vld [vmem:[%s2] sm:$0x3]
      %v1779 = vperm.slane %v1777, 0
      %v1780 = vperm.slane %v1777, 1
      %v1783 = vmul.f32 %v1507, %v1779
      %v1784 = vmul.f32 %v1759, %v1780
      %v1785 = vmul.f32 %v1509, %v1779
      %v1786 = vmul.f32 %v1761, %v1780
      %v1787 = vmul.f32 %v1512, %v1779
      %v1788 = vmul.f32 %v1764, %v1780
      %v1789 = vmul.f32 %v1514, %v1779
      %v1790 = vmul.f32 %v1766, %v1780
      %v1791 = vmul.f32 %v1517, %v1779
      %v1792 = vmul.f32 %v1769, %v1780
      %v1793 = vmul.f32 %v1519, %v1779
      %v1794 = vmul.f32 %v1771, %v1780
      %v1795 = vmul.f32 %v1522, %v1779
      %v1796 = vmul.f32 %v1774, %v1780
      %v1797 = vld [vmem:[%s3] sm:$0x3]
      %v1799 = vperm.slane %v1797, 0
      %v1800 = vperm.slane %v1797, 1
      %v1803 = vadd.f32 %v1783, %v1799
      %v1804 = vadd.f32 %v1784, %v1800
      %v1805 = vadd.f32 %v1785, %v1799
      %v1806 = vadd.f32 %v1786, %v1800
      %v1807 = vadd.f32 %v1787, %v1799
      %v1808 = vadd.f32 %v1788, %v1800
      %v1809 = vadd.f32 %v1789, %v1799
      %v1810 = vadd.f32 %v1790, %v1800
      %v1811 = vadd.f32 %v1791, %v1799
      %v1812 = vadd.f32 %v1792, %v1800
      %v1813 = vadd.f32 %v1793, %v1799
      %v1814 = vadd.f32 %v1794, %v1800
      %v1815 = vadd.f32 %v1795, %v1799
      %v1816 = vadd.f32 %v1796, %v1800
      %v1817 = vmax.f32 %v1803, %v1804
      %v1818 = vmax.f32 %v1805, %v1806
      %v1819 = vmax.f32 %v1807, %v1808
      %v1820 = vmax.f32 %v1809, %v1810
      %v1821 = vmax.f32 %v1811, %v1812
      %v1822 = vmax.f32 %v1813, %v1814
      %v1823 = vmax.f32 %v1815, %v1816
      %1824 = vrot.lane.b32.xlu0 %v1817, 64
      %v1825 = vpop.permute.xlu0 %1824
      %1826 = vrot.lane.b32.xlu0 %v1818, 64
      %v1827 = vpop.permute.xlu0 %1826
      %1828 = vrot.lane.b32.xlu0 %v1819, 64
      %v1829 = vpop.permute.xlu0 %1828
      %1830 = vrot.lane.b32.xlu0 %v1820, 64
      %v1831 = vpop.permute.xlu0 %1830
      %1832 = vrot.lane.b32.xlu0 %v1821, 64
      %v1833 = vpop.permute.xlu0 %1832
      %1834 = vrot.lane.b32.xlu0 %v1822, 64
      %v1835 = vpop.permute.xlu0 %1834
      %1836 = vrot.lane.b32.xlu0 %v1823, 64
      %v1837 = vpop.permute.xlu0 %1836
      %v1838 = vlaneseq
      %v1839 = vand.u32 %v1838, 127
      %v1840 = vmax.f32 %v1817, %v1825
      %v1841 = vmax.f32 %v1818, %v1827
      %v1842 = vmax.f32 %v1819, %v1829
      %v1843 = vmax.f32 %v1820, %v1831
      %v1844 = vmax.f32 %v1821, %v1833
      %v1845 = vmax.f32 %v1822, %v1835
      %v1846 = vmax.f32 %v1823, %v1837
      %v1847 = vmax.f32 %v1840, 0.0
      %v1848 = vmax.f32 %v1841, 0.0
      %v1849 = vmax.f32 %v1842, 0.0
      %v1850 = vmax.f32 %v1843, 0.0
      %v1851 = vmax.f32 %v1844, 0.0
      %v1852 = vmax.f32 %v1845, 0.0
      %v1853 = vmax.f32 %v1846, 0.0
      %v1854 = vpack.c.bf16 %v1847, %v1847
      %v1855 = vpack.c.bf16 %v1848, %v1848
      %v1856 = vpack.c.bf16 %v1849, %v1849
      %v1857 = vpack.c.bf16 %v1850, %v1850
      %v1858 = vpack.c.bf16 %v1851, %v1851
      %v1859 = vpack.c.bf16 %v1852, %v1852
      %v1860 = vpack.c.bf16 %v1853, %v1853
      %vm1861 = vcmask 519168
      %1862 = vst.msk [vmem:[%s202] sm:$0xf] %vm1861, %v1854
      %1863 = vst.msk [vmem:[%s202 + $0x4] sm:$0xf] %vm1861, %v1855
      %1864 = vst.msk [vmem:[%s202 + $0x8] sm:$0xf] %vm1861, %v1856
      %1865 = vst.msk [vmem:[%s202 + $0xc] sm:$0xf] %vm1861, %v1857
      %1866 = vst.msk [vmem:[%s202 + $0x10] sm:$0xf] %vm1861, %v1858
      %1867 = vst.msk [vmem:[%s202 + $0x14] sm:$0xf] %vm1861, %v1859
      %1868 = vst.msk [vmem:[%s202 + $0x18] sm:$0xf] %vm1861, %v1860
      %s1869 = smul.u32 7, %s15
      %p1870 = scmp.lt.s32.totalorder %s1869, 13
      %s1871 = scalar_select %p1870, %s1869, 13
      %s1872 = smul.addr %s1871, 4
      %s1873 = scalar_lea.vmem %s4, %s1872
      // Predicated region
      $region37: #{cnn_forward.4} parent=35 // pred_check
        %p1874 = pneg %p122
      $region38: #{cnn_forward.4} parent=35 // pred_check_branch
        %1876 = sbr.rel (%p1874) target = $region40
      $region39: #{cnn_forward.4} parent=35 // pred_region
        %s1877 = smul.u32 7, %s15
      $region40: #{cnn_forward.4} parent=35 // pred_fallthru
        _
    $region36: #{cnn_forward.4} parent=5 // pred_fallthru
      _
    %p1878 = scmp.le.s32.totalorder 2, %s10
    // Predicated region
    $region41: #{cnn_forward.4} parent=5 // pred_check
      %p1879 = pneg %p1878
    $region42: #{cnn_forward.4} parent=5 // pred_check_branch
      %1881 = sbr.rel (%p1879) target = $region44
    $region43: #{cnn_forward.4} parent=5 // pred_region
      %s1882 = ssub.s32 %s10, 2
      // Predicated region
      $region45: #{cnn_forward.4} parent=43 // pred_check
        %p1883 = pneg %p128
      $region46: #{cnn_forward.4} parent=43 // pred_check_branch
        %1885 = sbr.rel (%p1883) target = $region48
      $region47: #{cnn_forward.4} parent=43 // pred_region
        %s1886 = smul.u32 7, %s16
        %p1887 = scmp.lt.s32.totalorder %s1886, 13
        %s1888 = scalar_select %p1887, %s1886, 13
        %s1889 = smul.addr %s1888, 4
        %s1890 = scalar_lea.vmem %s4, %s1889
      $region48: #{cnn_forward.4} parent=43 // pred_fallthru
        _
    $region44: #{cnn_forward.4} parent=5 // pred_fallthru
      _
  $region6: #{cnn_forward.4} parent=0 // loop_footer
    %s14 = sadd.s32 1, %s10
  $region7: #{cnn_forward.4} parent=0 // loop_footer_branch
    %9 = sbr.rel target = $region3
  $region8: #{cnn_forward.4} parent=0 // loop_exit
    _

// kernel: cnn_forward.5
$region0: #{cnn_forward.5}
  #allocation0 [shape = 'u32[]', space=smem, size = 0x4, offset = 0x4, fixed_abs, tag = 'smem constant byte address 0x4 - core index']
  #allocation1 [shape = 'u32[72,128]{1,0:T(1,128)}', space=vmem, size = 0x9000, scoped, tag = 'internal scratch']
  %s0 = inlined_call_operand.vmem [shape: bf16[16,3136], index: 0, kind: input, shape index: {}]
  %s1 = inlined_call_operand.vmem [shape: bf16[3136,128], index: 1, kind: input, shape index: {}]
  %s2 = inlined_call_operand.vmem [shape: f32[1,128], index: 2, kind: input, shape index: {}]
  %s3 = inlined_call_operand.vmem [shape: bf16[128,128], index: 3, kind: input, shape index: {}]
  %s4 = inlined_call_operand.vmem [shape: f32[1,128], index: 4, kind: input, shape index: {}]
  %s5 = inlined_call_operand.vmem [shape: f32[16,128], index: 5, kind: output, shape index: {}]
  %s6 = sld [smem:[#allocation0]]
  $region53: #{cnn_forward.5} parent=0
    _
  %s8 = ssub.s32 1, %s6
  %s9 = scalar_select 0, %s8, %s6
  loop: start=0, step=1, limit=4
  $region2: #{cnn_forward.5} parent=0 // loop_pre_header
    _
  $region3: #{cnn_forward.5} parent=0 // loop_header
    %s11 = sphi 0, %s15
    %p12 = scmp.ge.s32.totalorder %s11, 4
    %s21 = sphi 0, %s23
    %s24 = sphi 0, %s21
    %s25 = sphi 0, %s24
    %s41 = sphi 0, %s25
    %s45 = sphi 0, %s45
    %s47 = sphi 0, %s45
    %s48 = sphi 0, %s47
    %s62 = sphi 0, %s48
    %s66 = sphi 0, %s66
    %s68 = sphi 0, %s66
    %s69 = sphi 0, %s68
    %s83 = sphi 0, %s69
    %s87 = sphi 0, %s87
    %s89 = sphi 0, %s87
    %s90 = sphi 0, %s89
    %s104 = sphi 0, %s90
    %s108 = sphi 0, %s108
    %s110 = sphi 0, %s108
    %s111 = sphi 0, %s110
    %s125 = sphi 0, %s111
    %s131 = sphi 0, %s133
    %s134 = sphi 0, %s131
    %s135 = sphi 0, %s134
    %s151 = sphi 0, %s135
  $region4: #{cnn_forward.5} parent=0 // loop_header_branch
    %14 = sbr.rel (%p12) target = $region8
  $region5: #{cnn_forward.5} parent=0 // loop_body
    %s16 = ssub.s32 %s11, 1
    %s17 = ssub.s32 %s11, 2
    %s18 = sadd.s32 %s11, 1
    %s19 = ssub.s32 %s11, %s18
    %p20 = scmp.eq.s32.totalorder %s19, 0
    %s22 = sadd.s32 %s21, 1
    %s23 = scalar_select %p20, %s21, %s22
    %p26 = pneg %p20
    %p27 = scmp.eq.s32.totalorder %s11, 1
    %p28 = por %p26, %p27
    %p29 = scmp.ne.s32.totalorder %s21, %s24
    %p30 = scmp.eq.s32.totalorder %s11, 0
    %p31 = por %p29, %p30
    %p32 = scmp.ne.s32.totalorder %s21, %s24
    %p33 = scmp.eq.s32.totalorder %s16, 1
    %p34 = por %p32, %p33
    %p35 = scmp.ne.s32.totalorder %s24, %s25
    %p36 = scmp.eq.s32.totalorder %s16, 0
    %p37 = por %p35, %p36
    %p38 = scmp.ne.s32.totalorder %s24, %s25
    %p39 = scmp.eq.s32.totalorder %s17, 1
    %p40 = por %p38, %p39
    %p42 = scmp.ne.s32.totalorder %s25, %s41
    %p43 = scmp.eq.s32.totalorder %s17, 0
    %p44 = por %p42, %p43
    %s46 = sadd.s32 %s45, 1
    %p49 = scmp.eq.s32.totalorder %s11, 1
    %p50 = scmp.ne.s32.totalorder %s45, %s47
    %p51 = scmp.eq.s32.totalorder %s11, 0
    %p52 = por %p50, %p51
    %p53 = scmp.ne.s32.totalorder %s45, %s47
    %p54 = scmp.eq.s32.totalorder %s16, 1
    %p55 = por %p53, %p54
    %p56 = scmp.ne.s32.totalorder %s47, %s48
    %p57 = scmp.eq.s32.totalorder %s16, 0
    %p58 = por %p56, %p57
    %p59 = scmp.ne.s32.totalorder %s47, %s48
    %p60 = scmp.eq.s32.totalorder %s17, 1
    %p61 = por %p59, %p60
    %p63 = scmp.ne.s32.totalorder %s48, %s62
    %p64 = scmp.eq.s32.totalorder %s17, 0
    %p65 = por %p63, %p64
    %s67 = sadd.s32 %s66, 1
    %p70 = scmp.eq.s32.totalorder %s11, 1
    %p71 = scmp.ne.s32.totalorder %s66, %s68
    %p72 = scmp.eq.s32.totalorder %s11, 0
    %p73 = por %p71, %p72
    %p74 = scmp.ne.s32.totalorder %s66, %s68
    %p75 = scmp.eq.s32.totalorder %s16, 1
    %p76 = por %p74, %p75
    %p77 = scmp.ne.s32.totalorder %s68, %s69
    %p78 = scmp.eq.s32.totalorder %s16, 0
    %p79 = por %p77, %p78
    %p80 = scmp.ne.s32.totalorder %s68, %s69
    %p81 = scmp.eq.s32.totalorder %s17, 1
    %p82 = por %p80, %p81
    %p84 = scmp.ne.s32.totalorder %s69, %s83
    %p85 = scmp.eq.s32.totalorder %s17, 0
    %p86 = por %p84, %p85
    %s88 = sadd.s32 %s87, 1
    %p91 = scmp.eq.s32.totalorder %s11, 1
    %p92 = scmp.ne.s32.totalorder %s87, %s89
    %p93 = scmp.eq.s32.totalorder %s11, 0
    %p94 = por %p92, %p93
    %p95 = scmp.ne.s32.totalorder %s87, %s89
    %p96 = scmp.eq.s32.totalorder %s16, 1
    %p97 = por %p95, %p96
    %p98 = scmp.ne.s32.totalorder %s89, %s90
    %p99 = scmp.eq.s32.totalorder %s16, 0
    %p100 = por %p98, %p99
    %p101 = scmp.ne.s32.totalorder %s89, %s90
    %p102 = scmp.eq.s32.totalorder %s17, 1
    %p103 = por %p101, %p102
    %p105 = scmp.ne.s32.totalorder %s90, %s104
    %p106 = scmp.eq.s32.totalorder %s17, 0
    %p107 = por %p105, %p106
    %s109 = sadd.s32 %s108, 1
    %p112 = scmp.eq.s32.totalorder %s11, 1
    %p113 = scmp.ne.s32.totalorder %s108, %s110
    %p114 = scmp.eq.s32.totalorder %s11, 0
    %p115 = por %p113, %p114
    %p116 = scmp.ne.s32.totalorder %s108, %s110
    %p117 = scmp.eq.s32.totalorder %s16, 1
    %p118 = por %p116, %p117
    %p119 = scmp.ne.s32.totalorder %s110, %s111
    %p120 = scmp.eq.s32.totalorder %s16, 0
    %p121 = por %p119, %p120
    %p122 = scmp.ne.s32.totalorder %s110, %s111
    %p123 = scmp.eq.s32.totalorder %s17, 1
    %p124 = por %p122, %p123
    %p126 = scmp.ne.s32.totalorder %s111, %s125
    %p127 = scmp.eq.s32.totalorder %s17, 0
    %p128 = por %p126, %p127
    %s129 = ssub.s32 %s11, %s18
    %p130 = scmp.eq.s32.totalorder %s129, 0
    %s132 = sadd.s32 %s131, 1
    %s133 = scalar_select %p130, %s131, %s132
    %p136 = pneg %p130
    %p137 = scmp.eq.s32.totalorder %s11, 1
    %p138 = por %p136, %p137
    %p139 = scmp.ne.s32.totalorder %s131, %s134
    %p140 = scmp.eq.s32.totalorder %s11, 0
    %p141 = por %p139, %p140
    %p142 = scmp.ne.s32.totalorder %s131, %s134
    %p143 = scmp.eq.s32.totalorder %s16, 1
    %p144 = por %p142, %p143
    %p145 = scmp.ne.s32.totalorder %s134, %s135
    %p146 = scmp.eq.s32.totalorder %s16, 0
    %p147 = por %p145, %p146
    %p148 = scmp.ne.s32.totalorder %s134, %s135
    %p149 = scmp.eq.s32.totalorder %s17, 1
    %p150 = por %p148, %p149
    %p152 = scmp.ne.s32.totalorder %s135, %s151
    %p153 = scmp.eq.s32.totalorder %s17, 0
    %p154 = por %p152, %p153
    %p155 = scmp.le.s32.totalorder 1, %s11
    %p156 = scmp.lt.s32.totalorder %s11, 3
    %p157 = pnand %p155, %p156
    %p158 = pneg %p157
    // Predicated region
    $region9: #{cnn_forward.5} parent=5 // pred_check
      _
    $region10: #{cnn_forward.5} parent=5 // pred_check_branch
      %160 = sbr.rel (%p157) target = $region12
    $region11: #{cnn_forward.5} parent=5 // pred_region
      %s161 = ssub.s32 %s11, 1
      // Predicated region
      $region13: #{cnn_forward.5} parent=11 // pred_check
        %p162 = pneg %p58
      $region14: #{cnn_forward.5} parent=11 // pred_check_branch
        %164 = sbr.rel (%p162) target = $region16
      $region15: #{cnn_forward.5} parent=11 // pred_region
        _
      $region16: #{cnn_forward.5} parent=11 // pred_fallthru
        _
      // Predicated region
      $region17: #{cnn_forward.5} parent=11 // pred_check
        %p165 = pneg %p79
      $region18: #{cnn_forward.5} parent=11 // pred_check_branch
        %167 = sbr.rel (%p165) target = $region20
      $region19: #{cnn_forward.5} parent=11 // pred_region
        _
      $region20: #{cnn_forward.5} parent=11 // pred_fallthru
        _
      // Predicated region
      $region21: #{cnn_forward.5} parent=11 // pred_check
        %p168 = pneg %p100
      $region22: #{cnn_forward.5} parent=11 // pred_check_branch
        %170 = sbr.rel (%p168) target = $region24
      $region23: #{cnn_forward.5} parent=11 // pred_region
        _
      $region24: #{cnn_forward.5} parent=11 // pred_fallthru
        _
      // Predicated region
      $region25: #{cnn_forward.5} parent=11 // pred_check
        %p171 = pneg %p121
      $region26: #{cnn_forward.5} parent=11 // pred_check_branch
        %173 = sbr.rel (%p171) target = $region28
      $region27: #{cnn_forward.5} parent=11 // pred_region
        _
      $region28: #{cnn_forward.5} parent=11 // pred_fallthru
        _
    $region12: #{cnn_forward.5} parent=5 // pred_fallthru
      _
    %p174 = scmp.lt.s32.totalorder %s11, 2
    // Predicated region
    $region29: #{cnn_forward.5} parent=5 // pred_check
      %p175 = pneg %p174
    $region30: #{cnn_forward.5} parent=5 // pred_check_branch
      %177 = sbr.rel (%p175) target = $region32
    $region31: #{cnn_forward.5} parent=5 // pred_region
      // Predicated region
      $region33: #{cnn_forward.5} parent=31 // pred_check
        %p178 = pneg %p31
      $region34: #{cnn_forward.5} parent=31 // pred_check_branch
        %180 = sbr.rel (%p178) target = $region36
      $region35: #{cnn_forward.5} parent=31 // pred_region
        %p181 = scmp.lt.s32.totalorder %s11, 1
        %s182 = scalar_select %p181, %s11, 1
        %s183 = smul.addr %s182, 25
        %s184 = smul.addr %s183, 4
        %s185 = scalar_lea.vmem %s0, %s184
      $region36: #{cnn_forward.5} parent=31 // pred_fallthru
        _
    $region32: #{cnn_forward.5} parent=5 // pred_fallthru
      _
    %p186 = scmp.le.s32.totalorder 1, %s11
    %p187 = scmp.lt.s32.totalorder %s11, 3
    %p188 = pnand %p186, %p187
    %p189 = pneg %p188
    // Predicated region
    $region37: #{cnn_forward.5} parent=5 // pred_check
      _
    $region38: #{cnn_forward.5} parent=5 // pred_check_branch
      %191 = sbr.rel (%p188) target = $region40
    $region39: #{cnn_forward.5} parent=5 // pred_region
      %s192 = ssub.s32 %s11, 1
      %p193 = scmp.lt.s32.totalorder %s16, 1
      %s194 = scalar_select %p193, %s16, 1
      %s195 = smul.addr %s194, 25
      %s196 = smul.addr %s195, 4
      %s197 = scalar_lea.vmem %s0, %s196
      %p198 = pneg %p37
      %p199 = pneg %p34
      %p200 = pneg %p58
      %p201 = pneg %p55
      %p202 = pneg %p79
      %p203 = pneg %p76
      %p204 = pneg %p100
      %p205 = pneg %p97
      %p206 = pneg %p121
      %p207 = pneg %p118
      %p208 = pneg %p147
      %p209 = pneg %p144
      %p210 = scmp.lt.s32.totalorder %s16, 1
      %s211 = scalar_select %p210, %s16, 1
      %s212 = smul.addr %s211, 8
      %s213 = scalar_lea.vmem %s5, %s212
      %p214 = scmp.lt.s32.totalorder %s16, 1
      %s215 = scalar_select %p214, %s16, 1
      %s216 = smul.addr %s215, 25
      %s217 = smul.addr %s216, 4
      %s218 = scalar_lea.vmem %s0, %s217
      %p219 = scmp.lt.s32.totalorder %s16, 1
      %s220 = scalar_select %p219, %s16, 1
      %s221 = smul.addr %s220, 8
      %s222 = scalar_lea.vmem %s5, %s221
      %v224 = vld [vmem:[%s218] sm:$0xff]
      %v225 = vld [vmem:[%s218 + $0x8] sm:$0xff]
      %v226 = vld [vmem:[%s218 + $0x10] sm:$0xff]
      %v227 = vld [vmem:[%s218 + $0x18] sm:$0xff]
      %v228 = vld [vmem:[%s218 + $0x20] sm:$0xff]
      %v229 = vld [vmem:[%s218 + $0x28] sm:$0xff]
      %v230 = vld [vmem:[%s218 + $0x30] sm:$0xff]
      %v231 = vld [vmem:[%s218 + $0x38] sm:$0xff]
      %v232 = vld [vmem:[%s218 + $0x40] sm:$0xff]
      %v233 = vld [vmem:[%s218 + $0x48] sm:$0xff]
      %v234 = vld [vmem:[%s218 + $0x50] sm:$0xff]
      %v235 = vld [vmem:[%s218 + $0x58] sm:$0xff]
      %v236 = vld [vmem:[%s218 + $0x60] sm:$0xf]
      %v237 = vld [vmem:[%s1] sm:$0xf]
      %v238 = vld [vmem:[%s1 + $0x4] sm:$0xf]
      %v239 = vld [vmem:[%s1 + $0x8] sm:$0xf]
      %v240 = vld [vmem:[%s1 + $0xc] sm:$0xf]
      %v241 = vld [vmem:[%s1 + $0x10] sm:$0xf]
      %v242 = vld [vmem:[%s1 + $0x14] sm:$0xf]
      %v243 = vld [vmem:[%s1 + $0x18] sm:$0xf]
      %v244 = vld [vmem:[%s1 + $0x1c] sm:$0xf]
      %v245 = vld [vmem:[%s1 + $0x20] sm:$0xf]
      %v246 = vld [vmem:[%s1 + $0x24] sm:$0xf]
      %v247 = vld [vmem:[%s1 + $0x28] sm:$0xf]
      %v248 = vld [vmem:[%s1 + $0x2c] sm:$0xf]
      %v249 = vld [vmem:[%s1 + $0x30] sm:$0xf]
      %v250 = vld [vmem:[%s1 + $0x34] sm:$0xf]
      %v251 = vld [vmem:[%s1 + $0x38] sm:$0xf]
      %v252 = vld [vmem:[%s1 + $0x3c] sm:$0xf]
      %v253 = vld [vmem:[%s1 + $0x40] sm:$0xf]
      %v254 = vld [vmem:[%s1 + $0x44] sm:$0xf]
      %v255 = vld [vmem:[%s1 + $0x48] sm:$0xf]
      %v256 = vld [vmem:[%s1 + $0x4c] sm:$0xf]
      %v257 = vld [vmem:[%s1 + $0x50] sm:$0xf]
      %v258 = vld [vmem:[%s1 + $0x54] sm:$0xf]
      %v259 = vld [vmem:[%s1 + $0x58] sm:$0xf]
      %v260 = vld [vmem:[%s1 + $0x5c] sm:$0xf]
      %v261 = vld [vmem:[%s1 + $0x60] sm:$0xf]
      %v262 = vld [vmem:[%s1 + $0x64] sm:$0xf]
      %v263 = vld [vmem:[%s1 + $0x68] sm:$0xf]
      %v264 = vld [vmem:[%s1 + $0x6c] sm:$0xf]
      %v265 = vld [vmem:[%s1 + $0x70] sm:$0xf]
      %v266 = vld [vmem:[%s1 + $0x74] sm:$0xf]
      %v267 = vld [vmem:[%s1 + $0x78] sm:$0xf]
      %v268 = vld [vmem:[%s1 + $0x7c] sm:$0xf]
      %v269 = vld [vmem:[%s1 + $0x80] sm:$0xf]
      %v270 = vld [vmem:[%s1 + $0x84] sm:$0xf]
      %v271 = vld [vmem:[%s1 + $0x88] sm:$0xf]
      %v272 = vld [vmem:[%s1 + $0x8c] sm:$0xf]
      %v273 = vld [vmem:[%s1 + $0x90] sm:$0xf]
      %v274 = vld [vmem:[%s1 + $0x94] sm:$0xf]
      %v275 = vld [vmem:[%s1 + $0x98] sm:$0xf]
      %v276 = vld [vmem:[%s1 + $0x9c] sm:$0xf]
      %v277 = vld [vmem:[%s1 + $0xa0] sm:$0xf]
      %v278 = vld [vmem:[%s1 + $0xa4] sm:$0xf]
      %v279 = vld [vmem:[%s1 + $0xa8] sm:$0xf]
      %v280 = vld [vmem:[%s1 + $0xac] sm:$0xf]
      %v281 = vld [vmem:[%s1 + $0xb0] sm:$0xf]
      %v282 = vld [vmem:[%s1 + $0xb4] sm:$0xf]
      %v283 = vld [vmem:[%s1 + $0xb8] sm:$0xf]
      %v284 = vld [vmem:[%s1 + $0xbc] sm:$0xf]
      %v285 = vld [vmem:[%s1 + $0xc0] sm:$0xf]
      %v286 = vld [vmem:[%s1 + $0xc4] sm:$0xf]
      %v287 = vld [vmem:[%s1 + $0xc8] sm:$0xf]
      %v288 = vld [vmem:[%s1 + $0xcc] sm:$0xf]
      %v289 = vld [vmem:[%s1 + $0xd0] sm:$0xf]
      %v290 = vld [vmem:[%s1 + $0xd4] sm:$0xf]
      %v291 = vld [vmem:[%s1 + $0xd8] sm:$0xf]
      %v292 = vld [vmem:[%s1 + $0xdc] sm:$0xf]
      %v293 = vld [vmem:[%s1 + $0xe0] sm:$0xf]
      %v294 = vld [vmem:[%s1 + $0xe4] sm:$0xf]
      %v295 = vld [vmem:[%s1 + $0xe8] sm:$0xf]
      %v296 = vld [vmem:[%s1 + $0xec] sm:$0xf]
      %v297 = vld [vmem:[%s1 + $0xf0] sm:$0xf]
      %v298 = vld [vmem:[%s1 + $0xf4] sm:$0xf]
      %v299 = vld [vmem:[%s1 + $0xf8] sm:$0xf]
      %v300 = vld [vmem:[%s1 + $0xfc] sm:$0xf]
      %v301 = vld [vmem:[%s1 + $0x100] sm:$0xf]
      %v302 = vld [vmem:[%s1 + $0x104] sm:$0xf]
      %v303 = vld [vmem:[%s1 + $0x108] sm:$0xf]
      %v304 = vld [vmem:[%s1 + $0x10c] sm:$0xf]
      %v305 = vld [vmem:[%s1 + $0x110] sm:$0xf]
      %v306 = vld [vmem:[%s1 + $0x114] sm:$0xf]
      %v307 = vld [vmem:[%s1 + $0x118] sm:$0xf]
      %v308 = vld [vmem:[%s1 + $0x11c] sm:$0xf]
      %v309 = vld [vmem:[%s1 + $0x120] sm:$0xf]
      %v310 = vld [vmem:[%s1 + $0x124] sm:$0xf]
      %v311 = vld [vmem:[%s1 + $0x128] sm:$0xf]
      %v312 = vld [vmem:[%s1 + $0x12c] sm:$0xf]
      %v313 = vld [vmem:[%s1 + $0x130] sm:$0xf]
      %v314 = vld [vmem:[%s1 + $0x134] sm:$0xf]
      %v315 = vld [vmem:[%s1 + $0x138] sm:$0xf]
      %v316 = vld [vmem:[%s1 + $0x13c] sm:$0xf]
      %v317 = vld [vmem:[%s1 + $0x140] sm:$0xf]
      %v318 = vld [vmem:[%s1 + $0x144] sm:$0xf]
      %v319 = vld [vmem:[%s1 + $0x148] sm:$0xf]
      %v320 = vld [vmem:[%s1 + $0x14c] sm:$0xf]
      %v321 = vld [vmem:[%s1 + $0x150] sm:$0xf]
      %v322 = vld [vmem:[%s1 + $0x154] sm:$0xf]
      %v323 = vld [vmem:[%s1 + $0x158] sm:$0xf]
      %v324 = vld [vmem:[%s1 + $0x15c] sm:$0xf]
      %v325 = vld [vmem:[%s1 + $0x160] sm:$0xf]
      %v326 = vld [vmem:[%s1 + $0x164] sm:$0xf]
      %v327 = vld [vmem:[%s1 + $0x168] sm:$0xf]
      %v328 = vld [vmem:[%s1 + $0x16c] sm:$0xf]
      %v329 = vld [vmem:[%s1 + $0x170] sm:$0xf]
      %v330 = vld [vmem:[%s1 + $0x174] sm:$0xf]
      %v331 = vld [vmem:[%s1 + $0x178] sm:$0xf]
      %v332 = vld [vmem:[%s1 + $0x17c] sm:$0xf]
      %v333 = vld [vmem:[%s1 + $0x180] sm:$0xf]
      %v334 = vld [vmem:[%s1 + $0x184] sm:$0xf]
      %v335 = vld [vmem:[%s1 + $0x188] sm:$0xf]
      %v336 = vld [vmem:[%s1 + $0x18c] sm:$0xf]
      %v337 = vld [vmem:[%s1 + $0x190] sm:$0xf]
      %v338 = vld [vmem:[%s1 + $0x194] sm:$0xf]
      %v339 = vld [vmem:[%s1 + $0x198] sm:$0xf]
      %v340 = vld [vmem:[%s1 + $0x19c] sm:$0xf]
      %v341 = vld [vmem:[%s1 + $0x1a0] sm:$0xf]
      %v342 = vld [vmem:[%s1 + $0x1a4] sm:$0xf]
      %v343 = vld [vmem:[%s1 + $0x1a8] sm:$0xf]
      %v344 = vld [vmem:[%s1 + $0x1ac] sm:$0xf]
      %v345 = vld [vmem:[%s1 + $0x1b0] sm:$0xf]
      %v346 = vld [vmem:[%s1 + $0x1b4] sm:$0xf]
      %v347 = vld [vmem:[%s1 + $0x1b8] sm:$0xf]
      %v348 = vld [vmem:[%s1 + $0x1bc] sm:$0xf]
      %v349 = vld [vmem:[%s1 + $0x1c0] sm:$0xf]
      %v350 = vld [vmem:[%s1 + $0x1c4] sm:$0xf]
      %v351 = vld [vmem:[%s1 + $0x1c8] sm:$0xf]
      %v352 = vld [vmem:[%s1 + $0x1cc] sm:$0xf]
      %v353 = vld [vmem:[%s1 + $0x1d0] sm:$0xf]
      %v354 = vld [vmem:[%s1 + $0x1d4] sm:$0xf]
      %v355 = vld [vmem:[%s1 + $0x1d8] sm:$0xf]
      %v356 = vld [vmem:[%s1 + $0x1dc] sm:$0xf]
      %v357 = vld [vmem:[%s1 + $0x1e0] sm:$0xf]
      %v358 = vld [vmem:[%s1 + $0x1e4] sm:$0xf]
      %v359 = vld [vmem:[%s1 + $0x1e8] sm:$0xf]
      %v360 = vld [vmem:[%s1 + $0x1ec] sm:$0xf]
      %v361 = vld [vmem:[%s1 + $0x1f0] sm:$0xf]
      %v362 = vld [vmem:[%s1 + $0x1f4] sm:$0xf]
      %v363 = vld [vmem:[%s1 + $0x1f8] sm:$0xf]
      %v364 = vld [vmem:[%s1 + $0x1fc] sm:$0xf]
      %v365 = vld [vmem:[%s1 + $0x200] sm:$0xf]
      %v366 = vld [vmem:[%s1 + $0x204] sm:$0xf]
      %v367 = vld [vmem:[%s1 + $0x208] sm:$0xf]
      %v368 = vld [vmem:[%s1 + $0x20c] sm:$0xf]
      %v369 = vld [vmem:[%s1 + $0x210] sm:$0xf]
      %v370 = vld [vmem:[%s1 + $0x214] sm:$0xf]
      %v371 = vld [vmem:[%s1 + $0x218] sm:$0xf]
      %v372 = vld [vmem:[%s1 + $0x21c] sm:$0xf]
      %v373 = vld [vmem:[%s1 + $0x220] sm:$0xf]
      %v374 = vld [vmem:[%s1 + $0x224] sm:$0xf]
      %v375 = vld [vmem:[%s1 + $0x228] sm:$0xf]
      %v376 = vld [vmem:[%s1 + $0x22c] sm:$0xf]
      %v377 = vld [vmem:[%s1 + $0x230] sm:$0xf]
      %v378 = vld [vmem:[%s1 + $0x234] sm:$0xf]
      %v379 = vld [vmem:[%s1 + $0x238] sm:$0xf]
      %v380 = vld [vmem:[%s1 + $0x23c] sm:$0xf]
      %v381 = vld [vmem:[%s1 + $0x240] sm:$0xf]
      %v382 = vld [vmem:[%s1 + $0x244] sm:$0xf]
      %v383 = vld [vmem:[%s1 + $0x248] sm:$0xf]
      %v384 = vld [vmem:[%s1 + $0x24c] sm:$0xf]
      %v385 = vld [vmem:[%s1 + $0x250] sm:$0xf]
      %v386 = vld [vmem:[%s1 + $0x254] sm:$0xf]
      %v387 = vld [vmem:[%s1 + $0x258] sm:$0xf]
      %v388 = vld [vmem:[%s1 + $0x25c] sm:$0xf]
      %v389 = vld [vmem:[%s1 + $0x260] sm:$0xf]
      %v390 = vld [vmem:[%s1 + $0x264] sm:$0xf]
      %v391 = vld [vmem:[%s1 + $0x268] sm:$0xf]
      %v392 = vld [vmem:[%s1 + $0x26c] sm:$0xf]
      %v393 = vld [vmem:[%s1 + $0x270] sm:$0xf]
      %v394 = vld [vmem:[%s1 + $0x274] sm:$0xf]
      %v395 = vld [vmem:[%s1 + $0x278] sm:$0xf]
      %v396 = vld [vmem:[%s1 + $0x27c] sm:$0xf]
      %v397 = vld [vmem:[%s1 + $0x280] sm:$0xf]
      %v398 = vld [vmem:[%s1 + $0x284] sm:$0xf]
      %v399 = vld [vmem:[%s1 + $0x288] sm:$0xf]
      %v400 = vld [vmem:[%s1 + $0x28c] sm:$0xf]
      %v401 = vld [vmem:[%s1 + $0x290] sm:$0xf]
      %v402 = vld [vmem:[%s1 + $0x294] sm:$0xf]
      %v403 = vld [vmem:[%s1 + $0x298] sm:$0xf]
      %v404 = vld [vmem:[%s1 + $0x29c] sm:$0xf]
      %v405 = vld [vmem:[%s1 + $0x2a0] sm:$0xf]
      %v406 = vld [vmem:[%s1 + $0x2a4] sm:$0xf]
      %v407 = vld [vmem:[%s1 + $0x2a8] sm:$0xf]
      %v408 = vld [vmem:[%s1 + $0x2ac] sm:$0xf]
      %v409 = vld [vmem:[%s1 + $0x2b0] sm:$0xf]
      %v410 = vld [vmem:[%s1 + $0x2b4] sm:$0xf]
      %v411 = vld [vmem:[%s1 + $0x2b8] sm:$0xf]
      %v412 = vld [vmem:[%s1 + $0x2bc] sm:$0xf]
      %v413 = vld [vmem:[%s1 + $0x2c0] sm:$0xf]
      %v414 = vld [vmem:[%s1 + $0x2c4] sm:$0xf]
      %v415 = vld [vmem:[%s1 + $0x2c8] sm:$0xf]
      %v416 = vld [vmem:[%s1 + $0x2cc] sm:$0xf]
      %v417 = vld [vmem:[%s1 + $0x2d0] sm:$0xf]
      %v418 = vld [vmem:[%s1 + $0x2d4] sm:$0xf]
      %v419 = vld [vmem:[%s1 + $0x2d8] sm:$0xf]
      %v420 = vld [vmem:[%s1 + $0x2dc] sm:$0xf]
      %v421 = vld [vmem:[%s1 + $0x2e0] sm:$0xf]
      %v422 = vld [vmem:[%s1 + $0x2e4] sm:$0xf]
      %v423 = vld [vmem:[%s1 + $0x2e8] sm:$0xf]
      %v424 = vld [vmem:[%s1 + $0x2ec] sm:$0xf]
      %v425 = vld [vmem:[%s1 + $0x2f0] sm:$0xf]
      %v426 = vld [vmem:[%s1 + $0x2f4] sm:$0xf]
      %v427 = vld [vmem:[%s1 + $0x2f8] sm:$0xf]
      %v428 = vld [vmem:[%s1 + $0x2fc] sm:$0xf]
      %v429 = vld [vmem:[%s1 + $0x300] sm:$0xf]
      %v430 = vld [vmem:[%s1 + $0x304] sm:$0xf]
      %v431 = vld [vmem:[%s1 + $0x308] sm:$0xf]
      %v432 = vld [vmem:[%s1 + $0x30c] sm:$0xf]
      %v433 = vld [vmem:[%s1 + $0x310] sm:$0xf]
      %v434 = vld [vmem:[%s1 + $0x314] sm:$0xf]
      %v435 = vld [vmem:[%s1 + $0x318] sm:$0xf]
      %v436 = vld [vmem:[%s1 + $0x31c] sm:$0xf]
      %v437 = vld [vmem:[%s1 + $0x320] sm:$0xf]
      %v438 = vld [vmem:[%s1 + $0x324] sm:$0xf]
      %v439 = vld [vmem:[%s1 + $0x328] sm:$0xf]
      %v440 = vld [vmem:[%s1 + $0x32c] sm:$0xf]
      %v441 = vld [vmem:[%s1 + $0x330] sm:$0xf]
      %v442 = vld [vmem:[%s1 + $0x334] sm:$0xf]
      %v443 = vld [vmem:[%s1 + $0x338] sm:$0xf]
      %v444 = vld [vmem:[%s1 + $0x33c] sm:$0xf]
      %v445 = vld [vmem:[%s1 + $0x340] sm:$0xf]
      %v446 = vld [vmem:[%s1 + $0x344] sm:$0xf]
      %v447 = vld [vmem:[%s1 + $0x348] sm:$0xf]
      %v448 = vld [vmem:[%s1 + $0x34c] sm:$0xf]
      %v449 = vld [vmem:[%s1 + $0x350] sm:$0xf]
      %v450 = vld [vmem:[%s1 + $0x354] sm:$0xf]
      %v451 = vld [vmem:[%s1 + $0x358] sm:$0xf]
      %v452 = vld [vmem:[%s1 + $0x35c] sm:$0xf]
      %v453 = vld [vmem:[%s1 + $0x360] sm:$0xf]
      %v454 = vld [vmem:[%s1 + $0x364] sm:$0xf]
      %v455 = vld [vmem:[%s1 + $0x368] sm:$0xf]
      %v456 = vld [vmem:[%s1 + $0x36c] sm:$0xf]
      %v457 = vld [vmem:[%s1 + $0x370] sm:$0xf]
      %v458 = vld [vmem:[%s1 + $0x374] sm:$0xf]
      %v459 = vld [vmem:[%s1 + $0x378] sm:$0xf]
      %v460 = vld [vmem:[%s1 + $0x37c] sm:$0xf]
      %v461 = vld [vmem:[%s1 + $0x380] sm:$0xf]
      %v462 = vld [vmem:[%s1 + $0x384] sm:$0xf]
      %v463 = vld [vmem:[%s1 + $0x388] sm:$0xf]
      %v464 = vld [vmem:[%s1 + $0x38c] sm:$0xf]
      %v465 = vld [vmem:[%s1 + $0x390] sm:$0xf]
      %v466 = vld [vmem:[%s1 + $0x394] sm:$0xf]
      %v467 = vld [vmem:[%s1 + $0x398] sm:$0xf]
      %v468 = vld [vmem:[%s1 + $0x39c] sm:$0xf]
      %v469 = vld [vmem:[%s1 + $0x3a0] sm:$0xf]
      %v470 = vld [vmem:[%s1 + $0x3a4] sm:$0xf]
      %v471 = vld [vmem:[%s1 + $0x3a8] sm:$0xf]
      %v472 = vld [vmem:[%s1 + $0x3ac] sm:$0xf]
      %v473 = vld [vmem:[%s1 + $0x3b0] sm:$0xf]
      %v474 = vld [vmem:[%s1 + $0x3b4] sm:$0xf]
      %v475 = vld [vmem:[%s1 + $0x3b8] sm:$0xf]
      %v476 = vld [vmem:[%s1 + $0x3bc] sm:$0xf]
      %v477 = vld [vmem:[%s1 + $0x3c0] sm:$0xf]
      %v478 = vld [vmem:[%s1 + $0x3c4] sm:$0xf]
      %v479 = vld [vmem:[%s1 + $0x3c8] sm:$0xf]
      %v480 = vld [vmem:[%s1 + $0x3cc] sm:$0xf]
      %v481 = vld [vmem:[%s1 + $0x3d0] sm:$0xf]
      %v482 = vld [vmem:[%s1 + $0x3d4] sm:$0xf]
      %v483 = vld [vmem:[%s1 + $0x3d8] sm:$0xf]
      %v484 = vld [vmem:[%s1 + $0x3dc] sm:$0xf]
      %v485 = vld [vmem:[%s1 + $0x3e0] sm:$0xf]
      %v486 = vld [vmem:[%s1 + $0x3e4] sm:$0xf]
      %v487 = vld [vmem:[%s1 + $0x3e8] sm:$0xf]
      %v488 = vld [vmem:[%s1 + $0x3ec] sm:$0xf]
      %v489 = vld [vmem:[%s1 + $0x3f0] sm:$0xf]
      %v490 = vld [vmem:[%s1 + $0x3f4] sm:$0xf]
      %v491 = vld [vmem:[%s1 + $0x3f8] sm:$0xf]
      %v492 = vld [vmem:[%s1 + $0x3fc] sm:$0xf]
      %v493 = vld [vmem:[%s1 + $0x400] sm:$0xf]
      %v494 = vld [vmem:[%s1 + $0x404] sm:$0xf]
      %v495 = vld [vmem:[%s1 + $0x408] sm:$0xf]
      %v496 = vld [vmem:[%s1 + $0x40c] sm:$0xf]
      %v497 = vld [vmem:[%s1 + $0x410] sm:$0xf]
      %v498 = vld [vmem:[%s1 + $0x414] sm:$0xf]
      %v499 = vld [vmem:[%s1 + $0x418] sm:$0xf]
      %v500 = vld [vmem:[%s1 + $0x41c] sm:$0xf]
      %v501 = vld [vmem:[%s1 + $0x420] sm:$0xf]
      %v502 = vld [vmem:[%s1 + $0x424] sm:$0xf]
      %v503 = vld [vmem:[%s1 + $0x428] sm:$0xf]
      %v504 = vld [vmem:[%s1 + $0x42c] sm:$0xf]
      %v505 = vld [vmem:[%s1 + $0x430] sm:$0xf]
      %v506 = vld [vmem:[%s1 + $0x434] sm:$0xf]
      %v507 = vld [vmem:[%s1 + $0x438] sm:$0xf]
      %v508 = vld [vmem:[%s1 + $0x43c] sm:$0xf]
      %v509 = vld [vmem:[%s1 + $0x440] sm:$0xf]
      %v510 = vld [vmem:[%s1 + $0x444] sm:$0xf]
      %v511 = vld [vmem:[%s1 + $0x448] sm:$0xf]
      %v512 = vld [vmem:[%s1 + $0x44c] sm:$0xf]
      %v513 = vld [vmem:[%s1 + $0x450] sm:$0xf]
      %v514 = vld [vmem:[%s1 + $0x454] sm:$0xf]
      %v515 = vld [vmem:[%s1 + $0x458] sm:$0xf]
      %v516 = vld [vmem:[%s1 + $0x45c] sm:$0xf]
      %v517 = vld [vmem:[%s1 + $0x460] sm:$0xf]
      %v518 = vld [vmem:[%s1 + $0x464] sm:$0xf]
      %v519 = vld [vmem:[%s1 + $0x468] sm:$0xf]
      %v520 = vld [vmem:[%s1 + $0x46c] sm:$0xf]
      %v521 = vld [vmem:[%s1 + $0x470] sm:$0xf]
      %v522 = vld [vmem:[%s1 + $0x474] sm:$0xf]
      %v523 = vld [vmem:[%s1 + $0x478] sm:$0xf]
      %v524 = vld [vmem:[%s1 + $0x47c] sm:$0xf]
      %v525 = vld [vmem:[%s1 + $0x480] sm:$0xf]
      %v526 = vld [vmem:[%s1 + $0x484] sm:$0xf]
      %v527 = vld [vmem:[%s1 + $0x488] sm:$0xf]
      %v528 = vld [vmem:[%s1 + $0x48c] sm:$0xf]
      %v529 = vld [vmem:[%s1 + $0x490] sm:$0xf]
      %v530 = vld [vmem:[%s1 + $0x494] sm:$0xf]
      %v531 = vld [vmem:[%s1 + $0x498] sm:$0xf]
      %v532 = vld [vmem:[%s1 + $0x49c] sm:$0xf]
      %v533 = vld [vmem:[%s1 + $0x4a0] sm:$0xf]
      %v534 = vld [vmem:[%s1 + $0x4a4] sm:$0xf]
      %v535 = vld [vmem:[%s1 + $0x4a8] sm:$0xf]
      %v536 = vld [vmem:[%s1 + $0x4ac] sm:$0xf]
      %v537 = vld [vmem:[%s1 + $0x4b0] sm:$0xf]
      %v538 = vld [vmem:[%s1 + $0x4b4] sm:$0xf]
      %v539 = vld [vmem:[%s1 + $0x4b8] sm:$0xf]
      %v540 = vld [vmem:[%s1 + $0x4bc] sm:$0xf]
      %v541 = vld [vmem:[%s1 + $0x4c0] sm:$0xf]
      %v542 = vld [vmem:[%s1 + $0x4c4] sm:$0xf]
      %v543 = vld [vmem:[%s1 + $0x4c8] sm:$0xf]
      %v544 = vld [vmem:[%s1 + $0x4cc] sm:$0xf]
      %v545 = vld [vmem:[%s1 + $0x4d0] sm:$0xf]
      %v546 = vld [vmem:[%s1 + $0x4d4] sm:$0xf]
      %v547 = vld [vmem:[%s1 + $0x4d8] sm:$0xf]
      %v548 = vld [vmem:[%s1 + $0x4dc] sm:$0xf]
      %v549 = vld [vmem:[%s1 + $0x4e0] sm:$0xf]
      %v550 = vld [vmem:[%s1 + $0x4e4] sm:$0xf]
      %v551 = vld [vmem:[%s1 + $0x4e8] sm:$0xf]
      %v552 = vld [vmem:[%s1 + $0x4ec] sm:$0xf]
      %v553 = vld [vmem:[%s1 + $0x4f0] sm:$0xf]
      %v554 = vld [vmem:[%s1 + $0x4f4] sm:$0xf]
      %v555 = vld [vmem:[%s1 + $0x4f8] sm:$0xf]
      %v556 = vld [vmem:[%s1 + $0x4fc] sm:$0xf]
      %v557 = vld [vmem:[%s1 + $0x500] sm:$0xf]
      %v558 = vld [vmem:[%s1 + $0x504] sm:$0xf]
      %v559 = vld [vmem:[%s1 + $0x508] sm:$0xf]
      %v560 = vld [vmem:[%s1 + $0x50c] sm:$0xf]
      %v561 = vld [vmem:[%s1 + $0x510] sm:$0xf]
      %v562 = vld [vmem:[%s1 + $0x514] sm:$0xf]
      %v563 = vld [vmem:[%s1 + $0x518] sm:$0xf]
      %v564 = vld [vmem:[%s1 + $0x51c] sm:$0xf]
      %v565 = vld [vmem:[%s1 + $0x520] sm:$0xf]
      %v566 = vld [vmem:[%s1 + $0x524] sm:$0xf]
      %v567 = vld [vmem:[%s1 + $0x528] sm:$0xf]
      %v568 = vld [vmem:[%s1 + $0x52c] sm:$0xf]
      %v569 = vld [vmem:[%s1 + $0x530] sm:$0xf]
      %v570 = vld [vmem:[%s1 + $0x534] sm:$0xf]
      %v571 = vld [vmem:[%s1 + $0x538] sm:$0xf]
      %v572 = vld [vmem:[%s1 + $0x53c] sm:$0xf]
      %v573 = vld [vmem:[%s1 + $0x540] sm:$0xf]
      %v574 = vld [vmem:[%s1 + $0x544] sm:$0xf]
      %v575 = vld [vmem:[%s1 + $0x548] sm:$0xf]
      %v576 = vld [vmem:[%s1 + $0x54c] sm:$0xf]
      %v577 = vld [vmem:[%s1 + $0x550] sm:$0xf]
      %v578 = vld [vmem:[%s1 + $0x554] sm:$0xf]
      %v579 = vld [vmem:[%s1 + $0x558] sm:$0xf]
      %v580 = vld [vmem:[%s1 + $0x55c] sm:$0xf]
      %v581 = vld [vmem:[%s1 + $0x560] sm:$0xf]
      %v582 = vld [vmem:[%s1 + $0x564] sm:$0xf]
      %v583 = vld [vmem:[%s1 + $0x568] sm:$0xf]
      %v584 = vld [vmem:[%s1 + $0x56c] sm:$0xf]
      %v585 = vld [vmem:[%s1 + $0x570] sm:$0xf]
      %v586 = vld [vmem:[%s1 + $0x574] sm:$0xf]
      %v587 = vld [vmem:[%s1 + $0x578] sm:$0xf]
      %v588 = vld [vmem:[%s1 + $0x57c] sm:$0xf]
      %v589 = vld [vmem:[%s1 + $0x580] sm:$0xf]
      %v590 = vld [vmem:[%s1 + $0x584] sm:$0xf]
      %v591 = vld [vmem:[%s1 + $0x588] sm:$0xf]
      %v592 = vld [vmem:[%s1 + $0x58c] sm:$0xf]
      %v593 = vld [vmem:[%s1 + $0x590] sm:$0xf]
      %v594 = vld [vmem:[%s1 + $0x594] sm:$0xf]
      %v595 = vld [vmem:[%s1 + $0x598] sm:$0xf]
      %v596 = vld [vmem:[%s1 + $0x59c] sm:$0xf]
      %v597 = vld [vmem:[%s1 + $0x5a0] sm:$0xf]
      %v598 = vld [vmem:[%s1 + $0x5a4] sm:$0xf]
      %v599 = vld [vmem:[%s1 + $0x5a8] sm:$0xf]
      %v600 = vld [vmem:[%s1 + $0x5ac] sm:$0xf]
      %v601 = vld [vmem:[%s1 + $0x5b0] sm:$0xf]
      %v602 = vld [vmem:[%s1 + $0x5b4] sm:$0xf]
      %v603 = vld [vmem:[%s1 + $0x5b8] sm:$0xf]
      %v604 = vld [vmem:[%s1 + $0x5bc] sm:$0xf]
      %v605 = vld [vmem:[%s1 + $0x5c0] sm:$0xf]
      %v606 = vld [vmem:[%s1 + $0x5c4] sm:$0xf]
      %v607 = vld [vmem:[%s1 + $0x5c8] sm:$0xf]
      %v608 = vld [vmem:[%s1 + $0x5cc] sm:$0xf]
      %v609 = vld [vmem:[%s1 + $0x5d0] sm:$0xf]
      %v610 = vld [vmem:[%s1 + $0x5d4] sm:$0xf]
      %v611 = vld [vmem:[%s1 + $0x5d8] sm:$0xf]
      %v612 = vld [vmem:[%s1 + $0x5dc] sm:$0xf]
      %v613 = vld [vmem:[%s1 + $0x5e0] sm:$0xf]
      %v614 = vld [vmem:[%s1 + $0x5e4] sm:$0xf]
      %v615 = vld [vmem:[%s1 + $0x5e8] sm:$0xf]
      %v616 = vld [vmem:[%s1 + $0x5ec] sm:$0xf]
      %v617 = vld [vmem:[%s1 + $0x5f0] sm:$0xf]
      %v618 = vld [vmem:[%s1 + $0x5f4] sm:$0xf]
      %v619 = vld [vmem:[%s1 + $0x5f8] sm:$0xf]
      %v620 = vld [vmem:[%s1 + $0x5fc] sm:$0xf]
      %v621 = vld [vmem:[%s1 + $0x600] sm:$0xf]
      %v622 = vld [vmem:[%s1 + $0x604] sm:$0xf]
      %v623 = vld [vmem:[%s1 + $0x608] sm:$0xf]
      %v624 = vld [vmem:[%s1 + $0x60c] sm:$0xf]
      %v625 = vld [vmem:[%s1 + $0x610] sm:$0xf]
      %v626 = vld [vmem:[%s1 + $0x614] sm:$0xf]
      %v627 = vld [vmem:[%s1 + $0x618] sm:$0xf]
      %v628 = vld [vmem:[%s1 + $0x61c] sm:$0xf]
      %v629 = vld [vmem:[%s2] sm:$0x1]
      %v631 = vperm.slane %v629, 0
      %v646 = vunpack.c.l.b16 %v224
      %v647 = vunpack.c.h.b16 %v224
      %v648 = vunpack.c.l.b16 %v225
      %v649 = vunpack.c.h.b16 %v225
      %v650 = vunpack.c.l.b16 %v226
      %v651 = vunpack.c.h.b16 %v226
      %v652 = vunpack.c.l.b16 %v227
      %v653 = vunpack.c.h.b16 %v227
      %v654 = vunpack.c.l.b16 %v228
      %v655 = vunpack.c.h.b16 %v228
      %v656 = vunpack.c.l.b16 %v229
      %v657 = vunpack.c.h.b16 %v229
      %v658 = vunpack.c.l.b16 %v230
      %v659 = vunpack.c.h.b16 %v230
      %v660 = vunpack.c.l.b16 %v231
      %v661 = vunpack.c.h.b16 %v231
      %v662 = vunpack.c.l.b16 %v232
      %v663 = vunpack.c.h.b16 %v232
      %v664 = vunpack.c.l.b16 %v233
      %v665 = vunpack.c.h.b16 %v233
      %v666 = vunpack.c.l.b16 %v234
      %v667 = vunpack.c.h.b16 %v234
      %v668 = vunpack.c.l.b16 %v235
      %v669 = vunpack.c.h.b16 %v235
      %v670 = vunpack.c.l.b16 %v236
      %v671 = vpack.c.b16 %v646, %v646
      %v672 = vpack.c.b16 %v647, %v647
      %v673 = vpack.c.b16 %v648, %v648
      %v674 = vpack.c.b16 %v649, %v649
      %v675 = vpack.c.b16 %v650, %v650
      %v676 = vpack.c.b16 %v651, %v651
      %v677 = vpack.c.b16 %v652, %v652
      %v678 = vpack.c.b16 %v653, %v653
      %v679 = vpack.c.b16 %v654, %v654
      %v680 = vpack.c.b16 %v655, %v655
      %v681 = vpack.c.b16 %v656, %v656
      %v682 = vpack.c.b16 %v657, %v657
      %v683 = vpack.c.b16 %v658, %v658
      %v684 = vpack.c.b16 %v659, %v659
      %v685 = vpack.c.b16 %v660, %v660
      %v686 = vpack.c.b16 %v661, %v661
      %v687 = vpack.c.b16 %v662, %v662
      %v688 = vpack.c.b16 %v663, %v663
      %v689 = vpack.c.b16 %v664, %v664
      %v690 = vpack.c.b16 %v665, %v665
      %v691 = vpack.c.b16 %v666, %v666
      %v692 = vpack.c.b16 %v667, %v667
      %v693 = vpack.c.b16 %v668, %v668
      %v694 = vpack.c.b16 %v669, %v669
      %v695 = vpack.c.b16 %v670, %v670
      %v1112 = vunpack.c.l.b16 %v237
      %v1113 = vunpack.c.l.b16 %v238
      %v1114 = vunpack.c.l.b16 %v239
      %v1115 = vunpack.c.l.b16 %v240
      %v1116 = vunpack.c.l.b16 %v241
      %v1117 = vunpack.c.l.b16 %v242
      %v1118 = vunpack.c.l.b16 %v243
      %v1119 = vunpack.c.l.b16 %v244
      %v1120 = vunpack.c.l.b16 %v245
      %v1121 = vunpack.c.l.b16 %v246
      %v1122 = vunpack.c.l.b16 %v247
      %v1123 = vunpack.c.l.b16 %v248
      %v1124 = vunpack.c.l.b16 %v249
      %v1125 = vunpack.c.l.b16 %v250
      %v1126 = vunpack.c.l.b16 %v251
      %v1127 = vunpack.c.l.b16 %v252
      %v1128 = vunpack.c.l.b16 %v253
      %v1129 = vunpack.c.l.b16 %v254
      %v1130 = vunpack.c.l.b16 %v255
      %v1131 = vunpack.c.l.b16 %v256
      %v1132 = vunpack.c.l.b16 %v257
      %v1133 = vunpack.c.l.b16 %v258
      %v1134 = vunpack.c.l.b16 %v259
      %v1135 = vunpack.c.l.b16 %v260
      %v1136 = vunpack.c.l.b16 %v261
      %v1137 = vunpack.c.l.b16 %v262
      %v1138 = vunpack.c.l.b16 %v263
      %v1139 = vunpack.c.l.b16 %v264
      %v1140 = vunpack.c.l.b16 %v265
      %v1141 = vunpack.c.l.b16 %v266
      %v1142 = vunpack.c.l.b16 %v267
      %v1143 = vunpack.c.l.b16 %v268
      %v1144 = vunpack.c.l.b16 %v269
      %v1145 = vunpack.c.l.b16 %v270
      %v1146 = vunpack.c.l.b16 %v271
      %v1147 = vunpack.c.l.b16 %v272
      %v1148 = vunpack.c.l.b16 %v273
      %v1149 = vunpack.c.l.b16 %v274
      %v1150 = vunpack.c.l.b16 %v275
      %v1151 = vunpack.c.l.b16 %v276
      %v1152 = vunpack.c.l.b16 %v277
      %v1153 = vunpack.c.l.b16 %v278
      %v1154 = vunpack.c.l.b16 %v279
      %v1155 = vunpack.c.l.b16 %v280
      %v1156 = vunpack.c.l.b16 %v281
      %v1157 = vunpack.c.l.b16 %v282
      %v1158 = vunpack.c.l.b16 %v283
      %v1159 = vunpack.c.l.b16 %v284
      %v1160 = vunpack.c.l.b16 %v285
      %v1161 = vunpack.c.l.b16 %v286
      %v1162 = vunpack.c.l.b16 %v287
      %v1163 = vunpack.c.l.b16 %v288
      %v1164 = vunpack.c.l.b16 %v289
      %v1165 = vunpack.c.l.b16 %v290
      %v1166 = vunpack.c.l.b16 %v291
      %v1167 = vunpack.c.l.b16 %v292
      %v1168 = vunpack.c.l.b16 %v293
      %v1169 = vunpack.c.l.b16 %v294
      %v1170 = vunpack.c.l.b16 %v295
      %v1171 = vunpack.c.l.b16 %v296
      %v1172 = vunpack.c.l.b16 %v297
      %v1173 = vunpack.c.l.b16 %v298
      %v1174 = vunpack.c.l.b16 %v299
      %v1175 = vunpack.c.l.b16 %v300
      %v1176 = vunpack.c.l.b16 %v301
      %v1177 = vunpack.c.l.b16 %v302
      %v1178 = vunpack.c.l.b16 %v303
      %v1179 = vunpack.c.l.b16 %v304
      %v1180 = vunpack.c.l.b16 %v305
      %v1181 = vunpack.c.l.b16 %v306
      %v1182 = vunpack.c.l.b16 %v307
      %v1183 = vunpack.c.l.b16 %v308
      %v1184 = vunpack.c.l.b16 %v309
      %v1185 = vunpack.c.l.b16 %v310
      %v1186 = vunpack.c.l.b16 %v311
      %v1187 = vunpack.c.l.b16 %v312
      %v1188 = vunpack.c.l.b16 %v313
      %v1189 = vunpack.c.l.b16 %v314
      %v1190 = vunpack.c.l.b16 %v315
      %v1191 = vunpack.c.l.b16 %v316
      %v1192 = vunpack.c.l.b16 %v317
      %v1193 = vunpack.c.l.b16 %v318
      %v1194 = vunpack.c.l.b16 %v319
      %v1195 = vunpack.c.l.b16 %v320
      %v1196 = vunpack.c.l.b16 %v321
      %v1197 = vunpack.c.l.b16 %v322
      %v1198 = vunpack.c.l.b16 %v323
      %v1199 = vunpack.c.l.b16 %v324
      %v1200 = vunpack.c.l.b16 %v325
      %v1201 = vunpack.c.l.b16 %v326
      %v1202 = vunpack.c.l.b16 %v327
      %v1203 = vunpack.c.l.b16 %v328
      %v1204 = vunpack.c.l.b16 %v329
      %v1205 = vunpack.c.l.b16 %v330
      %v1206 = vunpack.c.l.b16 %v331
      %v1207 = vunpack.c.l.b16 %v332
      %v1208 = vunpack.c.l.b16 %v333
      %v1209 = vunpack.c.l.b16 %v334
      %v1210 = vunpack.c.l.b16 %v335
      %v1211 = vunpack.c.l.b16 %v336
      %v1212 = vunpack.c.l.b16 %v337
      %v1213 = vunpack.c.l.b16 %v338
      %v1214 = vunpack.c.l.b16 %v339
      %v1215 = vunpack.c.l.b16 %v340
      %v1216 = vunpack.c.l.b16 %v341
      %v1217 = vunpack.c.l.b16 %v342
      %v1218 = vunpack.c.l.b16 %v343
      %v1219 = vunpack.c.l.b16 %v344
      %v1220 = vunpack.c.l.b16 %v345
      %v1221 = vunpack.c.l.b16 %v346
      %v1222 = vunpack.c.l.b16 %v347
      %v1223 = vunpack.c.l.b16 %v348
      %v1224 = vunpack.c.l.b16 %v349
      %v1225 = vunpack.c.l.b16 %v350
      %v1226 = vunpack.c.l.b16 %v351
      %v1227 = vunpack.c.l.b16 %v352
      %v1228 = vunpack.c.l.b16 %v353
      %v1229 = vunpack.c.l.b16 %v354
      %v1230 = vunpack.c.l.b16 %v355
      %v1231 = vunpack.c.l.b16 %v356
      %v1232 = vunpack.c.l.b16 %v357
      %v1233 = vunpack.c.l.b16 %v358
      %v1234 = vunpack.c.l.b16 %v359
      %v1235 = vunpack.c.l.b16 %v360
      %v1236 = vunpack.c.l.b16 %v361
      %v1237 = vunpack.c.l.b16 %v362
      %v1238 = vunpack.c.l.b16 %v363
      %v1239 = vunpack.c.l.b16 %v364
      %v1240 = vunpack.c.l.b16 %v365
      %v1241 = vunpack.c.l.b16 %v366
      %v1242 = vunpack.c.l.b16 %v367
      %v1243 = vunpack.c.l.b16 %v368
      %v1244 = vunpack.c.l.b16 %v369
      %v1245 = vunpack.c.l.b16 %v370
      %v1246 = vunpack.c.l.b16 %v371
      %v1247 = vunpack.c.l.b16 %v372
      %v1248 = vunpack.c.l.b16 %v373
      %v1249 = vunpack.c.l.b16 %v374
      %v1250 = vunpack.c.l.b16 %v375
      %v1251 = vunpack.c.l.b16 %v376
      %v1252 = vunpack.c.l.b16 %v377
      %v1253 = vunpack.c.l.b16 %v378
      %v1254 = vunpack.c.l.b16 %v379
      %v1255 = vunpack.c.l.b16 %v380
      %v1256 = vunpack.c.l.b16 %v381
      %v1257 = vunpack.c.l.b16 %v382
      %v1258 = vunpack.c.l.b16 %v383
      %v1259 = vunpack.c.l.b16 %v384
      %v1260 = vunpack.c.l.b16 %v385
      %v1261 = vunpack.c.l.b16 %v386
      %v1262 = vunpack.c.l.b16 %v387
      %v1263 = vunpack.c.l.b16 %v388
      %v1264 = vunpack.c.l.b16 %v389
      %v1265 = vunpack.c.l.b16 %v390
      %v1266 = vunpack.c.l.b16 %v391
      %v1267 = vunpack.c.l.b16 %v392
      %v1268 = vunpack.c.l.b16 %v393
      %v1269 = vunpack.c.l.b16 %v394
      %v1270 = vunpack.c.l.b16 %v395
      %v1271 = vunpack.c.l.b16 %v396
      %v1272 = vunpack.c.l.b16 %v397
      %v1273 = vunpack.c.l.b16 %v398
      %v1274 = vunpack.c.l.b16 %v399
      %v1275 = vunpack.c.l.b16 %v400
      %v1276 = vunpack.c.l.b16 %v401
      %v1277 = vunpack.c.l.b16 %v402
      %v1278 = vunpack.c.l.b16 %v403
      %v1279 = vunpack.c.l.b16 %v404
      %v1280 = vunpack.c.l.b16 %v405
      %v1281 = vunpack.c.l.b16 %v406
      %v1282 = vunpack.c.l.b16 %v407
      %v1283 = vunpack.c.l.b16 %v408
      %v1284 = vunpack.c.l.b16 %v409
      %v1285 = vunpack.c.l.b16 %v410
      %v1286 = vunpack.c.l.b16 %v411
      %v1287 = vunpack.c.l.b16 %v412
      %v1288 = vunpack.c.l.b16 %v413
      %v1289 = vunpack.c.l.b16 %v414
      %v1290 = vunpack.c.l.b16 %v415
      %v1291 = vunpack.c.l.b16 %v416
      %v1292 = vunpack.c.l.b16 %v417
      %v1293 = vunpack.c.l.b16 %v418
      %v1294 = vunpack.c.l.b16 %v419
      %v1295 = vunpack.c.l.b16 %v420
      %v1296 = vunpack.c.l.b16 %v421
      %v1297 = vunpack.c.l.b16 %v422
      %v1298 = vunpack.c.l.b16 %v423
      %v1299 = vunpack.c.l.b16 %v424
      %v1300 = vunpack.c.l.b16 %v425
      %v1301 = vunpack.c.l.b16 %v426
      %v1302 = vunpack.c.l.b16 %v427
      %v1303 = vunpack.c.l.b16 %v428
      %v1304 = vunpack.c.l.b16 %v429
      %v1305 = vunpack.c.l.b16 %v430
      %v1306 = vunpack.c.l.b16 %v431
      %v1307 = vunpack.c.l.b16 %v432
      %v1308 = vunpack.c.l.b16 %v433
      %v1309 = vunpack.c.l.b16 %v434
      %v1310 = vunpack.c.l.b16 %v435
      %v1311 = vunpack.c.l.b16 %v436
      %v1312 = vunpack.c.l.b16 %v437
      %v1313 = vunpack.c.l.b16 %v438
      %v1314 = vunpack.c.l.b16 %v439
      %v1315 = vunpack.c.l.b16 %v440
      %v1316 = vunpack.c.l.b16 %v441
      %v1317 = vunpack.c.l.b16 %v442
      %v1318 = vunpack.c.l.b16 %v443
      %v1319 = vunpack.c.l.b16 %v444
      %v1320 = vunpack.c.l.b16 %v445
      %v1321 = vunpack.c.l.b16 %v446
      %v1322 = vunpack.c.l.b16 %v447
      %v1323 = vunpack.c.l.b16 %v448
      %v1324 = vunpack.c.l.b16 %v449
      %v1325 = vunpack.c.l.b16 %v450
      %v1326 = vunpack.c.l.b16 %v451
      %v1327 = vunpack.c.l.b16 %v452
      %v1328 = vunpack.c.l.b16 %v453
      %v1329 = vunpack.c.l.b16 %v454
      %v1330 = vunpack.c.l.b16 %v455
      %v1331 = vunpack.c.l.b16 %v456
      %v1332 = vunpack.c.l.b16 %v457
      %v1333 = vunpack.c.l.b16 %v458
      %v1334 = vunpack.c.l.b16 %v459
      %v1335 = vunpack.c.l.b16 %v460
      %v1336 = vunpack.c.l.b16 %v461
      %v1337 = vunpack.c.l.b16 %v462
      %v1338 = vunpack.c.l.b16 %v463
      %v1339 = vunpack.c.l.b16 %v464
      %v1340 = vunpack.c.l.b16 %v465
      %v1341 = vunpack.c.l.b16 %v466
      %v1342 = vunpack.c.l.b16 %v467
      %v1343 = vunpack.c.l.b16 %v468
      %v1344 = vunpack.c.l.b16 %v469
      %v1345 = vunpack.c.l.b16 %v470
      %v1346 = vunpack.c.l.b16 %v471
      %v1347 = vunpack.c.l.b16 %v472
      %v1348 = vunpack.c.l.b16 %v473
      %v1349 = vunpack.c.l.b16 %v474
      %v1350 = vunpack.c.l.b16 %v475
      %v1351 = vunpack.c.l.b16 %v476
      %v1352 = vunpack.c.l.b16 %v477
      %v1353 = vunpack.c.l.b16 %v478
      %v1354 = vunpack.c.l.b16 %v479
      %v1355 = vunpack.c.l.b16 %v480
      %v1356 = vunpack.c.l.b16 %v481
      %v1357 = vunpack.c.l.b16 %v482
      %v1358 = vunpack.c.l.b16 %v483
      %v1359 = vunpack.c.l.b16 %v484
      %v1360 = vunpack.c.l.b16 %v485
      %v1361 = vunpack.c.l.b16 %v486
      %v1362 = vunpack.c.l.b16 %v487
      %v1363 = vunpack.c.l.b16 %v488
      %v1364 = vunpack.c.l.b16 %v489
      %v1365 = vunpack.c.l.b16 %v490
      %v1366 = vunpack.c.l.b16 %v491
      %v1367 = vunpack.c.l.b16 %v492
      %v1368 = vunpack.c.l.b16 %v493
      %v1369 = vunpack.c.l.b16 %v494
      %v1370 = vunpack.c.l.b16 %v495
      %v1371 = vunpack.c.l.b16 %v496
      %v1372 = vunpack.c.l.b16 %v497
      %v1373 = vunpack.c.l.b16 %v498
      %v1374 = vunpack.c.l.b16 %v499
      %v1375 = vunpack.c.l.b16 %v500
      %v1376 = vunpack.c.l.b16 %v501
      %v1377 = vunpack.c.l.b16 %v502
      %v1378 = vunpack.c.l.b16 %v503
      %v1379 = vunpack.c.l.b16 %v504
      %v1380 = vunpack.c.l.b16 %v505
      %v1381 = vunpack.c.l.b16 %v506
      %v1382 = vunpack.c.l.b16 %v507
      %v1383 = vunpack.c.l.b16 %v508
      %v1384 = vunpack.c.l.b16 %v509
      %v1385 = vunpack.c.l.b16 %v510
      %v1386 = vunpack.c.l.b16 %v511
      %v1387 = vunpack.c.l.b16 %v512
      %v1388 = vunpack.c.l.b16 %v513
      %v1389 = vunpack.c.l.b16 %v514
      %v1390 = vunpack.c.l.b16 %v515
      %v1391 = vunpack.c.l.b16 %v516
      %v1392 = vunpack.c.l.b16 %v517
      %v1393 = vunpack.c.l.b16 %v518
      %v1394 = vunpack.c.l.b16 %v519
      %v1395 = vunpack.c.l.b16 %v520
      %v1396 = vunpack.c.l.b16 %v521
      %v1397 = vunpack.c.l.b16 %v522
      %v1398 = vunpack.c.l.b16 %v523
      %v1399 = vunpack.c.l.b16 %v524
      %v1400 = vunpack.c.l.b16 %v525
      %v1401 = vunpack.c.l.b16 %v526
      %v1402 = vunpack.c.l.b16 %v527
      %v1403 = vunpack.c.l.b16 %v528
      %v1404 = vunpack.c.l.b16 %v529
      %v1405 = vunpack.c.l.b16 %v530
      %v1406 = vunpack.c.l.b16 %v531
      %v1407 = vunpack.c.l.b16 %v532
      %v1408 = vunpack.c.l.b16 %v533
      %v1409 = vunpack.c.l.b16 %v534
      %v1410 = vunpack.c.l.b16 %v535
      %v1411 = vunpack.c.l.b16 %v536
      %v1412 = vunpack.c.l.b16 %v537
      %v1413 = vunpack.c.l.b16 %v538
      %v1414 = vunpack.c.l.b16 %v539
      %v1415 = vunpack.c.l.b16 %v540
      %v1416 = vunpack.c.l.b16 %v541
      %v1417 = vunpack.c.l.b16 %v542
      %v1418 = vunpack.c.l.b16 %v543
      %v1419 = vunpack.c.l.b16 %v544
      %v1420 = vunpack.c.l.b16 %v545
      %v1421 = vunpack.c.l.b16 %v546
      %v1422 = vunpack.c.l.b16 %v547
      %v1423 = vunpack.c.l.b16 %v548
      %v1424 = vunpack.c.l.b16 %v549
      %v1425 = vunpack.c.l.b16 %v550
      %v1426 = vunpack.c.l.b16 %v551
      %v1427 = vunpack.c.l.b16 %v552
      %v1428 = vunpack.c.l.b16 %v553
      %v1429 = vunpack.c.l.b16 %v554
      %v1430 = vunpack.c.l.b16 %v555
      %v1431 = vunpack.c.l.b16 %v556
      %v1432 = vunpack.c.l.b16 %v557
      %v1433 = vunpack.c.l.b16 %v558
      %v1434 = vunpack.c.l.b16 %v559
      %v1435 = vunpack.c.l.b16 %v560
      %v1436 = vunpack.c.l.b16 %v561
      %v1437 = vunpack.c.l.b16 %v562
      %v1438 = vunpack.c.l.b16 %v563
      %v1439 = vunpack.c.l.b16 %v564
      %v1440 = vunpack.c.l.b16 %v565
      %v1441 = vunpack.c.l.b16 %v566
      %v1442 = vunpack.c.l.b16 %v567
      %v1443 = vunpack.c.l.b16 %v568
      %v1444 = vunpack.c.l.b16 %v569
      %v1445 = vunpack.c.l.b16 %v570
      %v1446 = vunpack.c.l.b16 %v571
      %v1447 = vunpack.c.l.b16 %v572
      %v1448 = vunpack.c.l.b16 %v573
      %v1449 = vunpack.c.l.b16 %v574
      %v1450 = vunpack.c.l.b16 %v575
      %v1451 = vunpack.c.l.b16 %v576
      %v1452 = vunpack.c.l.b16 %v577
      %v1453 = vunpack.c.l.b16 %v578
      %v1454 = vunpack.c.l.b16 %v579
      %v1455 = vunpack.c.l.b16 %v580
      %v1456 = vunpack.c.l.b16 %v581
      %v1457 = vunpack.c.l.b16 %v582
      %v1458 = vunpack.c.l.b16 %v583
      %v1459 = vunpack.c.l.b16 %v584
      %v1460 = vunpack.c.l.b16 %v585
      %v1461 = vunpack.c.l.b16 %v586
      %v1462 = vunpack.c.l.b16 %v587
      %v1463 = vunpack.c.l.b16 %v588
      %v1464 = vunpack.c.l.b16 %v589
      %v1465 = vunpack.c.l.b16 %v590
      %v1466 = vunpack.c.l.b16 %v591
      %v1467 = vunpack.c.l.b16 %v592
      %v1468 = vunpack.c.l.b16 %v593
      %v1469 = vunpack.c.l.b16 %v594
      %v1470 = vunpack.c.l.b16 %v595
      %v1471 = vunpack.c.l.b16 %v596
      %v1472 = vunpack.c.l.b16 %v597
      %v1473 = vunpack.c.l.b16 %v598
      %v1474 = vunpack.c.l.b16 %v599
      %v1475 = vunpack.c.l.b16 %v600
      %v1476 = vunpack.c.l.b16 %v601
      %v1477 = vunpack.c.l.b16 %v602
      %v1478 = vunpack.c.l.b16 %v603
      %v1479 = vunpack.c.l.b16 %v604
      %v1480 = vunpack.c.l.b16 %v605
      %v1481 = vunpack.c.l.b16 %v606
      %v1482 = vunpack.c.l.b16 %v607
      %v1483 = vunpack.c.l.b16 %v608
      %v1484 = vunpack.c.l.b16 %v609
      %v1485 = vunpack.c.l.b16 %v610
      %v1486 = vunpack.c.l.b16 %v611
      %v1487 = vunpack.c.l.b16 %v612
      %v1488 = vunpack.c.l.b16 %v613
      %v1489 = vunpack.c.l.b16 %v614
      %v1490 = vunpack.c.l.b16 %v615
      %v1491 = vunpack.c.l.b16 %v616
      %v1492 = vunpack.c.l.b16 %v617
      %v1493 = vunpack.c.l.b16 %v618
      %v1494 = vunpack.c.l.b16 %v619
      %v1495 = vunpack.c.l.b16 %v620
      %v1496 = vunpack.c.l.b16 %v621
      %v1497 = vunpack.c.l.b16 %v622
      %v1498 = vunpack.c.l.b16 %v623
      %v1499 = vunpack.c.l.b16 %v624
      %v1500 = vunpack.c.l.b16 %v625
      %v1501 = vunpack.c.l.b16 %v626
      %v1502 = vunpack.c.l.b16 %v627
      %v1503 = vunpack.c.l.b16 %v628
      %v1504 = vpack.c.b16 %v1113, %v1112
      %v1505 = vpack.c.b16 %v1115, %v1114
      %v1506 = vpack.c.b16 %v1117, %v1116
      %v1507 = vpack.c.b16 %v1119, %v1118
      %v1508 = vpack.c.b16 %v1121, %v1120
      %v1509 = vpack.c.b16 %v1123, %v1122
      %v1510 = vpack.c.b16 %v1125, %v1124
      %v1511 = vpack.c.b16 %v1127, %v1126
      %v1512 = vpack.c.b16 %v1129, %v1128
      %v1513 = vpack.c.b16 %v1131, %v1130
      %v1514 = vpack.c.b16 %v1133, %v1132
      %v1515 = vpack.c.b16 %v1135, %v1134
      %v1516 = vpack.c.b16 %v1137, %v1136
      %v1517 = vpack.c.b16 %v1139, %v1138
      %v1518 = vpack.c.b16 %v1141, %v1140
      %v1519 = vpack.c.b16 %v1143, %v1142
      %v1520 = vpack.c.b16 %v1145, %v1144
      %v1521 = vpack.c.b16 %v1147, %v1146
      %v1522 = vpack.c.b16 %v1149, %v1148
      %v1523 = vpack.c.b16 %v1151, %v1150
      %v1524 = vpack.c.b16 %v1153, %v1152
      %v1525 = vpack.c.b16 %v1155, %v1154
      %v1526 = vpack.c.b16 %v1157, %v1156
      %v1527 = vpack.c.b16 %v1159, %v1158
      %v1528 = vpack.c.b16 %v1161, %v1160
      %v1529 = vpack.c.b16 %v1163, %v1162
      %v1530 = vpack.c.b16 %v1165, %v1164
      %v1531 = vpack.c.b16 %v1167, %v1166
      %v1532 = vpack.c.b16 %v1169, %v1168
      %v1533 = vpack.c.b16 %v1171, %v1170
      %v1534 = vpack.c.b16 %v1173, %v1172
      %v1535 = vpack.c.b16 %v1175, %v1174
      %v1536 = vpack.c.b16 %v1177, %v1176
      %v1537 = vpack.c.b16 %v1179, %v1178
      %v1538 = vpack.c.b16 %v1181, %v1180
      %v1539 = vpack.c.b16 %v1183, %v1182
      %v1540 = vpack.c.b16 %v1185, %v1184
      %v1541 = vpack.c.b16 %v1187, %v1186
      %v1542 = vpack.c.b16 %v1189, %v1188
      %v1543 = vpack.c.b16 %v1191, %v1190
      %v1544 = vpack.c.b16 %v1193, %v1192
      %v1545 = vpack.c.b16 %v1195, %v1194
      %v1546 = vpack.c.b16 %v1197, %v1196
      %v1547 = vpack.c.b16 %v1199, %v1198
      %v1548 = vpack.c.b16 %v1201, %v1200
      %v1549 = vpack.c.b16 %v1203, %v1202
      %v1550 = vpack.c.b16 %v1205, %v1204
      %v1551 = vpack.c.b16 %v1207, %v1206
      %v1552 = vpack.c.b16 %v1209, %v1208
      %v1553 = vpack.c.b16 %v1211, %v1210
      %v1554 = vpack.c.b16 %v1213, %v1212
      %v1555 = vpack.c.b16 %v1215, %v1214
      %v1556 = vpack.c.b16 %v1217, %v1216
      %v1557 = vpack.c.b16 %v1219, %v1218
      %v1558 = vpack.c.b16 %v1221, %v1220
      %v1559 = vpack.c.b16 %v1223, %v1222
      %v1560 = vpack.c.b16 %v1225, %v1224
      %v1561 = vpack.c.b16 %v1227, %v1226
      %v1562 = vpack.c.b16 %v1229, %v1228
      %v1563 = vpack.c.b16 %v1231, %v1230
      %v1564 = vpack.c.b16 %v1233, %v1232
      %v1565 = vpack.c.b16 %v1235, %v1234
      %v1566 = vpack.c.b16 %v1237, %v1236
      %v1567 = vpack.c.b16 %v1239, %v1238
      %v1568 = vpack.c.b16 %v1241, %v1240
      %v1569 = vpack.c.b16 %v1243, %v1242
      %v1570 = vpack.c.b16 %v1245, %v1244
      %v1571 = vpack.c.b16 %v1247, %v1246
      %v1572 = vpack.c.b16 %v1249, %v1248
      %v1573 = vpack.c.b16 %v1251, %v1250
      %v1574 = vpack.c.b16 %v1253, %v1252
      %v1575 = vpack.c.b16 %v1255, %v1254
      %v1576 = vpack.c.b16 %v1257, %v1256
      %v1577 = vpack.c.b16 %v1259, %v1258
      %v1578 = vpack.c.b16 %v1261, %v1260
      %v1579 = vpack.c.b16 %v1263, %v1262
      %v1580 = vpack.c.b16 %v1265, %v1264
      %v1581 = vpack.c.b16 %v1267, %v1266
      %v1582 = vpack.c.b16 %v1269, %v1268
      %v1583 = vpack.c.b16 %v1271, %v1270
      %v1584 = vpack.c.b16 %v1273, %v1272
      %v1585 = vpack.c.b16 %v1275, %v1274
      %v1586 = vpack.c.b16 %v1277, %v1276
      %v1587 = vpack.c.b16 %v1279, %v1278
      %v1588 = vpack.c.b16 %v1281, %v1280
      %v1589 = vpack.c.b16 %v1283, %v1282
      %v1590 = vpack.c.b16 %v1285, %v1284
      %v1591 = vpack.c.b16 %v1287, %v1286
      %v1592 = vpack.c.b16 %v1289, %v1288
      %v1593 = vpack.c.b16 %v1291, %v1290
      %v1594 = vpack.c.b16 %v1293, %v1292
      %v1595 = vpack.c.b16 %v1295, %v1294
      %v1596 = vpack.c.b16 %v1297, %v1296
      %v1597 = vpack.c.b16 %v1299, %v1298
      %v1598 = vpack.c.b16 %v1301, %v1300
      %v1599 = vpack.c.b16 %v1303, %v1302
      %v1600 = vpack.c.b16 %v1305, %v1304
      %v1601 = vpack.c.b16 %v1307, %v1306
      %v1602 = vpack.c.b16 %v1309, %v1308
      %v1603 = vpack.c.b16 %v1311, %v1310
      %v1604 = vpack.c.b16 %v1313, %v1312
      %v1605 = vpack.c.b16 %v1315, %v1314
      %v1606 = vpack.c.b16 %v1317, %v1316
      %v1607 = vpack.c.b16 %v1319, %v1318
      %v1608 = vpack.c.b16 %v1321, %v1320
      %v1609 = vpack.c.b16 %v1323, %v1322
      %v1610 = vpack.c.b16 %v1325, %v1324
      %v1611 = vpack.c.b16 %v1327, %v1326
      %v1612 = vpack.c.b16 %v1329, %v1328
      %v1613 = vpack.c.b16 %v1331, %v1330
      %v1614 = vpack.c.b16 %v1333, %v1332
      %v1615 = vpack.c.b16 %v1335, %v1334
      %v1616 = vpack.c.b16 %v1337, %v1336
      %v1617 = vpack.c.b16 %v1339, %v1338
      %v1618 = vpack.c.b16 %v1341, %v1340
      %v1619 = vpack.c.b16 %v1343, %v1342
      %v1620 = vpack.c.b16 %v1345, %v1344
      %v1621 = vpack.c.b16 %v1347, %v1346
      %v1622 = vpack.c.b16 %v1349, %v1348
      %v1623 = vpack.c.b16 %v1351, %v1350
      %v1624 = vpack.c.b16 %v1353, %v1352
      %v1625 = vpack.c.b16 %v1355, %v1354
      %v1626 = vpack.c.b16 %v1357, %v1356
      %v1627 = vpack.c.b16 %v1359, %v1358
      %v1628 = vpack.c.b16 %v1361, %v1360
      %v1629 = vpack.c.b16 %v1363, %v1362
      %v1630 = vpack.c.b16 %v1365, %v1364
      %v1631 = vpack.c.b16 %v1367, %v1366
      %v1632 = vpack.c.b16 %v1369, %v1368
      %v1633 = vpack.c.b16 %v1371, %v1370
      %v1634 = vpack.c.b16 %v1373, %v1372
      %v1635 = vpack.c.b16 %v1375, %v1374
      %v1636 = vpack.c.b16 %v1377, %v1376
      %v1637 = vpack.c.b16 %v1379, %v1378
      %v1638 = vpack.c.b16 %v1381, %v1380
      %v1639 = vpack.c.b16 %v1383, %v1382
      %v1640 = vpack.c.b16 %v1385, %v1384
      %v1641 = vpack.c.b16 %v1387, %v1386
      %v1642 = vpack.c.b16 %v1389, %v1388
      %v1643 = vpack.c.b16 %v1391, %v1390
      %v1644 = vpack.c.b16 %v1393, %v1392
      %v1645 = vpack.c.b16 %v1395, %v1394
      %v1646 = vpack.c.b16 %v1397, %v1396
      %v1647 = vpack.c.b16 %v1399, %v1398
      %v1648 = vpack.c.b16 %v1401, %v1400
      %v1649 = vpack.c.b16 %v1403, %v1402
      %v1650 = vpack.c.b16 %v1405, %v1404
      %v1651 = vpack.c.b16 %v1407, %v1406
      %v1652 = vpack.c.b16 %v1409, %v1408
      %v1653 = vpack.c.b16 %v1411, %v1410
      %v1654 = vpack.c.b16 %v1413, %v1412
      %v1655 = vpack.c.b16 %v1415, %v1414
      %v1656 = vpack.c.b16 %v1417, %v1416
      %v1657 = vpack.c.b16 %v1419, %v1418
      %v1658 = vpack.c.b16 %v1421, %v1420
      %v1659 = vpack.c.b16 %v1423, %v1422
      %v1660 = vpack.c.b16 %v1425, %v1424
      %v1661 = vpack.c.b16 %v1427, %v1426
      %v1662 = vpack.c.b16 %v1429, %v1428
      %v1663 = vpack.c.b16 %v1431, %v1430
      %v1664 = vpack.c.b16 %v1433, %v1432
      %v1665 = vpack.c.b16 %v1435, %v1434
      %v1666 = vpack.c.b16 %v1437, %v1436
      %v1667 = vpack.c.b16 %v1439, %v1438
      %v1668 = vpack.c.b16 %v1441, %v1440
      %v1669 = vpack.c.b16 %v1443, %v1442
      %v1670 = vpack.c.b16 %v1445, %v1444
      %v1671 = vpack.c.b16 %v1447, %v1446
      %v1672 = vpack.c.b16 %v1449, %v1448
      %v1673 = vpack.c.b16 %v1451, %v1450
      %v1674 = vpack.c.b16 %v1453, %v1452
      %v1675 = vpack.c.b16 %v1455, %v1454
      %v1676 = vpack.c.b16 %v1457, %v1456
      %v1677 = vpack.c.b16 %v1459, %v1458
      %v1678 = vpack.c.b16 %v1461, %v1460
      %v1679 = vpack.c.b16 %v1463, %v1462
      %v1680 = vpack.c.b16 %v1465, %v1464
      %v1681 = vpack.c.b16 %v1467, %v1466
      %v1682 = vpack.c.b16 %v1469, %v1468
      %v1683 = vpack.c.b16 %v1471, %v1470
      %v1684 = vpack.c.b16 %v1473, %v1472
      %v1685 = vpack.c.b16 %v1475, %v1474
      %v1686 = vpack.c.b16 %v1477, %v1476
      %v1687 = vpack.c.b16 %v1479, %v1478
      %v1688 = vpack.c.b16 %v1481, %v1480
      %v1689 = vpack.c.b16 %v1483, %v1482
      %v1690 = vpack.c.b16 %v1485, %v1484
      %v1691 = vpack.c.b16 %v1487, %v1486
      %v1692 = vpack.c.b16 %v1489, %v1488
      %v1693 = vpack.c.b16 %v1491, %v1490
      %v1694 = vpack.c.b16 %v1493, %v1492
      %v1695 = vpack.c.b16 %v1495, %v1494
      %v1696 = vpack.c.b16 %v1497, %v1496
      %v1697 = vpack.c.b16 %v1499, %v1498
      %v1698 = vpack.c.b16 %v1501, %v1500
      %v1699 = vpack.c.b16 %v1503, %v1502
      %vm1896 = vcmask 523264
      %v1898 = vsel %vm1896, %v695, 0
      %1900 = vmatpush.bf16.msra.mxu0 %v1511
      %1901 = vmatpush.bf16.msra.mxu0 %v1510
      %1902 = vmatpush.bf16.msra.mxu0 %v1509
      %1903 = vmatpush.bf16.msra.mxu0 %v1508
      %1904 = vmatpush.bf16.msra.mxu0 %v1507
      %1905 = vmatpush.bf16.msra.mxu0 %v1506
      %1906 = vmatpush.bf16.msra.mxu0 %v1505
      %1907 = vmatpush.bf16.msra.mxu0 %v1504
      %1908 = vmatmul.bf16.gmra.mxu0 %v671
      %v1909 = vpop.f32.mrf.mxu0
      %v1910 = vadd.f32 %v631, %v1909
      %v1911 = vpop.f32.mrf.mxu0
      %1912 = vdwg.mxu0
      %1913 = vmatpush.bf16.msra.mxu0 %v1519
      %1914 = vmatpush.bf16.msra.mxu0 %v1518
      %1915 = vmatpush.bf16.msra.mxu0 %v1517
      %1916 = vmatpush.bf16.msra.mxu0 %v1516
      %1917 = vmatpush.bf16.msra.mxu0 %v1515
      %1918 = vmatpush.bf16.msra.mxu0 %v1514
      %1919 = vmatpush.bf16.msra.mxu0 %v1513
      %1920 = vmatpush.bf16.msra.mxu0 %v1512
      %1921 = vmatmul.bf16.gmra.mxu0 %v672
      %v1922 = vpop.f32.mrf.mxu0
      %v1923 = vadd.f32 %v1910, %v1922
      %v1924 = vpop.f32.mrf.mxu0
      %1925 = vdwg.mxu0
      %1926 = vmatpush.bf16.msra.mxu0 %v1527
      %1927 = vmatpush.bf16.msra.mxu0 %v1526
      %1928 = vmatpush.bf16.msra.mxu0 %v1525
      %1929 = vmatpush.bf16.msra.mxu0 %v1524
      %1930 = vmatpush.bf16.msra.mxu0 %v1523
      %1931 = vmatpush.bf16.msra.mxu0 %v1522
      %1932 = vmatpush.bf16.msra.mxu0 %v1521
      %1933 = vmatpush.bf16.msra.mxu0 %v1520
      %1934 = vmatmul.bf16.gmra.mxu0 %v673
      %v1935 = vpop.f32.mrf.mxu0
      %v1936 = vadd.f32 %v1923, %v1935
      %v1937 = vpop.f32.mrf.mxu0
      %1938 = vdwg.mxu0
      %1939 = vmatpush.bf16.msra.mxu0 %v1535
      %1940 = vmatpush.bf16.msra.mxu0 %v1534
      %1941 = vmatpush.bf16.msra.mxu0 %v1533
      %1942 = vmatpush.bf16.msra.mxu0 %v1532
      %1943 = vmatpush.bf16.msra.mxu0 %v1531
      %1944 = vmatpush.bf16.msra.mxu0 %v1530
      %1945 = vmatpush.bf16.msra.mxu0 %v1529
      %1946 = vmatpush.bf16.msra.mxu0 %v1528
      %1947 = vmatmul.bf16.gmra.mxu0 %v674
      %v1948 = vpop.f32.mrf.mxu0
      %v1949 = vadd.f32 %v1936, %v1948
      %v1950 = vpop.f32.mrf.mxu0
      %1951 = vdwg.mxu0
      %1952 = vmatpush.bf16.msra.mxu0 %v1543
      %1953 = vmatpush.bf16.msra.mxu0 %v1542
      %1954 = vmatpush.bf16.msra.mxu0 %v1541
      %1955 = vmatpush.bf16.msra.mxu0 %v1540
      %1956 = vmatpush.bf16.msra.mxu0 %v1539
      %1957 = vmatpush.bf16.msra.mxu0 %v1538
      %1958 = vmatpush.bf16.msra.mxu0 %v1537
      %1959 = vmatpush.bf16.msra.mxu0 %v1536
      %1960 = vmatmul.bf16.gmra.mxu0 %v675
      %v1961 = vpop.f32.mrf.mxu0
      %v1962 = vadd.f32 %v1949, %v1961
      %v1963 = vpop.f32.mrf.mxu0
      %1964 = vdwg.mxu0
      %1965 = vmatpush.bf16.msra.mxu0 %v1551
      %1966 = vmatpush.bf16.msra.mxu0 %v1550
      %1967 = vmatpush.bf16.msra.mxu0 %v1549
      %1968 = vmatpush.bf16.msra.mxu0 %v1548
      %1969 = vmatpush.bf16.msra.mxu0 %v1547
      %1970 = vmatpush.bf16.msra.mxu0 %v1546
      %1971 = vmatpush.bf16.msra.mxu0 %v1545
      %1972 = vmatpush.bf16.msra.mxu0 %v1544
      %1973 = vmatmul.bf16.gmra.mxu0 %v676
      %v1974 = vpop.f32.mrf.mxu0
      %v1975 = vadd.f32 %v1962, %v1974
      %v1976 = vpop.f32.mrf.mxu0
      %1977 = vdwg.mxu0
      %1978 = vmatpush.bf16.msra.mxu0 %v1559
      %1979 = vmatpush.bf16.msra.mxu0 %v1558
      %1980 = vmatpush.bf16.msra.mxu0 %v1557
      %1981 = vmatpush.bf16.msra.mxu0 %v1556
      %1982 = vmatpush.bf16.msra.mxu0 %v1555
      %1983 = vmatpush.bf16.msra.mxu0 %v1554
      %1984 = vmatpush.bf16.msra.mxu0 %v1553
      %1985 = vmatpush.bf16.msra.mxu0 %v1552
      %1986 = vmatmul.bf16.gmra.mxu0 %v677
      %v1987 = vpop.f32.mrf.mxu0
      %v1988 = vadd.f32 %v1975, %v1987
      %v1989 = vpop.f32.mrf.mxu0
      %1990 = vdwg.mxu0
      %1991 = vmatpush.bf16.msra.mxu0 %v1567
      %1992 = vmatpush.bf16.msra.mxu0 %v1566
      %1993 = vmatpush.bf16.msra.mxu0 %v1565
      %1994 = vmatpush.bf16.msra.mxu0 %v1564
      %1995 = vmatpush.bf16.msra.mxu0 %v1563
      %1996 = vmatpush.bf16.msra.mxu0 %v1562
      %1997 = vmatpush.bf16.msra.mxu0 %v1561
      %1998 = vmatpush.bf16.msra.mxu0 %v1560
      %1999 = vmatmul.bf16.gmra.mxu0 %v678
      %v2000 = vpop.f32.mrf.mxu0
      %v2001 = vadd.f32 %v1988, %v2000
      %v2002 = vpop.f32.mrf.mxu0
      %2003 = vdwg.mxu0
      %2004 = vmatpush.bf16.msra.mxu0 %v1575
      %2005 = vmatpush.bf16.msra.mxu0 %v1574
      %2006 = vmatpush.bf16.msra.mxu0 %v1573
      %2007 = vmatpush.bf16.msra.mxu0 %v1572
      %2008 = vmatpush.bf16.msra.mxu0 %v1571
      %2009 = vmatpush.bf16.msra.mxu0 %v1570
      %2010 = vmatpush.bf16.msra.mxu0 %v1569
      %2011 = vmatpush.bf16.msra.mxu0 %v1568
      %2012 = vmatmul.bf16.gmra.mxu0 %v679
      %v2013 = vpop.f32.mrf.mxu0
      %v2014 = vadd.f32 %v2001, %v2013
      %v2015 = vpop.f32.mrf.mxu0
      %2016 = vdwg.mxu0
      %2017 = vmatpush.bf16.msra.mxu0 %v1583
      %2018 = vmatpush.bf16.msra.mxu0 %v1582
      %2019 = vmatpush.bf16.msra.mxu0 %v1581
      %2020 = vmatpush.bf16.msra.mxu0 %v1580
      %2021 = vmatpush.bf16.msra.mxu0 %v1579
      %2022 = vmatpush.bf16.msra.mxu0 %v1578
      %2023 = vmatpush.bf16.msra.mxu0 %v1577
      %2024 = vmatpush.bf16.msra.mxu0 %v1576
      %2025 = vmatmul.bf16.gmra.mxu0 %v680
      %v2026 = vpop.f32.mrf.mxu0
      %v2027 = vadd.f32 %v2014, %v2026
      %v2028 = vpop.f32.mrf.mxu0
      %2029 = vdwg.mxu0
      %2030 = vmatpush.bf16.msra.mxu0 %v1591
      %2031 = vmatpush.bf16.msra.mxu0 %v1590
      %2032 = vmatpush.bf16.msra.mxu0 %v1589
      %2033 = vmatpush.bf16.msra.mxu0 %v1588
      %2034 = vmatpush.bf16.msra.mxu0 %v1587
      %2035 = vmatpush.bf16.msra.mxu0 %v1586
      %2036 = vmatpush.bf16.msra.mxu0 %v1585
      %2037 = vmatpush.bf16.msra.mxu0 %v1584
      %2038 = vmatmul.bf16.gmra.mxu0 %v681
      %v2039 = vpop.f32.mrf.mxu0
      %v2040 = vadd.f32 %v2027, %v2039
      %v2041 = vpop.f32.mrf.mxu0
      %2042 = vdwg.mxu0
      %2043 = vmatpush.bf16.msra.mxu0 %v1599
      %2044 = vmatpush.bf16.msra.mxu0 %v1598
      %2045 = vmatpush.bf16.msra.mxu0 %v1597
      %2046 = vmatpush.bf16.msra.mxu0 %v1596
      %2047 = vmatpush.bf16.msra.mxu0 %v1595
      %2048 = vmatpush.bf16.msra.mxu0 %v1594
      %2049 = vmatpush.bf16.msra.mxu0 %v1593
      %2050 = vmatpush.bf16.msra.mxu0 %v1592
      %2051 = vmatmul.bf16.gmra.mxu0 %v682
      %v2052 = vpop.f32.mrf.mxu0
      %v2053 = vadd.f32 %v2040, %v2052
      %v2054 = vpop.f32.mrf.mxu0
      %2055 = vdwg.mxu0
      %2056 = vmatpush.bf16.msra.mxu0 %v1607
      %2057 = vmatpush.bf16.msra.mxu0 %v1606
      %2058 = vmatpush.bf16.msra.mxu0 %v1605
      %2059 = vmatpush.bf16.msra.mxu0 %v1604
      %2060 = vmatpush.bf16.msra.mxu0 %v1603
      %2061 = vmatpush.bf16.msra.mxu0 %v1602
      %2062 = vmatpush.bf16.msra.mxu0 %v1601
      %2063 = vmatpush.bf16.msra.mxu0 %v1600
      %2064 = vmatmul.bf16.gmra.mxu0 %v683
      %v2065 = vpop.f32.mrf.mxu0
      %v2066 = vadd.f32 %v2053, %v2065
      %v2067 = vpop.f32.mrf.mxu0
      %2068 = vdwg.mxu0
      %2069 = vmatpush.bf16.msra.mxu0 %v1615
      %2070 = vmatpush.bf16.msra.mxu0 %v1614
      %2071 = vmatpush.bf16.msra.mxu0 %v1613
      %2072 = vmatpush.bf16.msra.mxu0 %v1612
      %2073 = vmatpush.bf16.msra.mxu0 %v1611
      %2074 = vmatpush.bf16.msra.mxu0 %v1610
      %2075 = vmatpush.bf16.msra.mxu0 %v1609
      %2076 = vmatpush.bf16.msra.mxu0 %v1608
      %2077 = vmatmul.bf16.gmra.mxu0 %v684
      %v2078 = vpop.f32.mrf.mxu0
      %v2079 = vadd.f32 %v2066, %v2078
      %v2080 = vpop.f32.mrf.mxu0
      %2081 = vdwg.mxu0
      %2082 = vmatpush.bf16.msra.mxu0 %v1623
      %2083 = vmatpush.bf16.msra.mxu0 %v1622
      %2084 = vmatpush.bf16.msra.mxu0 %v1621
      %2085 = vmatpush.bf16.msra.mxu0 %v1620
      %2086 = vmatpush.bf16.msra.mxu0 %v1619
      %2087 = vmatpush.bf16.msra.mxu0 %v1618
      %2088 = vmatpush.bf16.msra.mxu0 %v1617
      %2089 = vmatpush.bf16.msra.mxu0 %v1616
      %2090 = vmatmul.bf16.gmra.mxu0 %v685
      %v2091 = vpop.f32.mrf.mxu0
      %v2092 = vadd.f32 %v2079, %v2091
      %v2093 = vpop.f32.mrf.mxu0
      %2094 = vdwg.mxu0
      %2095 = vmatpush.bf16.msra.mxu0 %v1631
      %2096 = vmatpush.bf16.msra.mxu0 %v1630
      %2097 = vmatpush.bf16.msra.mxu0 %v1629
      %2098 = vmatpush.bf16.msra.mxu0 %v1628
      %2099 = vmatpush.bf16.msra.mxu0 %v1627
      %2100 = vmatpush.bf16.msra.mxu0 %v1626
      %2101 = vmatpush.bf16.msra.mxu0 %v1625
      %2102 = vmatpush.bf16.msra.mxu0 %v1624
      %2103 = vmatmul.bf16.gmra.mxu0 %v686
      %v2104 = vpop.f32.mrf.mxu0
      %v2105 = vadd.f32 %v2092, %v2104
      %v2106 = vpop.f32.mrf.mxu0
      %2107 = vdwg.mxu0
      %2108 = vmatpush.bf16.msra.mxu0 %v1639
      %2109 = vmatpush.bf16.msra.mxu0 %v1638
      %2110 = vmatpush.bf16.msra.mxu0 %v1637
      %2111 = vmatpush.bf16.msra.mxu0 %v1636
      %2112 = vmatpush.bf16.msra.mxu0 %v1635
      %2113 = vmatpush.bf16.msra.mxu0 %v1634
      %2114 = vmatpush.bf16.msra.mxu0 %v1633
      %2115 = vmatpush.bf16.msra.mxu0 %v1632
      %2116 = vmatmul.bf16.gmra.mxu0 %v687
      %v2117 = vpop.f32.mrf.mxu0
      %v2118 = vadd.f32 %v2105, %v2117
      %v2119 = vpop.f32.mrf.mxu0
      %2120 = vdwg.mxu0
      %2121 = vmatpush.bf16.msra.mxu0 %v1647
      %2122 = vmatpush.bf16.msra.mxu0 %v1646
      %2123 = vmatpush.bf16.msra.mxu0 %v1645
      %2124 = vmatpush.bf16.msra.mxu0 %v1644
      %2125 = vmatpush.bf16.msra.mxu0 %v1643
      %2126 = vmatpush.bf16.msra.mxu0 %v1642
      %2127 = vmatpush.bf16.msra.mxu0 %v1641
      %2128 = vmatpush.bf16.msra.mxu0 %v1640
      %2129 = vmatmul.bf16.gmra.mxu0 %v688
      %v2130 = vpop.f32.mrf.mxu0
      %v2131 = vadd.f32 %v2118, %v2130
      %v2132 = vpop.f32.mrf.mxu0
      %2133 = vdwg.mxu0
      %2134 = vmatpush.bf16.msra.mxu0 %v1655
      %2135 = vmatpush.bf16.msra.mxu0 %v1654
      %2136 = vmatpush.bf16.msra.mxu0 %v1653
      %2137 = vmatpush.bf16.msra.mxu0 %v1652
      %2138 = vmatpush.bf16.msra.mxu0 %v1651
      %2139 = vmatpush.bf16.msra.mxu0 %v1650
      %2140 = vmatpush.bf16.msra.mxu0 %v1649
      %2141 = vmatpush.bf16.msra.mxu0 %v1648
      %2142 = vmatmul.bf16.gmra.mxu0 %v689
      %v2143 = vpop.f32.mrf.mxu0
      %v2144 = vadd.f32 %v2131, %v2143
      %v2145 = vpop.f32.mrf.mxu0
      %2146 = vdwg.mxu0
      %2147 = vmatpush.bf16.msra.mxu0 %v1663
      %2148 = vmatpush.bf16.msra.mxu0 %v1662
      %2149 = vmatpush.bf16.msra.mxu0 %v1661
      %2150 = vmatpush.bf16.msra.mxu0 %v1660
      %2151 = vmatpush.bf16.msra.mxu0 %v1659
      %2152 = vmatpush.bf16.msra.mxu0 %v1658
      %2153 = vmatpush.bf16.msra.mxu0 %v1657
      %2154 = vmatpush.bf16.msra.mxu0 %v1656
      %2155 = vmatmul.bf16.gmra.mxu0 %v690
      %v2156 = vpop.f32.mrf.mxu0
      %v2157 = vadd.f32 %v2144, %v2156
      %v2158 = vpop.f32.mrf.mxu0
      %2159 = vdwg.mxu0
      %2160 = vmatpush.bf16.msra.mxu0 %v1671
      %2161 = vmatpush.bf16.msra.mxu0 %v1670
      %2162 = vmatpush.bf16.msra.mxu0 %v1669
      %2163 = vmatpush.bf16.msra.mxu0 %v1668
      %2164 = vmatpush.bf16.msra.mxu0 %v1667
      %2165 = vmatpush.bf16.msra.mxu0 %v1666
      %2166 = vmatpush.bf16.msra.mxu0 %v1665
      %2167 = vmatpush.bf16.msra.mxu0 %v1664
      %2168 = vmatmul.bf16.gmra.mxu0 %v691
      %v2169 = vpop.f32.mrf.mxu0
      %v2170 = vadd.f32 %v2157, %v2169
      %v2171 = vpop.f32.mrf.mxu0
      %2172 = vdwg.mxu0
      %2173 = vmatpush.bf16.msra.mxu0 %v1679
      %2174 = vmatpush.bf16.msra.mxu0 %v1678
      %2175 = vmatpush.bf16.msra.mxu0 %v1677
      %2176 = vmatpush.bf16.msra.mxu0 %v1676
      %2177 = vmatpush.bf16.msra.mxu0 %v1675
      %2178 = vmatpush.bf16.msra.mxu0 %v1674
      %2179 = vmatpush.bf16.msra.mxu0 %v1673
      %2180 = vmatpush.bf16.msra.mxu0 %v1672
      %2181 = vmatmul.bf16.gmra.mxu0 %v692
      %v2182 = vpop.f32.mrf.mxu0
      %v2183 = vadd.f32 %v2170, %v2182
      %v2184 = vpop.f32.mrf.mxu0
      %2185 = vdwg.mxu0
      %2186 = vmatpush.bf16.msra.mxu0 %v1687
      %2187 = vmatpush.bf16.msra.mxu0 %v1686
      %2188 = vmatpush.bf16.msra.mxu0 %v1685
      %2189 = vmatpush.bf16.msra.mxu0 %v1684
      %2190 = vmatpush.bf16.msra.mxu0 %v1683
      %2191 = vmatpush.bf16.msra.mxu0 %v1682
      %2192 = vmatpush.bf16.msra.mxu0 %v1681
      %2193 = vmatpush.bf16.msra.mxu0 %v1680
      %2194 = vmatmul.bf16.gmra.mxu0 %v693
      %v2195 = vpop.f32.mrf.mxu0
      %v2196 = vadd.f32 %v2183, %v2195
      %v2197 = vpop.f32.mrf.mxu0
      %2198 = vdwg.mxu0
      %2199 = vmatpush.bf16.msra.mxu0 %v1695
      %2200 = vmatpush.bf16.msra.mxu0 %v1694
      %2201 = vmatpush.bf16.msra.mxu0 %v1693
      %2202 = vmatpush.bf16.msra.mxu0 %v1692
      %2203 = vmatpush.bf16.msra.mxu0 %v1691
      %2204 = vmatpush.bf16.msra.mxu0 %v1690
      %2205 = vmatpush.bf16.msra.mxu0 %v1689
      %2206 = vmatpush.bf16.msra.mxu0 %v1688
      %2207 = vmatmul.bf16.gmra.mxu0 %v694
      %v2208 = vpop.f32.mrf.mxu0
      %v2209 = vadd.f32 %v2196, %v2208
      %v2210 = vpop.f32.mrf.mxu0
      %2211 = vdwg.mxu0
      %2212 = vmatpush.bf16.msra.mxu0 0
      %2213 = vmatpush.bf16.msra.mxu0 0
      %2214 = vmatpush.bf16.msra.mxu0 0
      %2215 = vmatpush.bf16.msra.mxu0 0
      %2216 = vmatpush.bf16.msra.mxu0 %v1699
      %2217 = vmatpush.bf16.msra.mxu0 %v1698
      %2218 = vmatpush.bf16.msra.mxu0 %v1697
      %2219 = vmatpush.bf16.msra.mxu0 %v1696
      %2220 = vmatmul.bf16.gmra.mxu0 %v1898
      %v2221 = vpop.f32.mrf.mxu0
      %v2222 = vadd.f32 %v2209, %v2221
      %v2223 = vpop.f32.mrf.mxu0
      %2224 = vdwg.mxu0
      %v2225 = vmax.f32 %v2222, 0.0
      %v2226 = vpack.c.bf16 %v2225, %v2225
      %v2227 = vld [vmem:[%s3] sm:$0xf]
      %v2228 = vld [vmem:[%s3 + $0x4] sm:$0xf]
      %v2229 = vld [vmem:[%s3 + $0x8] sm:$0xf]
      %v2230 = vld [vmem:[%s3 + $0xc] sm:$0xf]
      %v2231 = vld [vmem:[%s3 + $0x10] sm:$0xf]
      %v2232 = vld [vmem:[%s3 + $0x14] sm:$0xf]
      %v2233 = vld [vmem:[%s3 + $0x18] sm:$0xf]
      %v2234 = vld [vmem:[%s3 + $0x1c] sm:$0xf]
      %v2235 = vld [vmem:[%s3 + $0x20] sm:$0xf]
      %v2236 = vld [vmem:[%s3 + $0x24] sm:$0xf]
      %v2237 = vld [vmem:[%s3 + $0x28] sm:$0xf]
      %v2238 = vld [vmem:[%s3 + $0x2c] sm:$0xf]
      %v2239 = vld [vmem:[%s3 + $0x30] sm:$0xf]
      %v2240 = vld [vmem:[%s3 + $0x34] sm:$0xf]
      %v2241 = vld [vmem:[%s3 + $0x38] sm:$0xf]
      %v2242 = vld [vmem:[%s3 + $0x3c] sm:$0xf]
      %v2243 = vld [vmem:[%s4] sm:$0x1]
      %v2245 = vperm.slane %v2243, 0
      %v2263 = vunpack.c.l.b16 %v2227
      %v2264 = vunpack.c.l.b16 %v2228
      %v2265 = vunpack.c.l.b16 %v2229
      %v2266 = vunpack.c.l.b16 %v2230
      %v2267 = vunpack.c.l.b16 %v2231
      %v2268 = vunpack.c.l.b16 %v2232
      %v2269 = vunpack.c.l.b16 %v2233
      %v2270 = vunpack.c.l.b16 %v2234
      %v2271 = vunpack.c.l.b16 %v2235
      %v2272 = vunpack.c.l.b16 %v2236
      %v2273 = vunpack.c.l.b16 %v2237
      %v2274 = vunpack.c.l.b16 %v2238
      %v2275 = vunpack.c.l.b16 %v2239
      %v2276 = vunpack.c.l.b16 %v2240
      %v2277 = vunpack.c.l.b16 %v2241
      %v2278 = vunpack.c.l.b16 %v2242
      %v2279 = vpack.c.b16 %v2264, %v2263
      %v2280 = vpack.c.b16 %v2266, %v2265
      %v2281 = vpack.c.b16 %v2268, %v2267
      %v2282 = vpack.c.b16 %v2270, %v2269
      %v2283 = vpack.c.b16 %v2272, %v2271
      %v2284 = vpack.c.b16 %v2274, %v2273
      %v2285 = vpack.c.b16 %v2276, %v2275
      %v2286 = vpack.c.b16 %v2278, %v2277
      %2295 = vmatpush.bf16.msra.mxu0 %v2286
      %2296 = vmatpush.bf16.msra.mxu0 %v2285
      %2297 = vmatpush.bf16.msra.mxu0 %v2284
      %2298 = vmatpush.bf16.msra.mxu0 %v2283
      %2299 = vmatpush.bf16.msra.mxu0 %v2282
      %2300 = vmatpush.bf16.msra.mxu0 %v2281
      %2301 = vmatpush.bf16.msra.mxu0 %v2280
      %2302 = vmatpush.bf16.msra.mxu0 %v2279
      %2303 = vmatmul.bf16.gmra.mxu0 %v2226
      %v2304 = vpop.f32.mrf.mxu0
      %v2305 = vadd.f32 %v2245, %v2304
      %v2306 = vpop.f32.mrf.mxu0
      %2307 = vdwg.mxu0
      %2308 = vst [vmem:[%s222] sm:$0xff] %v2305
      %p2309 = scmp.lt.s32.totalorder %s16, 1
      %s2310 = scalar_select %p2309, %s16, 1
      %s2311 = smul.addr %s2310, 8
      %s2312 = scalar_lea.vmem %s5, %s2311
      // Predicated region
      $region41: #{cnn_forward.5} parent=39 // pred_check
        %p2313 = pneg %p144
      $region42: #{cnn_forward.5} parent=39 // pred_check_branch
        %2315 = sbr.rel (%p2313) target = $region44
      $region43: #{cnn_forward.5} parent=39 // pred_region
        _
      $region44: #{cnn_forward.5} parent=39 // pred_fallthru
        _
    $region40: #{cnn_forward.5} parent=5 // pred_fallthru
      _
    %p2316 = scmp.le.s32.totalorder 2, %s11
    // Predicated region
    $region45: #{cnn_forward.5} parent=5 // pred_check
      %p2317 = pneg %p2316
    $region46: #{cnn_forward.5} parent=5 // pred_check_branch
      %2319 = sbr.rel (%p2317) target = $region48
    $region47: #{cnn_forward.5} parent=5 // pred_region
      %s2320 = ssub.s32 %s11, 2
      // Predicated region
      $region49: #{cnn_forward.5} parent=47 // pred_check
        %p2321 = pneg %p150
      $region50: #{cnn_forward.5} parent=47 // pred_check_branch
        %2323 = sbr.rel (%p2321) target = $region52
      $region51: #{cnn_forward.5} parent=47 // pred_region
        %p2324 = scmp.lt.s32.totalorder %s17, 1
        %s2325 = scalar_select %p2324, %s17, 1
        %s2326 = smul.addr %s2325, 8
        %s2327 = scalar_lea.vmem %s5, %s2326
      $region52: #{cnn_forward.5} parent=47 // pred_fallthru
        _
    $region48: #{cnn_forward.5} parent=5 // pred_fallthru
      _
  $region6: #{cnn_forward.5} parent=0 // loop_footer
    %s15 = sadd.s32 1, %s11
  $region7: #{cnn_forward.5} parent=0 // loop_footer_branch
    %10 = sbr.rel target = $region3
  $region8: #{cnn_forward.5} parent=0 // loop_exit
    _

</llo_original>
